<compile_context>
chip_gen: v7x
topology: tpu7x:2x2x1
jax: 0.10.0
libtpu: 0.0.40
codegen_flags: <defaults>
</compile_context>

<pallas_src>
import functools

import jax
import jax.numpy as jnp
from jax.experimental import pallas as pl
from jax.experimental.pallas import tpu as pltpu


# ----------------------------------------------------------------------------
# helpers
# ----------------------------------------------------------------------------
def _round_up(n, m):
    return ((n + m - 1) // m) * m


def _cdiv(a, b):
    return -(-a // b)


def _pad_axis(a, axis, new_size):
    pad = new_size - a.shape[axis]
    if pad <= 0:
        return a
    widths = [(0, 0)] * a.ndim
    widths[axis] = (0, pad)
    return jnp.pad(a, widths)


def _quantize_rows(w):
    """Symmetric per-output-row int8 quantization of raw (L, 4*gate, in) weights."""
    amax = jnp.max(jnp.abs(w), axis=-1)                      # (L, 4*gate)
    scale = jnp.maximum(amax, 1e-8) / 127.0
    q = jnp.clip(jnp.round(w / scale[..., None]), -127.0, 127.0)
    return q, scale


# ----------------------------------------------------------------------------
# in-kernel LSTM cell pieces (shared by the L>1 and L==1 kernels)
# ----------------------------------------------------------------------------
def _mm(a, w_ref):
    # bf16 operands (weight may be stored int8/bf16/fp8), f32 accumulation on MXU.
    return jnp.dot(a.astype(jnp.bfloat16), w_ref[0].astype(jnp.bfloat16),
                   preferred_element_type=jnp.float32)


def _gates(g):
    # PyTorch LSTMCell gate order: i, f, g, o (slices are 128-aligned).
    n = g.shape[-1] // 4
    i = jax.nn.sigmoid(g[:, 0 * n:1 * n])
    f = jax.nn.sigmoid(g[:, 1 * n:2 * n])
    gg = jnp.tanh(g[:, 2 * n:3 * n])
    o = jax.nn.sigmoid(g[:, 3 * n:4 * n])
    return i, f, gg, o


def _cell_first(g, h_ref, c_ref):
    # layer 0: h = c = 0  ->  no W_hh term, no f*c term.
    i, _, gg, o = _gates(g)
    c = i * gg
    c_ref[...] = c
    h_ref[...] = o * jnp.tanh(c)


def _cell_rest(g_partial, w_hh_ref, s_hh, h_ref, c_ref):
    g = g_partial + _mm(h_ref[...], w_hh_ref) * s_hh
    i, f, gg, o = _gates(g)
    c = f * c_ref[...] + i * gg
    c_ref[...] = c
    h_ref[...] = o * jnp.tanh(c)


def _log_softmax_store(h, out_ref, o_valid):
    # Dropout -> identity (eval); LogSoftmax over the valid lanes only.
    lane = jax.lax.broadcasted_iota(jnp.int32, h.shape, 1)
    valid = lane < o_valid
    hm = jnp.where(valid, h, jnp.float32(-1e30))
    m = jnp.max(hm, axis=-1, keepdims=True)
    z = hm - m
    p = jnp.where(valid, jnp.exp(z), 0.0)
    lse = jnp.log(jnp.sum(p, axis=-1, keepdims=True))
    out_ref[...] = (z - lse).astype(out_ref.dtype)


# ----------------------------------------------------------------------------
# Pallas kernels.  Grid = (row_blocks, 2*L): axis 0 walks independent row
# blocks (parallel / megacore-shardable), axis 1 walks the 2L layers
# (L encoder, then L decoder; weights are streamed & double-buffered).
# The scale/bias block sb is (3, 4G) f32: row0 = col-scale for W_ih,
# row1 = col-scale for W_hh, row2 = bias (b_ih + b_hh).
# ----------------------------------------------------------------------------
def _lstm_ae_kernel(
    x_ref,        # (BR, INp)         f32
    we_ih_ref,    # (1, INp, 4Hp)     weight dtype
    we_hh_ref,    # (1, Hp,  4Hp)     weight dtype (layers 1..L-1)
    e_sb_ref,     # (1, 3,   4Hp)     f32
    wd_ih_ref,    # (1, Hp,  4Op)     weight dtype
    wd_hh_ref,    # (1, Op,  4Op)     weight dtype (layers 1..L-1)
    d_sb_ref,     # (1, 3,   4Op)     f32
    out_ref,      # (BR, Op)          f32 log-probabilities
    h_enc, c_enc,  # (BR, Hp) f32 scratch
    h_dec, c_dec,  # (BR, Op) f32 scratch
    *,
    num_layers: int,
    o_valid: int,
):
    L = num_layers
    k = pl.program_id(1)

    # -------- encoder layer 0: h = c = 0 -> skip W_hh matmul and f*c term
    @pl.when(k == 0)
    def _():
        sb = e_sb_ref[0]
        g = _mm(x_ref[...], we_ih_ref) * sb[0:1] + sb[2:3]
        _cell_first(g, h_enc, c_enc)

    # -------- encoder layers 1 .. L-1
    @pl.when(jnp.logical_and(k >= 1, k < L))
    def _():
        sb = e_sb_ref[0]
        gx = _mm(x_ref[...], we_ih_ref) * sb[0:1] + sb[2:3]
        _cell_rest(gx, we_hh_ref, sb[1:2], h_enc, c_enc)

    # -------- decoder layer 0 (k == L): input = relu(encoder h), state zero
    @pl.when(k == L)
    def _():
        enc = jnp.maximum(h_enc[...], 0.0)
        h_enc[...] = enc                     # relu written back once; reused below
        sb = d_sb_ref[0]
        g = _mm(enc, wd_ih_ref) * sb[0:1] + sb[2:3]
        _cell_first(g, h_dec, c_dec)

    # -------- decoder layers 1 .. L-1
    @pl.when(k >= L + 1)
    def _():
        sb = d_sb_ref[0]
        gx = _mm(h_enc[...], wd_ih_ref) * sb[0:1] + sb[2:3]
        _cell_rest(gx, wd_hh_ref, sb[1:2], h_dec, c_dec)

    # -------- final step: Dropout -> identity; masked LogSoftmax
    @pl.when(k == 2 * L - 1)
    def _():
        _log_softmax_store(h_dec[...], out_ref, o_valid)


def _lstm_ae_kernel_single_layer(
    x_ref, we_ih_ref, e_sb_ref, wd_ih_ref, d_sb_ref, out_ref,
    h_enc, c_enc, h_dec, c_dec, *, o_valid: int,
):
    # num_layers == 1: no W_hh blocks are shipped at all.
    k = pl.program_id(1)

    @pl.when(k == 0)
    def _():
        sb = e_sb_ref[0]
        g = _mm(x_ref[...], we_ih_ref) * sb[0:1] + sb[2:3]
        _cell_first(g, h_enc, c_enc)

    @pl.when(k == 1)
    def _():
        enc = jnp.maximum(h_enc[...], 0.0)
        sb = d_sb_ref[0]
        g = _mm(enc, wd_ih_ref) * sb[0:1] + sb[2:3]
        _cell_first(g, h_dec, c_dec)
        _log_softmax_store(h_dec[...], out_ref, o_valid)


# ----------------------------------------------------------------------------
# Parameter preparation: transpose, per-gate pad to 128-lane tiles, optional
# per-output-column int8 quantization, drop W_hh[0] of each stack.
# ----------------------------------------------------------------------------
def prepare_params(raw, input_size, hidden_size, num_layers,
                   weight_dtype=jnp.bfloat16):
    L = num_layers
    H, O, IN = hidden_size, input_size, input_size
    Hp, Op, INp = _round_up(H, 128), _round_up(O, 128), _round_up(IN, 128)
    quantize = bool(jnp.issubdtype(weight_dtype, jnp.integer))

    def prep_w(w):
        if quantize:
            return _quantize_rows(w)
        return w, jnp.ones(w.shape[:2], jnp.float32)

    def pack_w(w, in_dim, in_pad, gate_dim, gate_pad):
        # (L, 4*gate, in) -> (L, in_pad, 4*gate_pad), zero-padded per gate.
        wt = jnp.transpose(w, (0, 2, 1)).reshape(L, in_dim, 4, gate_dim)
        wt = _pad_axis(wt, 3, gate_pad).reshape(L, in_dim, 4 * gate_pad)
        return _pad_axis(wt, 1, in_pad).astype(weight_dtype)

    def pack_row(v, gate_dim, gate_pad):
        v = v.reshape(L, 4, gate_dim)
        v = _pad_axis(v, 2, gate_pad)
        return v.reshape(L, 4 * gate_pad)

    def pack_sb(s_ih, s_hh, b_ih, b_hh, gate_dim, gate_pad):
        rows = jnp.stack([pack_row(s_ih, gate_dim, gate_pad),
                          pack_row(s_hh, gate_dim, gate_pad),
                          pack_row(b_ih + b_hh, gate_dim, gate_pad)], axis=1)
        return rows.astype(jnp.float32)          # (L, 3, 4*gate_pad)

    qe_ih, se_ih = prep_w(raw["we_ih"])
    qe_hh, se_hh = prep_w(raw["we_hh"])
    qd_ih, sd_ih = prep_w(raw["wd_ih"])
    qd_hh, sd_hh = prep_w(raw["wd_hh"])

    prep = dict(
        we_ih=pack_w(qe_ih, IN, INp, H, Hp),
        wd_ih=pack_w(qd_ih, H, Hp, O, Op),
        e_sb=pack_sb(se_ih, se_hh, raw["be_ih"], raw["be_hh"], H, Hp),
        d_sb=pack_sb(sd_ih, sd_hh, raw["bd_ih"], raw["bd_hh"], O, Op),
        dims=dict(L=L, H=H, O=O, IN=IN, Hp=Hp, Op=Op, INp=INp),
        weight_dtype=weight_dtype,
    )
    if L > 1:
        # Layer 0 of each stack never uses W_hh (h == 0), so never ship it.
        prep["we_hh_rest"] = pack_w(qe_hh, H, Hp, H, Hp)[1:]
        prep["wd_hh_rest"] = pack_w(qd_hh, O, Op, O, Op)[1:]
    return prep


# ----------------------------------------------------------------------------
# Wrapper
# ----------------------------------------------------------------------------
def lstm_autoencoder_forward(x, prep, *, max_rows_per_block=512):
    """x: (..., input_size); the torch module's (T, 1, IN) and a batched
    (B, T, IN) are both accepted — every leading-dim element is an independent
    row because the module re-zeros h/c at each time step.
    Returns log-probabilities with the same leading shape and trailing O."""
    d = prep["dims"]
    L, O, IN = d["L"], d["O"], d["IN"]
    Hp, Op, INp = d["Hp"], d["Op"], d["INp"]
    assert x.shape[-1] == IN

    lead = x.shape[:-1]
    R = 1
    for s in lead:
        R *= int(s)
    x2d = x.reshape(R, IN).astype(jnp.float32)

    # Row tiling: as many rows per block as possible (bounded), 8-aligned.
    R8 = _round_up(max(R, 8), 8)
    n_rb = _cdiv(R8, max_rows_per_block)
    block_rows = _round_up(_cdiv(R8, n_rb), 8)
    Rp = block_rows * n_rb

    x2d = _pad_axis(_pad_axis(x2d, 1, INp), 0, Rp)

    def clip(v, lo, hi):
        return jnp.maximum(jnp.minimum(v, hi), lo)

    if L > 1:
        kernel = functools.partial(_lstm_ae_kernel, num_layers=L, o_valid=O)
        in_specs = [
            # x: resident across all layer steps of one row block
            pl.BlockSpec((block_rows, INp), lambda i, k: (i, 0)),
            # encoder weights: streamed per layer, pinned at L-1 afterwards
            pl.BlockSpec((1, INp, 4 * Hp),
                         lambda i, k: (jnp.minimum(k, L - 1), 0, 0)),
            pl.BlockSpec((1, Hp, 4 * Hp),
                         lambda i, k: (clip(k - 1, 0, L - 2), 0, 0)),
            pl.BlockSpec((1, 3, 4 * Hp),
                         lambda i, k: (jnp.minimum(k, L - 1), 0, 0)),
            # decoder weights: pinned at 0 during the encoder phase (prefetch)
            pl.BlockSpec((1, Hp, 4 * Op),
                         lambda i, k: (clip(k - L, 0, L - 1), 0, 0)),
            pl.BlockSpec((1, Op, 4 * Op),
                         lambda i, k: (clip(k - L - 1, 0, L - 2), 0, 0)),
            pl.BlockSpec((1, 3, 4 * Op),
                         lambda i, k: (clip(k - L, 0, L - 1), 0, 0)),
        ]
        args = (x2d, prep["we_ih"], prep["we_hh_rest"], prep["e_sb"],
                prep["wd_ih"], prep["wd_hh_rest"], prep["d_sb"])
    else:
        kernel = functools.partial(_lstm_ae_kernel_single_layer, o_valid=O)
        in_specs = [
            pl.BlockSpec((block_rows, INp), lambda i, k: (i, 0)),
            pl.BlockSpec((1, INp, 4 * Hp), lambda i, k: (0, 0, 0)),
            pl.BlockSpec((1, 3, 4 * Hp), lambda i, k: (0, 0, 0)),
            pl.BlockSpec((1, Hp, 4 * Op), lambda i, k: (0, 0, 0)),
            pl.BlockSpec((1, 3, 4 * Op), lambda i, k: (0, 0, 0)),
        ]
        args = (x2d, prep["we_ih"], prep["e_sb"], prep["wd_ih"], prep["d_sb"])

    # --- advisory cost estimate for the XLA scheduler ------------------------
    weight_bytes = sum(int(a.size) * a.dtype.itemsize for a in args[1:])
    bytes_accessed = (n_rb * weight_bytes
                      + int(x2d.size) * 4
                      + Rp * Op * 4)
    flops = 2 * Rp * (L * INp * 4 * Hp + (L - 1) * Hp * 4 * Hp
                      + L * Hp * 4 * Op + (L - 1) * Op * 4 * Op)
    transcendentals = Rp * (5 * L * (Hp + Op) + Op)
    cost = pl.CostEstimate(flops=int(flops),
                           transcendentals=int(transcendentals),
                           bytes_accessed=int(bytes_accessed))

    # --- VMEM budget from the real block footprint (v7x has only 64 MiB) -----
    wbpe = prep["we_ih"].dtype.itemsize
    in_block_bytes = block_rows * INp * 4                       # x block (f32)
    in_block_bytes += (INp * 4 * Hp + Hp * 4 * Op) * wbpe       # W_ih blocks
    in_block_bytes += (3 * 4 * Hp + 3 * 4 * Op) * 4             # scale/bias
    if L > 1:
        in_block_bytes += (Hp * 4 * Hp + Op * 4 * Op) * wbpe    # W_hh blocks
    out_block_bytes = block_rows * Op * 4
    scratch_bytes = block_rows * (2 * Hp + 2 * Op) * 4
    vmem_need = 2 * (in_block_bytes + out_block_bytes) + scratch_bytes
    vmem_limit = int(min(max(32 << 20, 1.5 * vmem_need + (4 << 20)), 128 << 20))

    out = pl.pallas_call(
        kernel,
        out_shape=jax.ShapeDtypeStruct((Rp, Op), jnp.float32),
        grid_spec=pltpu.PrefetchScalarGridSpec(
            num_scalar_prefetch=0,
            grid=(n_rb, 2 * L),
            in_specs=in_specs,
            out_specs=pl.BlockSpec((block_rows, Op), lambda i, k: (i, 0)),
            scratch_shapes=[
                pltpu.VMEM((block_rows, Hp), jnp.float32),   # h_enc
                pltpu.VMEM((block_rows, Hp), jnp.float32),   # c_enc
                pltpu.VMEM((block_rows, Op), jnp.float32),   # h_dec
                pltpu.VMEM((block_rows, Op), jnp.float32),   # c_dec
            ],
        ),
        compiler_params=pltpu.CompilerParams(
            dimension_semantics=("parallel", "arbitrary"),
            vmem_limit_bytes=vmem_limit,
        ),
        cost_estimate=cost,
    )(*args)

    return out[:R, :O].reshape(lead + (O,))


# ----------------------------------------------------------------------------
# Deterministic raw-parameter init (nn.LSTMCell shapes, U(-1/sqrt(h), 1/sqrt(h)))
# ----------------------------------------------------------------------------
def init_raw_params(key, input_size, hidden_size, num_layers):
    output_size = input_size
    ks = jax.random.split(key, 8)
    ke = 1.0 / float(hidden_size) ** 0.5
    kd = 1.0 / float(output_size) ** 0.5

    def u(k, shape, bound):
        return jax.random.uniform(k, shape, jnp.float32, minval=-bound, maxval=bound)

    return dict(
        we_ih=u(ks[0], (num_layers, 4 * hidden_size, input_size), ke),
        we_hh=u(ks[1], (num_layers, 4 * hidden_size, hidden_size), ke),
        be_ih=u(ks[2], (num_layers, 4 * hidden_size), ke),
        be_hh=u(ks[3], (num_layers, 4 * hidden_size), ke),
        wd_ih=u(ks[4], (num_layers, 4 * output_size, hidden_size), kd),
        wd_hh=u(ks[5], (num_layers, 4 * output_size, output_size), kd),
        bd_ih=u(ks[6], (num_layers, 4 * output_size), kd),
        bd_hh=u(ks[7], (num_layers, 4 * output_size), kd),
    )


# ----------------------------------------------------------------------------
# Pure-JAX reference mirroring the kernel numerics (bf16 operands, f32 accum,
# same quantization + post-matmul scaling when weight_dtype is an int type).
# ----------------------------------------------------------------------------
def reference_forward(x, raw, num_layers, hidden_size, weight_dtype=jnp.bfloat16):
    quantize = bool(jnp.issubdtype(weight_dtype, jnp.integer))
    lead = x.shape[:-1]
    IN = x.shape[-1]
    O = IN
    xt = x.reshape(-1, IN).astype(jnp.float32)
    R = xt.shape[0]

    def eff(w):
        if quantize:
            return _quantize_rows(w)
        return w, jnp.ones(w.shape[:2], jnp.float32)

    qe_ih, se_ih = eff(raw["we_ih"])
    qe_hh, se_hh = eff(raw["we_hh"])
    qd_ih, sd_ih = eff(raw["wd_ih"])
    qd_hh, sd_hh = eff(raw["wd_hh"])

    def cell(inp, h, c, q_ih, s_ih, q_hh, s_hh, b_ih, b_hh):
        g = (jnp.dot(inp.astype(jnp.bfloat16), q_ih.T.astype(jnp.bfloat16),
                     preferred_element_type=jnp.float32) * s_ih
             + jnp.dot(h.astype(jnp.bfloat16), q_hh.T.astype(jnp.bfloat16),
                       preferred_element_type=jnp.float32) * s_hh
             + (b_ih + b_hh))
        n = g.shape[-1] // 4
        i = jax.nn.sigmoid(g[:, :n])
        f = jax.nn.sigmoid(g[:, n:2 * n])
        gg = jnp.tanh(g[:, 2 * n:3 * n])
        o = jax.nn.sigmoid(g[:, 3 * n:])
        c = f * c + i * gg
        return o * jnp.tanh(c), c

    h = jnp.zeros((R, hidden_size), jnp.float32)
    c = jnp.zeros((R, hidden_size), jnp.float32)
    for k in range(num_layers):
        h, c = cell(xt, h, c, qe_ih[k], se_ih[k], qe_hh[k], se_hh[k],
                    raw["be_ih"][k], raw["be_hh"][k])
    enc = jnp.maximum(h, 0.0)

    h = jnp.zeros((R, O), jnp.float32)
    c = jnp.zeros((R, O), jnp.float32)
    for k in range(num_layers):
        h, c = cell(enc, h, c, qd_ih[k], sd_ih[k], qd_hh[k], sd_hh[k],
                    raw["bd_ih"][k], raw["bd_hh"][k])

    # Dropout (training-mode, stochastic) -> identity; LogSoftmax over features.
    return jax.nn.log_softmax(h, axis=-1).reshape(lead + (O,))


# ----------------------------------------------------------------------------
if __name__ == "__main__":
    # Small stand-ins for the real config (letters_num=95, hidden=1000, L=4)
    B = 2             # batch of sequences (rows are independent -> batched)
    T = 8             # sequence length (password length)
    INPUT_SIZE = 32   # "letters_num"
    HIDDEN = 32
    NUM_LAYERS = 4

    key = jax.random.PRNGKey(0)
    k_x, k_p = jax.random.split(key)

    # (B, T, IN); the torch-style (T, 1, IN) layout is also accepted.
    x = jax.random.normal(k_x, (B, T, INPUT_SIZE), jnp.float32)
    raw = init_raw_params(k_p, INPUT_SIZE, HIDDEN, NUM_LAYERS)

    # ---- bf16 weight path (default) ----------------------------------------
    prep = prepare_params(raw, INPUT_SIZE, HIDDEN, NUM_LAYERS,
                          weight_dtype=jnp.bfloat16)
    out = jax.block_until_ready(lstm_autoencoder_forward(x, prep))
    assert out.shape == (B, T, INPUT_SIZE), out.shape
    assert bool(jnp.all(jnp.isfinite(out))), "non-finite output"
    ref = reference_forward(x, raw, NUM_LAYERS, HIDDEN, weight_dtype=jnp.bfloat16)
    err = float(jnp.max(jnp.abs(out - ref)))
    assert jnp.allclose(out, ref, atol=3e-2, rtol=3e-2), f"bf16 mismatch: {err}"

    # ---- int8 weight-streaming path (v5e/v6e bandwidth optimization) -------
    prep8 = prepare_params(raw, INPUT_SIZE, HIDDEN, NUM_LAYERS,
                           weight_dtype=jnp.int8)
    out8 = jax.block_until_ready(lstm_autoencoder_forward(x, prep8))
    assert bool(jnp.all(jnp.isfinite(out8))), "non-finite int8 output"
    ref8 = reference_forward(x, raw, NUM_LAYERS, HIDDEN, weight_dtype=jnp.int8)
    err8 = float(jnp.max(jnp.abs(out8 - ref8)))
    assert jnp.allclose(out8, ref8, atol=5e-2, rtol=5e-2), f"int8 mismatch: {err8}"

    # ---- single-layer configuration (no dummy W_hh DMA) ---------------------
    raw1 = init_raw_params(k_p, INPUT_SIZE, HIDDEN, 1)
    prep1 = prepare_params(raw1, INPUT_SIZE, HIDDEN, 1)
    x1 = x[:1]
    out1 = jax.block_until_ready(lstm_autoencoder_forward(x1, prep1))
    ref1 = reference_forward(x1, raw1, 1, HIDDEN)
    err1 = float(jnp.max(jnp.abs(out1 - ref1)))
    assert jnp.allclose(out1, ref1, atol=3e-2, rtol=3e-2), f"L=1 mismatch: {err1}"

    print("KERNEL_OK")
</pallas_src>

<mosaic_0001>
module attributes {stable_mosaic.version = 11 : i64} {
  func.func @_lstm_ae_kernel(%arg0: i32, %arg1: i32, %arg2: memref<16x128xf32, #tpu.memory_space<vmem>>, %arg3: memref<1x128x512xbf16, #tpu.memory_space<vmem>>, %arg4: memref<1x128x512xbf16, #tpu.memory_space<vmem>>, %arg5: memref<1x3x512xf32, #tpu.memory_space<vmem>>, %arg6: memref<1x128x512xbf16, #tpu.memory_space<vmem>>, %arg7: memref<1x128x512xbf16, #tpu.memory_space<vmem>>, %arg8: memref<1x3x512xf32, #tpu.memory_space<vmem>>, %arg9: memref<16x128xf32, #tpu.memory_space<vmem>>, %arg10: memref<16x128xf32, #tpu.memory_space<vmem>>, %arg11: memref<16x128xf32, #tpu.memory_space<vmem>>, %arg12: memref<16x128xf32, #tpu.memory_space<vmem>>, %arg13: memref<16x128xf32, #tpu.memory_space<vmem>>) attributes {dimension_semantics = [#tpu.dimension_semantics<parallel>, #tpu.dimension_semantics<arbitrary>], iteration_bounds = array<i64: 1, 8>, scalar_prefetch = 0 : i64, scratch_operands = 4 : i64, tpu.core_type = #tpu.core_type<tc>, window_params = [{transform_indices = @transform_0, window_bounds = array<i64: 16, 128>}, {transform_indices = @transform_1, window_bounds = array<i64: 1, 128, 512>}, {transform_indices = @transform_2, window_bounds = array<i64: 1, 128, 512>}, {transform_indices = @transform_3, window_bounds = array<i64: 1, 3, 512>}, {transform_indices = @transform_4, window_bounds = array<i64: 1, 128, 512>}, {transform_indices = @transform_5, window_bounds = array<i64: 1, 128, 512>}, {transform_indices = @transform_6, window_bounds = array<i64: 1, 3, 512>}, {transform_indices = @transform_7, window_bounds = array<i64: 16, 128>}]} {
    %c0_i32 = arith.constant 0 : i32
    %0 = arith.cmpi eq, %arg1, %c0_i32 : i32
    %1 = arith.extui %0 : i1 to i32
    %c0_i32_0 = arith.constant 0 : i32
    %2 = arith.cmpi ne, %1, %c0_i32_0 : i32
    scf.if %2 {
      %c0 = arith.constant 0 : index
      %c0_6 = arith.constant 0 : index
      %c0_7 = arith.constant 0 : index
      %17 = vector.load %arg5[%c0, %c0_6, %c0_7] : memref<1x3x512xf32, #tpu.memory_space<vmem>>, vector<1x3x512xf32>
      %18 = vector.shape_cast %17 : vector<1x3x512xf32> to vector<3x512xf32>
      %c0_8 = arith.constant 0 : index
      %c0_9 = arith.constant 0 : index
      %19 = vector.load %arg2[%c0_8, %c0_9] : memref<16x128xf32, #tpu.memory_space<vmem>>, vector<16x128xf32>
      %20 = arith.truncf %19 : vector<16x128xf32> to vector<16x128xbf16>
      %c0_10 = arith.constant 0 : index
      %c0_11 = arith.constant 0 : index
      %c0_12 = arith.constant 0 : index
      %21 = vector.load %arg3[%c0_10, %c0_11, %c0_12] : memref<1x128x512xbf16, #tpu.memory_space<vmem>>, vector<1x128x512xbf16>
      %22 = vector.shape_cast %21 : vector<1x128x512xbf16> to vector<128x512xbf16>
      %cst = arith.constant dense<0.000000e+00> : vector<16x512xf32>
      %23 = tpu.matmul %20, %22, %cst {dimension_numbers = #tpu.dot_dimension_numbers<[1], [0], [0], [1], [0, 0, 1, 1], [], []>} : vector<16x128xbf16>, vector<128x512xbf16>, vector<16x512xf32> -> vector<16x512xf32>
      %24 = vector.extract_strided_slice %18 {offsets = [0, 0], sizes = [1, 512], strides = [1, 1]} : vector<3x512xf32> to vector<1x512xf32>
      %25 = vector.broadcast %24 : vector<1x512xf32> to vector<16x512xf32>
      %26 = arith.mulf %23, %25 : vector<16x512xf32>
      %27 = vector.extract_strided_slice %18 {offsets = [2, 0], sizes = [1, 512], strides = [1, 1]} : vector<3x512xf32> to vector<1x512xf32>
      %28 = vector.broadcast %27 : vector<1x512xf32> to vector<16x512xf32>
      %29 = arith.addf %26, %28 : vector<16x512xf32>
      %30 = vector.extract_strided_slice %29 {offsets = [0, 0], sizes = [16, 128], strides = [1, 1]} : vector<16x512xf32> to vector<16x128xf32>
      %31 = arith.negf %30 : vector<16x128xf32>
      %32 = math.exp %31 : vector<16x128xf32>
      %cst_13 = arith.constant 1.000000e+00 : f32
      %33 = vector.broadcast %cst_13 : f32 to vector<16x128xf32>
      %34 = arith.addf %33, %32 : vector<16x128xf32>
      %35 = arith.divf %33, %34 : vector<16x128xf32>
      %36 = vector.extract_strided_slice %29 {offsets = [0, 256], sizes = [16, 128], strides = [1, 1]} : vector<16x512xf32> to vector<16x128xf32>
      %37 = math.tanh %36 : vector<16x128xf32>
      %38 = vector.extract_strided_slice %29 {offsets = [0, 384], sizes = [16, 128], strides = [1, 1]} : vector<16x512xf32> to vector<16x128xf32>
      %39 = arith.negf %38 : vector<16x128xf32>
      %40 = math.exp %39 : vector<16x128xf32>
      %cst_14 = arith.constant 1.000000e+00 : f32
      %41 = vector.broadcast %cst_14 : f32 to vector<16x128xf32>
      %42 = arith.addf %41, %40 : vector<16x128xf32>
      %43 = arith.divf %41, %42 : vector<16x128xf32>
      %44 = arith.mulf %35, %37 : vector<16x128xf32>
      %c0_15 = arith.constant 0 : index
      %c0_16 = arith.constant 0 : index
      %45 = vector.load %arg11[%c0_15, %c0_16] : memref<16x128xf32, #tpu.memory_space<vmem>>, vector<16x128xf32>
      tpu.vector_store %arg11[%c0_15, %c0_16], %44 {strides = array<i32>} : memref<16x128xf32, #tpu.memory_space<vmem>>, vector<16x128xf32>,
      %46 = math.tanh %44 : vector<16x128xf32>
      %47 = arith.mulf %43, %46 : vector<16x128xf32>
      %c0_17 = arith.constant 0 : index
      %c0_18 = arith.constant 0 : index
      %48 = vector.load %arg10[%c0_17, %c0_18] : memref<16x128xf32, #tpu.memory_space<vmem>>, vector<16x128xf32>
      tpu.vector_store %arg10[%c0_17, %c0_18], %47 {strides = array<i32>} : memref<16x128xf32, #tpu.memory_space<vmem>>, vector<16x128xf32>,
    } else {
    }
    %c1_i32 = arith.constant 1 : i32
    %3 = arith.cmpi sge, %arg1, %c1_i32 : i32
    %c4_i32 = arith.constant 4 : i32
    %4 = arith.cmpi slt, %arg1, %c4_i32 : i32
    %5 = arith.andi %3, %4 : i1
    %6 = arith.extui %5 : i1 to i32
    %c0_i32_1 = arith.constant 0 : i32
    %7 = arith.cmpi ne, %6, %c0_i32_1 : i32
    scf.if %7 {
      %c0 = arith.constant 0 : index
      %c0_6 = arith.constant 0 : index
      %c0_7 = arith.constant 0 : index
      %17 = vector.load %arg5[%c0, %c0_6, %c0_7] : memref<1x3x512xf32, #tpu.memory_space<vmem>>, vector<1x3x512xf32>
      %18 = vector.shape_cast %17 : vector<1x3x512xf32> to vector<3x512xf32>
      %c0_8 = arith.constant 0 : index
      %c0_9 = arith.constant 0 : index
      %19 = vector.load %arg2[%c0_8, %c0_9] : memref<16x128xf32, #tpu.memory_space<vmem>>, vector<16x128xf32>
      %20 = arith.truncf %19 : vector<16x128xf32> to vector<16x128xbf16>
      %c0_10 = arith.constant 0 : index
      %c0_11 = arith.constant 0 : index
      %c0_12 = arith.constant 0 : index
      %21 = vector.load %arg3[%c0_10, %c0_11, %c0_12] : memref<1x128x512xbf16, #tpu.memory_space<vmem>>, vector<1x128x512xbf16>
      %22 = vector.shape_cast %21 : vector<1x128x512xbf16> to vector<128x512xbf16>
      %cst = arith.constant dense<0.000000e+00> : vector<16x512xf32>
      %23 = tpu.matmul %20, %22, %cst {dimension_numbers = #tpu.dot_dimension_numbers<[1], [0], [0], [1], [0, 0, 1, 1], [], []>} : vector<16x128xbf16>, vector<128x512xbf16>, vector<16x512xf32> -> vector<16x512xf32>
      %24 = vector.extract_strided_slice %18 {offsets = [0, 0], sizes = [1, 512], strides = [1, 1]} : vector<3x512xf32> to vector<1x512xf32>
      %25 = vector.broadcast %24 : vector<1x512xf32> to vector<16x512xf32>
      %26 = arith.mulf %23, %25 : vector<16x512xf32>
      %27 = vector.extract_strided_slice %18 {offsets = [2, 0], sizes = [1, 512], strides = [1, 1]} : vector<3x512xf32> to vector<1x512xf32>
      %28 = vector.broadcast %27 : vector<1x512xf32> to vector<16x512xf32>
      %29 = arith.addf %26, %28 : vector<16x512xf32>
      %30 = vector.extract_strided_slice %18 {offsets = [1, 0], sizes = [1, 512], strides = [1, 1]} : vector<3x512xf32> to vector<1x512xf32>
      %c0_13 = arith.constant 0 : index
      %c0_14 = arith.constant 0 : index
      %31 = vector.load %arg10[%c0_13, %c0_14] : memref<16x128xf32, #tpu.memory_space<vmem>>, vector<16x128xf32>
      %32 = arith.truncf %31 : vector<16x128xf32> to vector<16x128xbf16>
      %c0_15 = arith.constant 0 : index
      %c0_16 = arith.constant 0 : index
      %c0_17 = arith.constant 0 : index
      %33 = vector.load %arg4[%c0_15, %c0_16, %c0_17] : memref<1x128x512xbf16, #tpu.memory_space<vmem>>, vector<1x128x512xbf16>
      %34 = vector.shape_cast %33 : vector<1x128x512xbf16> to vector<128x512xbf16>
      %cst_18 = arith.constant dense<0.000000e+00> : vector<16x512xf32>
      %35 = tpu.matmul %32, %34, %cst_18 {dimension_numbers = #tpu.dot_dimension_numbers<[1], [0], [0], [1], [0, 0, 1, 1], [], []>} : vector<16x128xbf16>, vector<128x512xbf16>, vector<16x512xf32> -> vector<16x512xf32>
      %36 = vector.broadcast %30 : vector<1x512xf32> to vector<16x512xf32>
      %37 = arith.mulf %35, %36 : vector<16x512xf32>
      %38 = arith.addf %29, %37 : vector<16x512xf32>
      %39 = vector.extract_strided_slice %38 {offsets = [0, 0], sizes = [16, 128], strides = [1, 1]} : vector<16x512xf32> to vector<16x128xf32>
      %40 = arith.negf %39 : vector<16x128xf32>
      %41 = math.exp %40 : vector<16x128xf32>
      %cst_19 = arith.constant 1.000000e+00 : f32
      %42 = vector.broadcast %cst_19 : f32 to vector<16x128xf32>
      %43 = arith.addf %42, %41 : vector<16x128xf32>
      %44 = arith.divf %42, %43 : vector<16x128xf32>
      %45 = vector.extract_strided_slice %38 {offsets = [0, 128], sizes = [16, 128], strides = [1, 1]} : vector<16x512xf32> to vector<16x128xf32>
      %46 = arith.negf %45 : vector<16x128xf32>
      %47 = math.exp %46 : vector<16x128xf32>
      %cst_20 = arith.constant 1.000000e+00 : f32
      %48 = vector.broadcast %cst_20 : f32 to vector<16x128xf32>
      %49 = arith.addf %48, %47 : vector<16x128xf32>
      %50 = arith.divf %48, %49 : vector<16x128xf32>
      %51 = vector.extract_strided_slice %38 {offsets = [0, 256], sizes = [16, 128], strides = [1, 1]} : vector<16x512xf32> to vector<16x128xf32>
      %52 = math.tanh %51 : vector<16x128xf32>
      %53 = vector.extract_strided_slice %38 {offsets = [0, 384], sizes = [16, 128], strides = [1, 1]} : vector<16x512xf32> to vector<16x128xf32>
      %54 = arith.negf %53 : vector<16x128xf32>
      %55 = math.exp %54 : vector<16x128xf32>
      %cst_21 = arith.constant 1.000000e+00 : f32
      %56 = vector.broadcast %cst_21 : f32 to vector<16x128xf32>
      %57 = arith.addf %56, %55 : vector<16x128xf32>
      %58 = arith.divf %56, %57 : vector<16x128xf32>
      %c0_22 = arith.constant 0 : index
      %c0_23 = arith.constant 0 : index
      %59 = vector.load %arg11[%c0_22, %c0_23] : memref<16x128xf32, #tpu.memory_space<vmem>>, vector<16x128xf32>
      %60 = arith.mulf %50, %59 : vector<16x128xf32>
      %61 = arith.mulf %44, %52 : vector<16x128xf32>
      %62 = arith.addf %60, %61 : vector<16x128xf32>
      %c0_24 = arith.constant 0 : index
      %c0_25 = arith.constant 0 : index
      %63 = vector.load %arg11[%c0_24, %c0_25] : memref<16x128xf32, #tpu.memory_space<vmem>>, vector<16x128xf32>
      tpu.vector_store %arg11[%c0_24, %c0_25], %62 {strides = array<i32>} : memref<16x128xf32, #tpu.memory_space<vmem>>, vector<16x128xf32>,
      %64 = math.tanh %62 : vector<16x128xf32>
      %65 = arith.mulf %58, %64 : vector<16x128xf32>
      %c0_26 = arith.constant 0 : index
      %c0_27 = arith.constant 0 : index
      %66 = vector.load %arg10[%c0_26, %c0_27] : memref<16x128xf32, #tpu.memory_space<vmem>>, vector<16x128xf32>
      tpu.vector_store %arg10[%c0_26, %c0_27], %65 {strides = array<i32>} : memref<16x128xf32, #tpu.memory_space<vmem>>, vector<16x128xf32>,
    } else {
    }
    %c4_i32_2 = arith.constant 4 : i32
    %8 = arith.cmpi eq, %arg1, %c4_i32_2 : i32
    %9 = arith.extui %8 : i1 to i32
    %c0_i32_3 = arith.constant 0 : i32
    %10 = arith.cmpi ne, %9, %c0_i32_3 : i32
    scf.if %10 {
      %c0 = arith.constant 0 : index
      %c0_6 = arith.constant 0 : index
      %17 = vector.load %arg10[%c0, %c0_6] : memref<16x128xf32, #tpu.memory_space<vmem>>, vector<16x128xf32>
      %cst = arith.constant 0.000000e+00 : f32
      %18 = vector.broadcast %cst : f32 to vector<16x128xf32>
      %19 = arith.maximumf %17, %18 : vector<16x128xf32>
      %c0_7 = arith.constant 0 : index
      %c0_8 = arith.constant 0 : index
      %20 = vector.load %arg10[%c0_7, %c0_8] : memref<16x128xf32, #tpu.memory_space<vmem>>, vector<16x128xf32>
      tpu.vector_store %arg10[%c0_7, %c0_8], %19 {strides = array<i32>} : memref<16x128xf32, #tpu.memory_space<vmem>>, vector<16x128xf32>,
      %c0_9 = arith.constant 0 : index
      %c0_10 = arith.constant 0 : index
      %c0_11 = arith.constant 0 : index
      %21 = vector.load %arg8[%c0_9, %c0_10, %c0_11] : memref<1x3x512xf32, #tpu.memory_space<vmem>>, vector<1x3x512xf32>
      %22 = vector.shape_cast %21 : vector<1x3x512xf32> to vector<3x512xf32>
      %23 = arith.truncf %19 : vector<16x128xf32> to vector<16x128xbf16>
      %c0_12 = arith.constant 0 : index
      %c0_13 = arith.constant 0 : index
      %c0_14 = arith.constant 0 : index
      %24 = vector.load %arg6[%c0_12, %c0_13, %c0_14] : memref<1x128x512xbf16, #tpu.memory_space<vmem>>, vector<1x128x512xbf16>
      %25 = vector.shape_cast %24 : vector<1x128x512xbf16> to vector<128x512xbf16>
      %cst_15 = arith.constant dense<0.000000e+00> : vector<16x512xf32>
      %26 = tpu.matmul %23, %25, %cst_15 {dimension_numbers = #tpu.dot_dimension_numbers<[1], [0], [0], [1], [0, 0, 1, 1], [], []>} : vector<16x128xbf16>, vector<128x512xbf16>, vector<16x512xf32> -> vector<16x512xf32>
      %27 = vector.extract_strided_slice %22 {offsets = [0, 0], sizes = [1, 512], strides = [1, 1]} : vector<3x512xf32> to vector<1x512xf32>
      %28 = vector.broadcast %27 : vector<1x512xf32> to vector<16x512xf32>
      %29 = arith.mulf %26, %28 : vector<16x512xf32>
      %30 = vector.extract_strided_slice %22 {offsets = [2, 0], sizes = [1, 512], strides = [1, 1]} : vector<3x512xf32> to vector<1x512xf32>
      %31 = vector.broadcast %30 : vector<1x512xf32> to vector<16x512xf32>
      %32 = arith.addf %29, %31 : vector<16x512xf32>
      %33 = vector.extract_strided_slice %32 {offsets = [0, 0], sizes = [16, 128], strides = [1, 1]} : vector<16x512xf32> to vector<16x128xf32>
      %34 = arith.negf %33 : vector<16x128xf32>
      %35 = math.exp %34 : vector<16x128xf32>
      %cst_16 = arith.constant 1.000000e+00 : f32
      %36 = vector.broadcast %cst_16 : f32 to vector<16x128xf32>
      %37 = arith.addf %36, %35 : vector<16x128xf32>
      %38 = arith.divf %36, %37 : vector<16x128xf32>
      %39 = vector.extract_strided_slice %32 {offsets = [0, 256], sizes = [16, 128], strides = [1, 1]} : vector<16x512xf32> to vector<16x128xf32>
      %40 = math.tanh %39 : vector<16x128xf32>
      %41 = vector.extract_strided_slice %32 {offsets = [0, 384], sizes = [16, 128], strides = [1, 1]} : vector<16x512xf32> to vector<16x128xf32>
      %42 = arith.negf %41 : vector<16x128xf32>
      %43 = math.exp %42 : vector<16x128xf32>
      %cst_17 = arith.constant 1.000000e+00 : f32
      %44 = vector.broadcast %cst_17 : f32 to vector<16x128xf32>
      %45 = arith.addf %44, %43 : vector<16x128xf32>
      %46 = arith.divf %44, %45 : vector<16x128xf32>
      %47 = arith.mulf %38, %40 : vector<16x128xf32>
      %c0_18 = arith.constant 0 : index
      %c0_19 = arith.constant 0 : index
      %48 = vector.load %arg13[%c0_18, %c0_19] : memref<16x128xf32, #tpu.memory_space<vmem>>, vector<16x128xf32>
      tpu.vector_store %arg13[%c0_18, %c0_19], %47 {strides = array<i32>} : memref<16x128xf32, #tpu.memory_space<vmem>>, vector<16x128xf32>,
      %49 = math.tanh %47 : vector<16x128xf32>
      %50 = arith.mulf %46, %49 : vector<16x128xf32>
      %c0_20 = arith.constant 0 : index
      %c0_21 = arith.constant 0 : index
      %51 = vector.load %arg12[%c0_20, %c0_21] : memref<16x128xf32, #tpu.memory_space<vmem>>, vector<16x128xf32>
      tpu.vector_store %arg12[%c0_20, %c0_21], %50 {strides = array<i32>} : memref<16x128xf32, #tpu.memory_space<vmem>>, vector<16x128xf32>,
    } else {
    }
    %c5_i32 = arith.constant 5 : i32
    %11 = arith.cmpi sge, %arg1, %c5_i32 : i32
    %12 = arith.extui %11 : i1 to i32
    %c0_i32_4 = arith.constant 0 : i32
    %13 = arith.cmpi ne, %12, %c0_i32_4 : i32
    scf.if %13 {
      %c0 = arith.constant 0 : index
      %c0_6 = arith.constant 0 : index
      %c0_7 = arith.constant 0 : index
      %17 = vector.load %arg8[%c0, %c0_6, %c0_7] : memref<1x3x512xf32, #tpu.memory_space<vmem>>, vector<1x3x512xf32>
      %18 = vector.shape_cast %17 : vector<1x3x512xf32> to vector<3x512xf32>
      %c0_8 = arith.constant 0 : index
      %c0_9 = arith.constant 0 : index
      %19 = vector.load %arg10[%c0_8, %c0_9] : memref<16x128xf32, #tpu.memory_space<vmem>>, vector<16x128xf32>
      %20 = arith.truncf %19 : vector<16x128xf32> to vector<16x128xbf16>
      %c0_10 = arith.constant 0 : index
      %c0_11 = arith.constant 0 : index
      %c0_12 = arith.constant 0 : index
      %21 = vector.load %arg6[%c0_10, %c0_11, %c0_12] : memref<1x128x512xbf16, #tpu.memory_space<vmem>>, vector<1x128x512xbf16>
      %22 = vector.shape_cast %21 : vector<1x128x512xbf16> to vector<128x512xbf16>
      %cst = arith.constant dense<0.000000e+00> : vector<16x512xf32>
      %23 = tpu.matmul %20, %22, %cst {dimension_numbers = #tpu.dot_dimension_numbers<[1], [0], [0], [1], [0, 0, 1, 1], [], []>} : vector<16x128xbf16>, vector<128x512xbf16>, vector<16x512xf32> -> vector<16x512xf32>
      %24 = vector.extract_strided_slice %18 {offsets = [0, 0], sizes = [1, 512], strides = [1, 1]} : vector<3x512xf32> to vector<1x512xf32>
      %25 = vector.broadcast %24 : vector<1x512xf32> to vector<16x512xf32>
      %26 = arith.mulf %23, %25 : vector<16x512xf32>
      %27 = vector.extract_strided_slice %18 {offsets = [2, 0], sizes = [1, 512], strides = [1, 1]} : vector<3x512xf32> to vector<1x512xf32>
      %28 = vector.broadcast %27 : vector<1x512xf32> to vector<16x512xf32>
      %29 = arith.addf %26, %28 : vector<16x512xf32>
      %30 = vector.extract_strided_slice %18 {offsets = [1, 0], sizes = [1, 512], strides = [1, 1]} : vector<3x512xf32> to vector<1x512xf32>
      %c0_13 = arith.constant 0 : index
      %c0_14 = arith.constant 0 : index
      %31 = vector.load %arg12[%c0_13, %c0_14] : memref<16x128xf32, #tpu.memory_space<vmem>>, vector<16x128xf32>
      %32 = arith.truncf %31 : vector<16x128xf32> to vector<16x128xbf16>
      %c0_15 = arith.constant 0 : index
      %c0_16 = arith.constant 0 : index
      %c0_17 = arith.constant 0 : index
      %33 = vector.load %arg7[%c0_15, %c0_16, %c0_17] : memref<1x128x512xbf16, #tpu.memory_space<vmem>>, vector<1x128x512xbf16>
      %34 = vector.shape_cast %33 : vector<1x128x512xbf16> to vector<128x512xbf16>
      %cst_18 = arith.constant dense<0.000000e+00> : vector<16x512xf32>
      %35 = tpu.matmul %32, %34, %cst_18 {dimension_numbers = #tpu.dot_dimension_numbers<[1], [0], [0], [1], [0, 0, 1, 1], [], []>} : vector<16x128xbf16>, vector<128x512xbf16>, vector<16x512xf32> -> vector<16x512xf32>
      %36 = vector.broadcast %30 : vector<1x512xf32> to vector<16x512xf32>
      %37 = arith.mulf %35, %36 : vector<16x512xf32>
      %38 = arith.addf %29, %37 : vector<16x512xf32>
      %39 = vector.extract_strided_slice %38 {offsets = [0, 0], sizes = [16, 128], strides = [1, 1]} : vector<16x512xf32> to vector<16x128xf32>
      %40 = arith.negf %39 : vector<16x128xf32>
      %41 = math.exp %40 : vector<16x128xf32>
      %cst_19 = arith.constant 1.000000e+00 : f32
      %42 = vector.broadcast %cst_19 : f32 to vector<16x128xf32>
      %43 = arith.addf %42, %41 : vector<16x128xf32>
      %44 = arith.divf %42, %43 : vector<16x128xf32>
      %45 = vector.extract_strided_slice %38 {offsets = [0, 128], sizes = [16, 128], strides = [1, 1]} : vector<16x512xf32> to vector<16x128xf32>
      %46 = arith.negf %45 : vector<16x128xf32>
      %47 = math.exp %46 : vector<16x128xf32>
      %cst_20 = arith.constant 1.000000e+00 : f32
      %48 = vector.broadcast %cst_20 : f32 to vector<16x128xf32>
      %49 = arith.addf %48, %47 : vector<16x128xf32>
      %50 = arith.divf %48, %49 : vector<16x128xf32>
      %51 = vector.extract_strided_slice %38 {offsets = [0, 256], sizes = [16, 128], strides = [1, 1]} : vector<16x512xf32> to vector<16x128xf32>
      %52 = math.tanh %51 : vector<16x128xf32>
      %53 = vector.extract_strided_slice %38 {offsets = [0, 384], sizes = [16, 128], strides = [1, 1]} : vector<16x512xf32> to vector<16x128xf32>
      %54 = arith.negf %53 : vector<16x128xf32>
      %55 = math.exp %54 : vector<16x128xf32>
      %cst_21 = arith.constant 1.000000e+00 : f32
      %56 = vector.broadcast %cst_21 : f32 to vector<16x128xf32>
      %57 = arith.addf %56, %55 : vector<16x128xf32>
      %58 = arith.divf %56, %57 : vector<16x128xf32>
      %c0_22 = arith.constant 0 : index
      %c0_23 = arith.constant 0 : index
      %59 = vector.load %arg13[%c0_22, %c0_23] : memref<16x128xf32, #tpu.memory_space<vmem>>, vector<16x128xf32>
      %60 = arith.mulf %50, %59 : vector<16x128xf32>
      %61 = arith.mulf %44, %52 : vector<16x128xf32>
      %62 = arith.addf %60, %61 : vector<16x128xf32>
      %c0_24 = arith.constant 0 : index
      %c0_25 = arith.constant 0 : index
      %63 = vector.load %arg13[%c0_24, %c0_25] : memref<16x128xf32, #tpu.memory_space<vmem>>, vector<16x128xf32>
      tpu.vector_store %arg13[%c0_24, %c0_25], %62 {strides = array<i32>} : memref<16x128xf32, #tpu.memory_space<vmem>>, vector<16x128xf32>,
      %64 = math.tanh %62 : vector<16x128xf32>
      %65 = arith.mulf %58, %64 : vector<16x128xf32>
      %c0_26 = arith.constant 0 : index
      %c0_27 = arith.constant 0 : index
      %66 = vector.load %arg12[%c0_26, %c0_27] : memref<16x128xf32, #tpu.memory_space<vmem>>, vector<16x128xf32>
      tpu.vector_store %arg12[%c0_26, %c0_27], %65 {strides = array<i32>} : memref<16x128xf32, #tpu.memory_space<vmem>>, vector<16x128xf32>,
    } else {
    }
    %c7_i32 = arith.constant 7 : i32
    %14 = arith.cmpi eq, %arg1, %c7_i32 : i32
    %15 = arith.extui %14 : i1 to i32
    %c0_i32_5 = arith.constant 0 : i32
    %16 = arith.cmpi ne, %15, %c0_i32_5 : i32
    scf.if %16 {
      %c0 = arith.constant 0 : index
      %c0_6 = arith.constant 0 : index
      %17 = vector.load %arg12[%c0, %c0_6] : memref<16x128xf32, #tpu.memory_space<vmem>>, vector<16x128xf32>
      %18 = tpu.iota {dimensions = array<i32: 1>} : vector<16x128xi32>
      %c32_i32 = arith.constant 32 : i32
      %19 = vector.broadcast %c32_i32 : i32 to vector<16x128xi32>
      %20 = arith.cmpi slt, %18, %19 : vector<16x128xi32>
      %cst = arith.constant -1.000000e+30 : f32
      %21 = vector.broadcast %cst : f32 to vector<16x128xf32>
      %22 = arith.select %20, %17, %21 : vector<16x128xi1>, vector<16x128xf32>
      %cst_7 = arith.constant dense<0xFF800000> : vector<16xf32>
      %23 = vector.multi_reduction <maximumf>, %22, %cst_7 [1] : vector<16x128xf32> to vector<16xf32>
      %24 = vector.shape_cast %23 : vector<16xf32> to vector<16x1xf32>
      %25 = vector.broadcast %24 : vector<16x1xf32> to vector<16x128xf32>
      %26 = arith.subf %22, %25 : vector<16x128xf32>
      %27 = math.exp %26 : vector<16x128xf32>
      %cst_8 = arith.constant 0.000000e+00 : f32
      %28 = vector.broadcast %cst_8 : f32 to vector<16x128xf32>
      %29 = arith.select %20, %27, %28 : vector<16x128xi1>, vector<16x128xf32>
      %cst_9 = arith.constant dense<0.000000e+00> : vector<16xf32>
      %30 = vector.multi_reduction <add>, %29, %cst_9 [1] : vector<16x128xf32> to vector<16xf32>
      %31 = vector.shape_cast %30 : vector<16xf32> to vector<16x1xf32>
      %32 = math.log %31 : vector<16x1xf32>
      %33 = vector.broadcast %32 : vector<16x1xf32> to vector<16x128xf32>
      %34 = arith.subf %26, %33 : vector<16x128xf32>
      %c0_10 = arith.constant 0 : index
      %c0_11 = arith.constant 0 : index
      %35 = vector.load %arg9[%c0_10, %c0_11] : memref<16x128xf32, #tpu.memory_space<vmem>>, vector<16x128xf32>
      tpu.vector_store %arg9[%c0_10, %c0_11], %34 {strides = array<i32>} : memref<16x128xf32, #tpu.memory_space<vmem>>, vector<16x128xf32>,
    } else {
    }
    return
  }
  func.func @transform_0(%arg0: i32, %arg1: i32) -> (i32, i32) {
    %c0_i32 = arith.constant 0 : i32
    %c0_i32_0 = arith.constant 0 : i32
    return %arg0, %c0_i32 : i32, i32
  }
  func.func @transform_1(%arg0: i32, %arg1: i32) -> (i32, i32, i32) {
    %c3_i32 = arith.constant 3 : i32
    %0 = arith.minsi %arg1, %c3_i32 : i32
    %c0_i32 = arith.constant 0 : i32
    %c0_i32_0 = arith.constant 0 : i32
    %c0_i32_1 = arith.constant 0 : i32
    return %0, %c0_i32, %c0_i32_0 : i32, i32, i32
  }
  func.func @transform_2(%arg0: i32, %arg1: i32) -> (i32, i32, i32) {
    %c1_i32 = arith.constant 1 : i32
    %0 = arith.subi %arg1, %c1_i32 : i32
    %c2_i32 = arith.constant 2 : i32
    %1 = arith.minsi %0, %c2_i32 : i32
    %c0_i32 = arith.constant 0 : i32
    %2 = arith.maxsi %1, %c0_i32 : i32
    %c0_i32_0 = arith.constant 0 : i32
    %c0_i32_1 = arith.constant 0 : i32
    %c0_i32_2 = arith.constant 0 : i32
    return %2, %c0_i32_0, %c0_i32_1 : i32, i32, i32
  }
  func.func @transform_3(%arg0: i32, %arg1: i32) -> (i32, i32, i32) {
    %c3_i32 = arith.constant 3 : i32
    %0 = arith.minsi %arg1, %c3_i32 : i32
    %c0_i32 = arith.constant 0 : i32
    %c0_i32_0 = arith.constant 0 : i32
    %c0_i32_1 = arith.constant 0 : i32
    return %0, %c0_i32, %c0_i32_0 : i32, i32, i32
  }
  func.func @transform_4(%arg0: i32, %arg1: i32) -> (i32, i32, i32) {
    %c4_i32 = arith.constant 4 : i32
    %0 = arith.subi %arg1, %c4_i32 : i32
    %c3_i32 = arith.constant 3 : i32
    %1 = arith.minsi %0, %c3_i32 : i32
    %c0_i32 = arith.constant 0 : i32
    %2 = arith.maxsi %1, %c0_i32 : i32
    %c0_i32_0 = arith.constant 0 : i32
    %c0_i32_1 = arith.constant 0 : i32
    %c0_i32_2 = arith.constant 0 : i32
    return %2, %c0_i32_0, %c0_i32_1 : i32, i32, i32
  }
  func.func @transform_5(%arg0: i32, %arg1: i32) -> (i32, i32, i32) {
    %c4_i32 = arith.constant 4 : i32
    %0 = arith.subi %arg1, %c4_i32 : i32
    %c1_i32 = arith.constant 1 : i32
    %1 = arith.subi %0, %c1_i32 : i32
    %c2_i32 = arith.constant 2 : i32
    %2 = arith.minsi %1, %c2_i32 : i32
    %c0_i32 = arith.constant 0 : i32
    %3 = arith.maxsi %2, %c0_i32 : i32
    %c0_i32_0 = arith.constant 0 : i32
    %c0_i32_1 = arith.constant 0 : i32
    %c0_i32_2 = arith.constant 0 : i32
    return %3, %c0_i32_0, %c0_i32_1 : i32, i32, i32
  }
  func.func @transform_6(%arg0: i32, %arg1: i32) -> (i32, i32, i32) {
    %c4_i32 = arith.constant 4 : i32
    %0 = arith.subi %arg1, %c4_i32 : i32
    %c3_i32 = arith.constant 3 : i32
    %1 = arith.minsi %0, %c3_i32 : i32
    %c0_i32 = arith.constant 0 : i32
    %2 = arith.maxsi %1, %c0_i32 : i32
    %c0_i32_0 = arith.constant 0 : i32
    %c0_i32_1 = arith.constant 0 : i32
    %c0_i32_2 = arith.constant 0 : i32
    return %2, %c0_i32_0, %c0_i32_1 : i32, i32, i32
  }
  func.func @transform_7(%arg0: i32, %arg1: i32) -> (i32, i32) {
    %c0_i32 = arith.constant 0 : i32
    %c0_i32_0 = arith.constant 0 : i32
    return %arg0, %c0_i32 : i32, i32
  }
}

</mosaic_0001>

<llo_original>
// kernel: tpu_custom_call.1
$region0: #{tpu_custom_call.1}
  #allocation0 [shape = 'u32[]', space=smem, size = 0x4, offset = 0x4, fixed_abs, tag = 'smem constant byte address 0x4 - core index']
  #allocation1 [shape = 'u32[144,128]{1,0:T(1,128)}', space=vmem, size = 0x12000, scoped, tag = 'internal scratch']
  #allocation2 [shape = 'f32[16,128]{1,0:T(8,128)}', space=vmem, size = 0x2000, scoped, tag = 'scratch operand']
  #allocation3 [shape = 'f32[16,128]{1,0:T(8,128)}', space=vmem, size = 0x2000, scoped, tag = 'scratch operand']
  #allocation4 [shape = 'f32[16,128]{1,0:T(8,128)}', space=vmem, size = 0x2000, scoped, tag = 'scratch operand']
  #allocation5 [shape = 'f32[16,128]{1,0:T(8,128)}', space=vmem, size = 0x2000, scoped, tag = 'scratch operand']
  %s0 = inlined_call_operand.vmem [shape: f32[16,128], index: 0, kind: input, shape index: {}]
  %s1 = inlined_call_operand.hbm [shape: bf16[4,128,512], index: 1, kind: input, shape index: {}]
  %s2 = inlined_call_operand.hbm [shape: bf16[3,128,512], index: 2, kind: input, shape index: {}]
  %s3 = inlined_call_operand.vmem [shape: f32[4,3,512], index: 3, kind: input, shape index: {}]
  %s4 = inlined_call_operand.hbm [shape: bf16[4,128,512], index: 4, kind: input, shape index: {}]
  %s5 = inlined_call_operand.hbm [shape: bf16[3,128,512], index: 5, kind: input, shape index: {}]
  %s6 = inlined_call_operand.vmem [shape: f32[4,3,512], index: 6, kind: input, shape index: {}]
  %s7 = inlined_call_operand.hbm [shape: f32[16,128], index: 7, kind: output, shape index: {}]
  %s8 = sld [smem:[#allocation0]]
  $region97: #{tpu_custom_call.1} parent=0
    _
  %s10 = ssub.s32 1, %s8
  %s11 = scalar_select 0, %s10, %s8
  $region1: #{tpu_custom_call.1} parent=0
    #allocation6 [shape = 'u8[262144]{0}', space=vmem, size = 0x40000, scoped, tag = 'input window, operand 1']
    #allocation7 [shape = 's32[2]{0}', space=sflag, size = 0x8, scoped, tag = 'scoped memory for tpu_custom_call.1']
    #allocation8 [shape = 's32[2]{0}', space=sflag, size = 0x8, scoped, tag = 'scoped memory for tpu_custom_call.1']
    #allocation9 [shape = 'u8[262144]{0}', space=vmem, size = 0x40000, scoped, tag = 'input window, operand 2']
    #allocation10 [shape = 's32[2]{0}', space=sflag, size = 0x8, scoped, tag = 'scoped memory for tpu_custom_call.1']
    #allocation11 [shape = 'u8[262144]{0}', space=vmem, size = 0x40000, scoped, tag = 'input window, operand 4']
    #allocation12 [shape = 'u8[262144]{0}', space=vmem, size = 0x40000, scoped, tag = 'input window, operand 5']
    #allocation13 [shape = 's32[2]{0}', space=sflag, size = 0x8, scoped, tag = 'scoped memory for tpu_custom_call.1']
    #allocation14 [shape = 'u8[8192]{0}', space=vmem, size = 0x2000, scoped, tag = 'output window, operand 0, single buffered']
    %12 = vsyncpa [#allocation7], 0
    %s13 = scalar_lea.sflag [#allocation7], 1
    %14 = vsyncpa %s13, 0
    %15 = vsyncpa [#allocation10], 0
    %s16 = scalar_lea.sflag [#allocation10], 1
    %17 = vsyncpa %s16, 0
    %18 = vsyncpa [#allocation13], 0
    %s19 = scalar_lea.sflag [#allocation13], 1
    %20 = vsyncpa %s19, 0
    %21 = vsyncpa [#allocation8], 0
    loop: start=0, step=1, limit=10
    $region2: #{tpu_custom_call.1} parent=1 // loop_pre_header
      _
    $region3: #{tpu_custom_call.1} parent=1 // loop_header
      %s23 = sphi 0, %s27
      %p24 = scmp.ge.s32.totalorder %s23, 10
      %s30 = sphi 0, %s42
      %s31 = sphi 0, %s38
      %s32 = sphi 0, %s30
      %s33 = sphi 0, %s31
      %s34 = sphi 0, %s32
      %s35 = sphi 0, %s33
      %s45 = sphi 0, %s47
      %s48 = sphi 0, %s45
      %s49 = sphi 0, %s48
      %s65 = sphi 0, %s49
      %s75 = sphi 0, %s77
      %s78 = sphi 0, %s75
      %s79 = sphi 0, %s78
      %s95 = sphi 0, %s79
      %s111 = sphi 0, %s113
      %s114 = sphi 0, %s111
      %s115 = sphi 0, %s114
      %s131 = sphi 0, %s115
      %s141 = sphi 0, %s143
      %s144 = sphi 0, %s141
      %s145 = sphi 0, %s144
      %s161 = sphi 0, %s145
      %s177 = sphi 0, %s179
      %s180 = sphi 0, %s177
      %s181 = sphi 0, %s180
      %s197 = sphi 0, %s181
      %s213 = sphi 0, %s215
      %s216 = sphi 0, %s213
      %s217 = sphi 0, %s216
      %s233 = sphi 0, %s217
      %s249 = sphi 0, %s251
      %s252 = sphi 0, %s249
      %s253 = sphi 0, %s252
      %s269 = sphi 0, %s253
      %s275 = sphi 0, %s277
      %s278 = sphi 0, %s275
      %s279 = sphi 0, %s278
      %s295 = sphi 0, %s279
    $region4: #{tpu_custom_call.1} parent=1 // loop_header_branch
      %26 = sbr.rel (%p24) target = $region8
    $region5: #{tpu_custom_call.1} parent=1 // loop_body
      %s28 = ssub.s32 %s23, 1
      %s29 = ssub.s32 %s23, 2
      %s36 = sadd.s32 1, %s31
      %p37 = scmp.ge.s32.totalorder %s36, 8
      %s38 = scalar_select %p37, 0, %s36
      %s39 = sadd.s32 1, %s30
      %s40 = scalar_select %p37, %s39, %s30
      %p41 = scmp.ge.s32.totalorder %s40, 1
      %s42 = scalar_select %p41, 0, %s40
      %s43 = ssub.s32 %s30, %s42
      %p44 = scmp.eq.s32.totalorder %s43, 0
      %s46 = sadd.s32 %s45, 1
      %s47 = scalar_select %p44, %s45, %s46
      %p50 = pneg %p44
      %p51 = scmp.eq.s32.totalorder %s23, 7
      %p52 = por %p50, %p51
      %p53 = scmp.ne.s32.totalorder %s45, %s48
      %p54 = scmp.eq.s32.totalorder %s23, 0
      %p55 = por %p53, %p54
      %p56 = scmp.ne.s32.totalorder %s45, %s48
      %p57 = scmp.eq.s32.totalorder %s28, 7
      %p58 = por %p56, %p57
      %p59 = scmp.ne.s32.totalorder %s48, %s49
      %p60 = scmp.eq.s32.totalorder %s28, 0
      %p61 = por %p59, %p60
      %p62 = scmp.ne.s32.totalorder %s48, %s49
      %p63 = scmp.eq.s32.totalorder %s29, 7
      %p64 = por %p62, %p63
      %p66 = scmp.ne.s32.totalorder %s49, %s65
      %p67 = scmp.eq.s32.totalorder %s29, 0
      %p68 = por %p66, %p67
      %p69 = scmp.lt.s32.totalorder %s31, 3
      %s70 = scalar_select %p69, %s31, 3
      %p71 = scmp.lt.s32.totalorder %s38, 3
      %s72 = scalar_select %p71, %s38, 3
      %s73 = ssub.s32 %s70, %s72
      %p74 = scmp.eq.s32.totalorder %s73, 0
      %s76 = sadd.s32 %s75, 1
      %s77 = scalar_select %p74, %s75, %s76
      %p80 = pneg %p74
      %p81 = scmp.eq.s32.totalorder %s23, 7
      %p82 = por %p80, %p81
      %p83 = scmp.ne.s32.totalorder %s75, %s78
      %p84 = scmp.eq.s32.totalorder %s23, 0
      %p85 = por %p83, %p84
      %p86 = scmp.ne.s32.totalorder %s75, %s78
      %p87 = scmp.eq.s32.totalorder %s28, 7
      %p88 = por %p86, %p87
      %p89 = scmp.ne.s32.totalorder %s78, %s79
      %p90 = scmp.eq.s32.totalorder %s28, 0
      %p91 = por %p89, %p90
      %p92 = scmp.ne.s32.totalorder %s78, %s79
      %p93 = scmp.eq.s32.totalorder %s29, 7
      %p94 = por %p92, %p93
      %p96 = scmp.ne.s32.totalorder %s79, %s95
      %p97 = scmp.eq.s32.totalorder %s29, 0
      %p98 = por %p96, %p97
      %s99 = ssub.s32 %s31, 1
      %p100 = scmp.lt.s32.totalorder %s99, 2
      %s101 = scalar_select %p100, %s99, 2
      %p102 = scmp.gt.s32.totalorder %s101, 0
      %s103 = scalar_select %p102, %s101, 0
      %s104 = ssub.s32 %s38, 1
      %p105 = scmp.lt.s32.totalorder %s104, 2
      %s106 = scalar_select %p105, %s104, 2
      %p107 = scmp.gt.s32.totalorder %s106, 0
      %s108 = scalar_select %p107, %s106, 0
      %s109 = ssub.s32 %s103, %s108
      %p110 = scmp.eq.s32.totalorder %s109, 0
      %s112 = sadd.s32 %s111, 1
      %s113 = scalar_select %p110, %s111, %s112
      %p116 = pneg %p110
      %p117 = scmp.eq.s32.totalorder %s23, 7
      %p118 = por %p116, %p117
      %p119 = scmp.ne.s32.totalorder %s111, %s114
      %p120 = scmp.eq.s32.totalorder %s23, 0
      %p121 = por %p119, %p120
      %p122 = scmp.ne.s32.totalorder %s111, %s114
      %p123 = scmp.eq.s32.totalorder %s28, 7
      %p124 = por %p122, %p123
      %p125 = scmp.ne.s32.totalorder %s114, %s115
      %p126 = scmp.eq.s32.totalorder %s28, 0
      %p127 = por %p125, %p126
      %p128 = scmp.ne.s32.totalorder %s114, %s115
      %p129 = scmp.eq.s32.totalorder %s29, 7
      %p130 = por %p128, %p129
      %p132 = scmp.ne.s32.totalorder %s115, %s131
      %p133 = scmp.eq.s32.totalorder %s29, 0
      %p134 = por %p132, %p133
      %p135 = scmp.lt.s32.totalorder %s31, 3
      %s136 = scalar_select %p135, %s31, 3
      %p137 = scmp.lt.s32.totalorder %s38, 3
      %s138 = scalar_select %p137, %s38, 3
      %s139 = ssub.s32 %s136, %s138
      %p140 = scmp.eq.s32.totalorder %s139, 0
      %s142 = sadd.s32 %s141, 1
      %s143 = scalar_select %p140, %s141, %s142
      %p146 = pneg %p140
      %p147 = scmp.eq.s32.totalorder %s23, 7
      %p148 = por %p146, %p147
      %p149 = scmp.ne.s32.totalorder %s141, %s144
      %p150 = scmp.eq.s32.totalorder %s23, 0
      %p151 = por %p149, %p150
      %p152 = scmp.ne.s32.totalorder %s141, %s144
      %p153 = scmp.eq.s32.totalorder %s28, 7
      %p154 = por %p152, %p153
      %p155 = scmp.ne.s32.totalorder %s144, %s145
      %p156 = scmp.eq.s32.totalorder %s28, 0
      %p157 = por %p155, %p156
      %p158 = scmp.ne.s32.totalorder %s144, %s145
      %p159 = scmp.eq.s32.totalorder %s29, 7
      %p160 = por %p158, %p159
      %p162 = scmp.ne.s32.totalorder %s145, %s161
      %p163 = scmp.eq.s32.totalorder %s29, 0
      %p164 = por %p162, %p163
      %s165 = ssub.s32 %s31, 4
      %p166 = scmp.lt.s32.totalorder %s165, 3
      %s167 = scalar_select %p166, %s165, 3
      %p168 = scmp.gt.s32.totalorder %s167, 0
      %s169 = scalar_select %p168, %s167, 0
      %s170 = ssub.s32 %s38, 4
      %p171 = scmp.lt.s32.totalorder %s170, 3
      %s172 = scalar_select %p171, %s170, 3
      %p173 = scmp.gt.s32.totalorder %s172, 0
      %s174 = scalar_select %p173, %s172, 0
      %s175 = ssub.s32 %s169, %s174
      %p176 = scmp.eq.s32.totalorder %s175, 0
      %s178 = sadd.s32 %s177, 1
      %s179 = scalar_select %p176, %s177, %s178
      %p182 = pneg %p176
      %p183 = scmp.eq.s32.totalorder %s23, 7
      %p184 = por %p182, %p183
      %p185 = scmp.ne.s32.totalorder %s177, %s180
      %p186 = scmp.eq.s32.totalorder %s23, 0
      %p187 = por %p185, %p186
      %p188 = scmp.ne.s32.totalorder %s177, %s180
      %p189 = scmp.eq.s32.totalorder %s28, 7
      %p190 = por %p188, %p189
      %p191 = scmp.ne.s32.totalorder %s180, %s181
      %p192 = scmp.eq.s32.totalorder %s28, 0
      %p193 = por %p191, %p192
      %p194 = scmp.ne.s32.totalorder %s180, %s181
      %p195 = scmp.eq.s32.totalorder %s29, 7
      %p196 = por %p194, %p195
      %p198 = scmp.ne.s32.totalorder %s181, %s197
      %p199 = scmp.eq.s32.totalorder %s29, 0
      %p200 = por %p198, %p199
      %s201 = ssub.s32 %s31, 5
      %p202 = scmp.lt.s32.totalorder %s201, 2
      %s203 = scalar_select %p202, %s201, 2
      %p204 = scmp.gt.s32.totalorder %s203, 0
      %s205 = scalar_select %p204, %s203, 0
      %s206 = ssub.s32 %s38, 5
      %p207 = scmp.lt.s32.totalorder %s206, 2
      %s208 = scalar_select %p207, %s206, 2
      %p209 = scmp.gt.s32.totalorder %s208, 0
      %s210 = scalar_select %p209, %s208, 0
      %s211 = ssub.s32 %s205, %s210
      %p212 = scmp.eq.s32.totalorder %s211, 0
      %s214 = sadd.s32 %s213, 1
      %s215 = scalar_select %p212, %s213, %s214
      %p218 = pneg %p212
      %p219 = scmp.eq.s32.totalorder %s23, 7
      %p220 = por %p218, %p219
      %p221 = scmp.ne.s32.totalorder %s213, %s216
      %p222 = scmp.eq.s32.totalorder %s23, 0
      %p223 = por %p221, %p222
      %p224 = scmp.ne.s32.totalorder %s213, %s216
      %p225 = scmp.eq.s32.totalorder %s28, 7
      %p226 = por %p224, %p225
      %p227 = scmp.ne.s32.totalorder %s216, %s217
      %p228 = scmp.eq.s32.totalorder %s28, 0
      %p229 = por %p227, %p228
      %p230 = scmp.ne.s32.totalorder %s216, %s217
      %p231 = scmp.eq.s32.totalorder %s29, 7
      %p232 = por %p230, %p231
      %p234 = scmp.ne.s32.totalorder %s217, %s233
      %p235 = scmp.eq.s32.totalorder %s29, 0
      %p236 = por %p234, %p235
      %s237 = ssub.s32 %s31, 4
      %p238 = scmp.lt.s32.totalorder %s237, 3
      %s239 = scalar_select %p238, %s237, 3
      %p240 = scmp.gt.s32.totalorder %s239, 0
      %s241 = scalar_select %p240, %s239, 0
      %s242 = ssub.s32 %s38, 4
      %p243 = scmp.lt.s32.totalorder %s242, 3
      %s244 = scalar_select %p243, %s242, 3
      %p245 = scmp.gt.s32.totalorder %s244, 0
      %s246 = scalar_select %p245, %s244, 0
      %s247 = ssub.s32 %s241, %s246
      %p248 = scmp.eq.s32.totalorder %s247, 0
      %s250 = sadd.s32 %s249, 1
      %s251 = scalar_select %p248, %s249, %s250
      %p254 = pneg %p248
      %p255 = scmp.eq.s32.totalorder %s23, 7
      %p256 = por %p254, %p255
      %p257 = scmp.ne.s32.totalorder %s249, %s252
      %p258 = scmp.eq.s32.totalorder %s23, 0
      %p259 = por %p257, %p258
      %p260 = scmp.ne.s32.totalorder %s249, %s252
      %p261 = scmp.eq.s32.totalorder %s28, 7
      %p262 = por %p260, %p261
      %p263 = scmp.ne.s32.totalorder %s252, %s253
      %p264 = scmp.eq.s32.totalorder %s28, 0
      %p265 = por %p263, %p264
      %p266 = scmp.ne.s32.totalorder %s252, %s253
      %p267 = scmp.eq.s32.totalorder %s29, 7
      %p268 = por %p266, %p267
      %p270 = scmp.ne.s32.totalorder %s253, %s269
      %p271 = scmp.eq.s32.totalorder %s29, 0
      %p272 = por %p270, %p271
      %s273 = ssub.s32 %s30, %s42
      %p274 = scmp.eq.s32.totalorder %s273, 0
      %s276 = sadd.s32 %s275, 1
      %s277 = scalar_select %p274, %s275, %s276
      %p280 = pneg %p274
      %p281 = scmp.eq.s32.totalorder %s23, 7
      %p282 = por %p280, %p281
      %p283 = scmp.ne.s32.totalorder %s275, %s278
      %p284 = scmp.eq.s32.totalorder %s23, 0
      %p285 = por %p283, %p284
      %p286 = scmp.ne.s32.totalorder %s275, %s278
      %p287 = scmp.eq.s32.totalorder %s28, 7
      %p288 = por %p286, %p287
      %p289 = scmp.ne.s32.totalorder %s278, %s279
      %p290 = scmp.eq.s32.totalorder %s28, 0
      %p291 = por %p289, %p290
      %p292 = scmp.ne.s32.totalorder %s278, %s279
      %p293 = scmp.eq.s32.totalorder %s29, 7
      %p294 = por %p292, %p293
      %p296 = scmp.ne.s32.totalorder %s279, %s295
      %p297 = scmp.eq.s32.totalorder %s29, 0
      %p298 = por %p296, %p297
      %p299 = scmp.le.s32.totalorder 1, %s23
      %p300 = scmp.lt.s32.totalorder %s23, 9
      %p301 = pnand %p299, %p300
      %p302 = pneg %p301
      // Predicated region
      $region9: #{tpu_custom_call.1} parent=5 // pred_check
        _
      $region10: #{tpu_custom_call.1} parent=5 // pred_check_branch
        %304 = sbr.rel (%p301) target = $region12
      $region11: #{tpu_custom_call.1} parent=5 // pred_region
        %s305 = ssub.s32 %s23, 1
        // Predicated region
        $region13: #{tpu_custom_call.1} parent=11 // pred_check
          %p306 = pneg %p61
        $region14: #{tpu_custom_call.1} parent=11 // pred_check_branch
          %308 = sbr.rel (%p306) target = $region16
        $region15: #{tpu_custom_call.1} parent=11 // pred_region
          %s309 = smul.u32 2, %s32
          %p310 = scmp.lt.s32.totalorder %s309, 1
          %s311 = scalar_select %p310, %s309, 1
          %s312 = smul.addr %s311, 8
          %s313 = scalar_lea.vmem %s0, %s312
          %s314 = smul.u32 2, %s32
        $region16: #{tpu_custom_call.1} parent=11 // pred_fallthru
          _
      $region12: #{tpu_custom_call.1} parent=5 // pred_fallthru
        _
      %p315 = scmp.lt.s32.totalorder %s23, 8
      // Predicated region
      $region17: #{tpu_custom_call.1} parent=5 // pred_check
        %p316 = pneg %p315
      $region18: #{tpu_custom_call.1} parent=5 // pred_check_branch
        %318 = sbr.rel (%p316) target = $region20
      $region19: #{tpu_custom_call.1} parent=5 // pred_region
        // Predicated region
        $region21: #{tpu_custom_call.1} parent=19 // pred_check
          %p319 = pneg %p85
        $region22: #{tpu_custom_call.1} parent=19 // pred_check_branch
          %321 = sbr.rel (%p319) target = $region24
        $region23: #{tpu_custom_call.1} parent=19 // pred_region
          %s322 = sand.u32 %s75, 1
          %s323 = scalar_lea.sflag [#allocation7], %s322
          %s324 = sand.u32 %s75, 1
          %s325 = smul.addr %s324, 256
          %s326 = scalar_lea.vmem [#allocation6], %s325
          %p327 = scmp.lt.s32.totalorder %s31, 3
          %s328 = scalar_select %p327, %s31, 3
          %s330 = ssub.s32 4096, 4096
          %331 = vsyncadd %s323, %s330
          %s332 = smul.addr %s328, 64
          %s333 = smul.addr %s332, 64
          %s334 = scalar_lea.hbm %s1, %s333
          %s335 = sshll.u32 %s326, 4
          %s336 = int_to_ptr.vmem [resolvable:$true] %s335
          %341 = dma.hbm_to_vmem [thread:$0]  %s334, 4096, %s336, %s323, 256, 256, 16
        $region24: #{tpu_custom_call.1} parent=19 // pred_fallthru
          _
        // Predicated region
        $region25: #{tpu_custom_call.1} parent=19 // pred_check
          %p342 = pneg %p121
        $region26: #{tpu_custom_call.1} parent=19 // pred_check_branch
          %344 = sbr.rel (%p342) target = $region28
        $region27: #{tpu_custom_call.1} parent=19 // pred_region
          %s345 = sand.u32 %s23, 1
          %s346 = scalar_lea.sflag [#allocation10], %s345
          %s347 = sand.u32 %s111, 1
          %s348 = smul.addr %s347, 256
          %s349 = scalar_lea.vmem [#allocation9], %s348
          %s350 = ssub.s32 %s31, 1
          %p351 = scmp.lt.s32.totalorder %s350, 2
          %s352 = scalar_select %p351, %s350, 2
          %p353 = scmp.gt.s32.totalorder %s352, 0
          %s354 = scalar_select %p353, %s352, 0
          %s356 = ssub.s32 4096, 4096
          %357 = vsyncadd %s346, %s356
          %s358 = smul.addr %s354, 64
          %s359 = smul.addr %s358, 64
          %s360 = scalar_lea.hbm %s2, %s359
          %s361 = sshll.u32 %s349, 4
          %s362 = int_to_ptr.vmem [resolvable:$true] %s361
          %367 = dma.hbm_to_vmem [thread:$0]  %s360, 4096, %s362, %s346, 256, 256, 16
        $region28: #{tpu_custom_call.1} parent=19 // pred_fallthru
          _
        // Predicated region
        $region29: #{tpu_custom_call.1} parent=19 // pred_check
          %p368 = pneg %p151
        $region30: #{tpu_custom_call.1} parent=19 // pred_check_branch
          %370 = sbr.rel (%p368) target = $region32
        $region31: #{tpu_custom_call.1} parent=19 // pred_region
          %p371 = scmp.lt.s32.totalorder %s31, 3
          %s372 = scalar_select %p371, %s31, 3
          %p373 = scmp.lt.s32.totalorder %s372, 3
          %s374 = scalar_select %p373, %s372, 3
          %s375 = smul.addr %s374, 4
          %s376 = smul.addr %s375, 4
          %s377 = scalar_lea.vmem %s3, %s376
          %p378 = scmp.lt.s32.totalorder %s31, 3
          %s379 = scalar_select %p378, %s31, 3
        $region32: #{tpu_custom_call.1} parent=19 // pred_fallthru
          _
        // Predicated region
        $region33: #{tpu_custom_call.1} parent=19 // pred_check
          %p380 = pneg %p187
        $region34: #{tpu_custom_call.1} parent=19 // pred_check_branch
          %382 = sbr.rel (%p380) target = $region36
        $region35: #{tpu_custom_call.1} parent=19 // pred_region
          %s383 = sand.u32 %s23, 1
          %s384 = scalar_lea.sflag [#allocation10], %s383
          %s385 = sand.u32 %s177, 1
          %s386 = smul.addr %s385, 256
          %s387 = scalar_lea.vmem [#allocation11], %s386
          %s388 = ssub.s32 %s31, 4
          %p389 = scmp.lt.s32.totalorder %s388, 3
          %s390 = scalar_select %p389, %s388, 3
          %p391 = scmp.gt.s32.totalorder %s390, 0
          %s392 = scalar_select %p391, %s390, 0
          %s394 = ssub.s32 4096, 4096
          %395 = vsyncadd %s384, %s394
          %s396 = smul.addr %s392, 64
          %s397 = smul.addr %s396, 64
          %s398 = scalar_lea.hbm %s4, %s397
          %s399 = sshll.u32 %s387, 4
          %s400 = int_to_ptr.vmem [resolvable:$true] %s399
          %405 = dma.hbm_to_vmem [thread:$0]  %s398, 4096, %s400, %s384, 256, 256, 16
        $region36: #{tpu_custom_call.1} parent=19 // pred_fallthru
          _
        // Predicated region
        $region37: #{tpu_custom_call.1} parent=19 // pred_check
          %p406 = pneg %p223
        $region38: #{tpu_custom_call.1} parent=19 // pred_check_branch
          %408 = sbr.rel (%p406) target = $region40
        $region39: #{tpu_custom_call.1} parent=19 // pred_region
          %s409 = sand.u32 %s213, 1
          %s410 = scalar_lea.sflag [#allocation13], %s409
          %s411 = sand.u32 %s213, 1
          %s412 = smul.addr %s411, 256
          %s413 = scalar_lea.vmem [#allocation12], %s412
          %s414 = ssub.s32 %s31, 5
          %p415 = scmp.lt.s32.totalorder %s414, 2
          %s416 = scalar_select %p415, %s414, 2
          %p417 = scmp.gt.s32.totalorder %s416, 0
          %s418 = scalar_select %p417, %s416, 0
          %s420 = ssub.s32 4096, 4096
          %421 = vsyncadd %s410, %s420
          %s422 = smul.addr %s418, 64
          %s423 = smul.addr %s422, 64
          %s424 = scalar_lea.hbm %s5, %s423
          %s425 = sshll.u32 %s413, 4
          %s426 = int_to_ptr.vmem [resolvable:$true] %s425
          %431 = dma.hbm_to_vmem [thread:$0]  %s424, 4096, %s426, %s410, 256, 256, 16
        $region40: #{tpu_custom_call.1} parent=19 // pred_fallthru
          _
        // Predicated region
        $region41: #{tpu_custom_call.1} parent=19 // pred_check
          %p432 = pneg %p259
        $region42: #{tpu_custom_call.1} parent=19 // pred_check_branch
          %434 = sbr.rel (%p432) target = $region44
        $region43: #{tpu_custom_call.1} parent=19 // pred_region
          %s435 = ssub.s32 %s31, 4
          %p436 = scmp.lt.s32.totalorder %s435, 3
          %s437 = scalar_select %p436, %s435, 3
          %p438 = scmp.gt.s32.totalorder %s437, 0
          %s439 = scalar_select %p438, %s437, 0
          %p440 = scmp.lt.s32.totalorder %s439, 3
          %s441 = scalar_select %p440, %s439, 3
          %s442 = smul.addr %s441, 4
          %s443 = smul.addr %s442, 4
          %s444 = scalar_lea.vmem %s6, %s443
          %s445 = ssub.s32 %s31, 4
          %p446 = scmp.lt.s32.totalorder %s445, 3
          %s447 = scalar_select %p446, %s445, 3
          %p448 = scmp.gt.s32.totalorder %s447, 0
          %s449 = scalar_select %p448, %s447, 0
        $region44: #{tpu_custom_call.1} parent=19 // pred_fallthru
          _
      $region20: #{tpu_custom_call.1} parent=5 // pred_fallthru
        _
      %p450 = scmp.le.s32.totalorder 1, %s23
      %p451 = scmp.lt.s32.totalorder %s23, 9
      %p452 = pnand %p450, %p451
      %p453 = pneg %p452
      // Predicated region
      $region45: #{tpu_custom_call.1} parent=5 // pred_check
        _
      $region46: #{tpu_custom_call.1} parent=5 // pred_check_branch
        %455 = sbr.rel (%p452) target = $region48
      $region47: #{tpu_custom_call.1} parent=5 // pred_region
        %s456 = ssub.s32 %s23, 1
        %s457 = sand.u32 %s78, 1
        %s458 = scalar_lea.sflag [#allocation7], %s457
        %s459 = sand.u32 %s78, 1
        %s460 = smul.addr %s459, 256
        %s461 = scalar_lea.vmem [#allocation6], %s460
        // Predicated region
        $region49: #{tpu_custom_call.1} parent=47 // pred_check
          %p462 = pneg %p91
        $region50: #{tpu_custom_call.1} parent=47 // pred_check_branch
          %464 = sbr.rel (%p462) target = $region52
        $region51: #{tpu_custom_call.1} parent=47 // pred_region
          %465 = dma.done %s458, 4096
        $region52: #{tpu_custom_call.1} parent=47 // pred_fallthru
          _
        %s466 = sand.u32 %s28, 1
        %s467 = scalar_lea.sflag [#allocation10], %s466
        %s468 = sand.u32 %s114, 1
        %s469 = smul.addr %s468, 256
        %s470 = scalar_lea.vmem [#allocation9], %s469
        // Predicated region
        $region53: #{tpu_custom_call.1} parent=47 // pred_check
          %p471 = pneg %p127
        $region54: #{tpu_custom_call.1} parent=47 // pred_check_branch
          %473 = sbr.rel (%p471) target = $region56
        $region55: #{tpu_custom_call.1} parent=47 // pred_region
          %474 = dma.done %s467, 4096
        $region56: #{tpu_custom_call.1} parent=47 // pred_fallthru
          _
        %s475 = sand.u32 %s28, 1
        %s476 = scalar_lea.sflag [#allocation10], %s475
        %s477 = sand.u32 %s180, 1
        %s478 = smul.addr %s477, 256
        %s479 = scalar_lea.vmem [#allocation11], %s478
        // Predicated region
        $region57: #{tpu_custom_call.1} parent=47 // pred_check
          %p480 = pneg %p193
        $region58: #{tpu_custom_call.1} parent=47 // pred_check_branch
          %482 = sbr.rel (%p480) target = $region60
        $region59: #{tpu_custom_call.1} parent=47 // pred_region
          %483 = dma.done %s476, 4096
        $region60: #{tpu_custom_call.1} parent=47 // pred_fallthru
          _
        %s484 = sand.u32 %s216, 1
        %s485 = scalar_lea.sflag [#allocation13], %s484
        %s486 = sand.u32 %s216, 1
        %s487 = smul.addr %s486, 256
        %s488 = scalar_lea.vmem [#allocation12], %s487
        // Predicated region
        $region61: #{tpu_custom_call.1} parent=47 // pred_check
          %p489 = pneg %p229
        $region62: #{tpu_custom_call.1} parent=47 // pred_check_branch
          %491 = sbr.rel (%p489) target = $region64
        $region63: #{tpu_custom_call.1} parent=47 // pred_region
          %492 = dma.done %s485, 4096
        $region64: #{tpu_custom_call.1} parent=47 // pred_fallthru
          _
        %s493 = smul.u32 2, %s32
        %p494 = scmp.lt.s32.totalorder %s493, 1
        %s495 = scalar_select %p494, %s493, 1
        %s496 = smul.addr %s495, 8
        %s497 = scalar_lea.vmem %s0, %s496
        %p498 = pneg %p61
        %p499 = pneg %p58
        %s500 = sand.u32 %s78, 1
        %s501 = scalar_lea.sflag [#allocation7], %s500
        %s502 = sand.u32 %s78, 1
        %s503 = smul.addr %s502, 256
        %s504 = scalar_lea.vmem [#allocation6], %s503
        %p505 = pneg %p91
        %p506 = pneg %p88
        %s507 = sand.u32 %s28, 1
        %s508 = scalar_lea.sflag [#allocation10], %s507
        %s509 = sand.u32 %s114, 1
        %s510 = smul.addr %s509, 256
        %s511 = scalar_lea.vmem [#allocation9], %s510
        %p512 = pneg %p127
        %p513 = pneg %p124
        %p514 = scmp.lt.s32.totalorder %s33, 3
        %s515 = scalar_select %p514, %s33, 3
        %p516 = scmp.lt.s32.totalorder %s515, 3
        %s517 = scalar_select %p516, %s515, 3
        %s518 = smul.addr %s517, 4
        %s519 = smul.addr %s518, 4
        %s520 = scalar_lea.vmem %s3, %s519
        %p521 = pneg %p157
        %p522 = pneg %p154
        %s523 = sand.u32 %s28, 1
        %s524 = scalar_lea.sflag [#allocation10], %s523
        %s525 = sand.u32 %s180, 1
        %s526 = smul.addr %s525, 256
        %s527 = scalar_lea.vmem [#allocation11], %s526
        %p528 = pneg %p193
        %p529 = pneg %p190
        %s530 = sand.u32 %s216, 1
        %s531 = scalar_lea.sflag [#allocation13], %s530
        %s532 = sand.u32 %s216, 1
        %s533 = smul.addr %s532, 256
        %s534 = scalar_lea.vmem [#allocation12], %s533
        %p535 = pneg %p229
        %p536 = pneg %p226
        %s537 = ssub.s32 %s33, 4
        %p538 = scmp.lt.s32.totalorder %s537, 3
        %s539 = scalar_select %p538, %s537, 3
        %p540 = scmp.gt.s32.totalorder %s539, 0
        %s541 = scalar_select %p540, %s539, 0
        %p542 = scmp.lt.s32.totalorder %s541, 3
        %s543 = scalar_select %p542, %s541, 3
        %s544 = smul.addr %s543, 4
        %s545 = smul.addr %s544, 4
        %s546 = scalar_lea.vmem %s6, %s545
        %p547 = pneg %p265
        %p548 = pneg %p262
        %p549 = pneg %p291
        %p550 = pneg %p288
        %s551 = smul.u32 2, %s32
        %p552 = scmp.lt.s32.totalorder %s551, 1
        %s553 = scalar_select %p552, %s551, 1
        %s554 = smul.addr %s553, 8
        %s555 = scalar_lea.vmem %s0, %s554
        %s556 = smul.u32 2, %s32
        %p557 = scmp.lt.s32.totalorder %s33, 3
        %s558 = scalar_select %p557, %s33, 3
        %s559 = ssub.s32 %s33, 1
        %p560 = scmp.lt.s32.totalorder %s559, 2
        %s561 = scalar_select %p560, %s559, 2
        %p562 = scmp.gt.s32.totalorder %s561, 0
        %s563 = scalar_select %p562, %s561, 0
        %p564 = scmp.lt.s32.totalorder %s33, 3
        %s565 = scalar_select %p564, %s33, 3
        %p566 = scmp.lt.s32.totalorder %s565, 3
        %s567 = scalar_select %p566, %s565, 3
        %s568 = smul.addr %s567, 4
        %s569 = smul.addr %s568, 4
        %s570 = scalar_lea.vmem %s3, %s569
        %p571 = scmp.lt.s32.totalorder %s33, 3
        %s572 = scalar_select %p571, %s33, 3
        %s573 = ssub.s32 %s33, 4
        %p574 = scmp.lt.s32.totalorder %s573, 3
        %s575 = scalar_select %p574, %s573, 3
        %p576 = scmp.gt.s32.totalorder %s575, 0
        %s577 = scalar_select %p576, %s575, 0
        %s578 = ssub.s32 %s33, 5
        %p579 = scmp.lt.s32.totalorder %s578, 2
        %s580 = scalar_select %p579, %s578, 2
        %p581 = scmp.gt.s32.totalorder %s580, 0
        %s582 = scalar_select %p581, %s580, 0
        %s583 = ssub.s32 %s33, 4
        %p584 = scmp.lt.s32.totalorder %s583, 3
        %s585 = scalar_select %p584, %s583, 3
        %p586 = scmp.gt.s32.totalorder %s585, 0
        %s587 = scalar_select %p586, %s585, 0
        %p588 = scmp.lt.s32.totalorder %s587, 3
        %s589 = scalar_select %p588, %s587, 3
        %s590 = smul.addr %s589, 4
        %s591 = smul.addr %s590, 4
        %s592 = scalar_lea.vmem %s6, %s591
        %s593 = ssub.s32 %s33, 4
        %p594 = scmp.lt.s32.totalorder %s593, 3
        %s595 = scalar_select %p594, %s593, 3
        %p596 = scmp.gt.s32.totalorder %s595, 0
        %s597 = scalar_select %p596, %s595, 0
        %s598 = smul.u32 2, %s32
        %p600 = scmp.eq.s32.totalorder %s33, 0
        // Predicated region
        $region65: #{tpu_custom_call.1} parent=47 // pred_check
          %p601 = pneg %p600
        $region66: #{tpu_custom_call.1} parent=47 // pred_check_branch
          %603 = sbr.rel (%p601) target = $region68
        $region67: #{tpu_custom_call.1} parent=47 // pred_region
          %v604 = vld [vmem:[%s570] sm:$0x77]
          %v605 = vld [vmem:[%s570 + $0x8] sm:$0x77]
          %v606 = vld [vmem:[%s555] sm:$0xff]
          %v607 = vld [vmem:[%s555 + $0x8] sm:$0xff]
          %v608 = vpack.c.bf16 %v607, %v606
          %v609 = vld [vmem:[%s461] sm:$0xff]
          %v610 = vld [vmem:[%s461 + $0x8] sm:$0xff]
          %v611 = vld [vmem:[%s461 + $0x10] sm:$0xff]
          %v612 = vld [vmem:[%s461 + $0x18] sm:$0xff]
          %v613 = vld [vmem:[%s461 + $0x20] sm:$0xff]
          %v614 = vld [vmem:[%s461 + $0x28] sm:$0xff]
          %v615 = vld [vmem:[%s461 + $0x30] sm:$0xff]
          %v616 = vld [vmem:[%s461 + $0x38] sm:$0xff]
          %v617 = vld [vmem:[%s461 + $0x40] sm:$0xff]
          %v618 = vld [vmem:[%s461 + $0x48] sm:$0xff]
          %v619 = vld [vmem:[%s461 + $0x50] sm:$0xff]
          %v620 = vld [vmem:[%s461 + $0x58] sm:$0xff]
          %v621 = vld [vmem:[%s461 + $0x60] sm:$0xff]
          %v622 = vld [vmem:[%s461 + $0x68] sm:$0xff]
          %v623 = vld [vmem:[%s461 + $0x70] sm:$0xff]
          %v624 = vld [vmem:[%s461 + $0x78] sm:$0xff]
          %v625 = vld [vmem:[%s461 + $0x80] sm:$0xff]
          %v626 = vld [vmem:[%s461 + $0x88] sm:$0xff]
          %v627 = vld [vmem:[%s461 + $0x90] sm:$0xff]
          %v628 = vld [vmem:[%s461 + $0x98] sm:$0xff]
          %v629 = vld [vmem:[%s461 + $0xa0] sm:$0xff]
          %v630 = vld [vmem:[%s461 + $0xa8] sm:$0xff]
          %v631 = vld [vmem:[%s461 + $0xb0] sm:$0xff]
          %v632 = vld [vmem:[%s461 + $0xb8] sm:$0xff]
          %v633 = vld [vmem:[%s461 + $0xc0] sm:$0xff]
          %v634 = vld [vmem:[%s461 + $0xc8] sm:$0xff]
          %v635 = vld [vmem:[%s461 + $0xd0] sm:$0xff]
          %v636 = vld [vmem:[%s461 + $0xd8] sm:$0xff]
          %v637 = vld [vmem:[%s461 + $0xe0] sm:$0xff]
          %v638 = vld [vmem:[%s461 + $0xe8] sm:$0xff]
          %v639 = vld [vmem:[%s461 + $0xf0] sm:$0xff]
          %v640 = vld [vmem:[%s461 + $0xf8] sm:$0xff]
          %v673 = vunpack.c.l.b16 %v609
          %v674 = vunpack.c.h.b16 %v609
          %v675 = vunpack.c.l.b16 %v610
          %v676 = vunpack.c.h.b16 %v610
          %v677 = vunpack.c.l.b16 %v611
          %v678 = vunpack.c.h.b16 %v611
          %v679 = vunpack.c.l.b16 %v612
          %v680 = vunpack.c.h.b16 %v612
          %v681 = vunpack.c.l.b16 %v613
          %v682 = vunpack.c.h.b16 %v613
          %v683 = vunpack.c.l.b16 %v614
          %v684 = vunpack.c.h.b16 %v614
          %v685 = vunpack.c.l.b16 %v615
          %v686 = vunpack.c.h.b16 %v615
          %v687 = vunpack.c.l.b16 %v616
          %v688 = vunpack.c.h.b16 %v616
          %v689 = vunpack.c.l.b16 %v617
          %v690 = vunpack.c.h.b16 %v617
          %v691 = vunpack.c.l.b16 %v618
          %v692 = vunpack.c.h.b16 %v618
          %v693 = vunpack.c.l.b16 %v619
          %v694 = vunpack.c.h.b16 %v619
          %v695 = vunpack.c.l.b16 %v620
          %v696 = vunpack.c.h.b16 %v620
          %v697 = vunpack.c.l.b16 %v621
          %v698 = vunpack.c.h.b16 %v621
          %v699 = vunpack.c.l.b16 %v622
          %v700 = vunpack.c.h.b16 %v622
          %v701 = vunpack.c.l.b16 %v623
          %v702 = vunpack.c.h.b16 %v623
          %v703 = vunpack.c.l.b16 %v624
          %v704 = vunpack.c.h.b16 %v624
          %v705 = vunpack.c.l.b16 %v625
          %v706 = vunpack.c.h.b16 %v625
          %v707 = vunpack.c.l.b16 %v626
          %v708 = vunpack.c.h.b16 %v626
          %v709 = vunpack.c.l.b16 %v627
          %v710 = vunpack.c.h.b16 %v627
          %v711 = vunpack.c.l.b16 %v628
          %v712 = vunpack.c.h.b16 %v628
          %v713 = vunpack.c.l.b16 %v629
          %v714 = vunpack.c.h.b16 %v629
          %v715 = vunpack.c.l.b16 %v630
          %v716 = vunpack.c.h.b16 %v630
          %v717 = vunpack.c.l.b16 %v631
          %v718 = vunpack.c.h.b16 %v631
          %v719 = vunpack.c.l.b16 %v632
          %v720 = vunpack.c.h.b16 %v632
          %v721 = vunpack.c.l.b16 %v633
          %v722 = vunpack.c.h.b16 %v633
          %v723 = vunpack.c.l.b16 %v634
          %v724 = vunpack.c.h.b16 %v634
          %v725 = vunpack.c.l.b16 %v635
          %v726 = vunpack.c.h.b16 %v635
          %v727 = vunpack.c.l.b16 %v636
          %v728 = vunpack.c.h.b16 %v636
          %v729 = vunpack.c.l.b16 %v637
          %v730 = vunpack.c.h.b16 %v637
          %v731 = vunpack.c.l.b16 %v638
          %v732 = vunpack.c.h.b16 %v638
          %v733 = vunpack.c.l.b16 %v639
          %v734 = vunpack.c.h.b16 %v639
          %v735 = vunpack.c.l.b16 %v640
          %v736 = vunpack.c.h.b16 %v640
          %v737 = vpack.c.b16 %v677, %v673
          %v738 = vpack.c.b16 %v678, %v674
          %v739 = vpack.c.b16 %v679, %v675
          %v740 = vpack.c.b16 %v680, %v676
          %v741 = vpack.c.b16 %v685, %v681
          %v742 = vpack.c.b16 %v686, %v682
          %v743 = vpack.c.b16 %v687, %v683
          %v744 = vpack.c.b16 %v688, %v684
          %v745 = vpack.c.b16 %v693, %v689
          %v746 = vpack.c.b16 %v694, %v690
          %v747 = vpack.c.b16 %v695, %v691
          %v748 = vpack.c.b16 %v696, %v692
          %v749 = vpack.c.b16 %v701, %v697
          %v750 = vpack.c.b16 %v702, %v698
          %v751 = vpack.c.b16 %v703, %v699
          %v752 = vpack.c.b16 %v704, %v700
          %v753 = vpack.c.b16 %v709, %v705
          %v754 = vpack.c.b16 %v710, %v706
          %v755 = vpack.c.b16 %v711, %v707
          %v756 = vpack.c.b16 %v712, %v708
          %v757 = vpack.c.b16 %v717, %v713
          %v758 = vpack.c.b16 %v718, %v714
          %v759 = vpack.c.b16 %v719, %v715
          %v760 = vpack.c.b16 %v720, %v716
          %v761 = vpack.c.b16 %v725, %v721
          %v762 = vpack.c.b16 %v726, %v722
          %v763 = vpack.c.b16 %v727, %v723
          %v764 = vpack.c.b16 %v728, %v724
          %v765 = vpack.c.b16 %v733, %v729
          %v766 = vpack.c.b16 %v734, %v730
          %v767 = vpack.c.b16 %v735, %v731
          %v768 = vpack.c.b16 %v736, %v732
          %801 = vmatprep.subr.bf16.mxu0 %v738
          %802 = vmatpush1.bf16.msra.mxu0 %v737
          %803 = vmatprep.subr.bf16.mxu0 %v742
          %804 = vmatpush1.bf16.msra.mxu0 %v741
          %805 = vmatprep.subr.bf16.mxu0 %v746
          %806 = vmatpush1.bf16.msra.mxu0 %v745
          %807 = vmatprep.subr.bf16.mxu0 %v750
          %808 = vmatpush1.bf16.msra.mxu0 %v749
          %809 = vmatprep.subr.bf16.mxu0 %v754
          %810 = vmatpush1.bf16.msra.mxu0 %v753
          %811 = vmatprep.subr.bf16.mxu0 %v758
          %812 = vmatpush1.bf16.msra.mxu0 %v757
          %813 = vmatprep.subr.bf16.mxu0 %v762
          %814 = vmatpush1.bf16.msra.mxu0 %v761
          %815 = vmatprep.subr.bf16.mxu0 %v766
          %816 = vmatpush1.bf16.msra.mxu0 %v765
          %817 = vmatprep.subr.bf16.mxu0 0
          %818 = vmatpush1.bf16.msra.mxu0 0
          %819 = vmatprep.subr.bf16.mxu0 0
          %820 = vmatpush1.bf16.msra.mxu0 0
          %821 = vmatprep.subr.bf16.mxu0 0
          %822 = vmatpush1.bf16.msra.mxu0 0
          %823 = vmatprep.subr.bf16.mxu0 0
          %824 = vmatpush1.bf16.msra.mxu0 0
          %825 = vmatprep.subr.bf16.mxu0 0
          %826 = vmatpush1.bf16.msra.mxu0 0
          %827 = vmatprep.subr.bf16.mxu0 0
          %828 = vmatpush1.bf16.msra.mxu0 0
          %829 = vmatprep.subr.bf16.mxu0 0
          %830 = vmatpush1.bf16.msra.mxu0 0
          %831 = vmatprep.subr.bf16.mxu0 0
          %832 = vmatpush1.bf16.msra.mxu0 0
          %833 = vmatprep.mubr.bf16.mxu0 0
          %834 = vmatmul.mubr.bf16.gmra.mrb[0].mxu0 %v608
          %v835 = vpop.f32.mrb[0].mxu0
          %v836 = vadd.f32 0.0, %v835
          %v837 = vpop.f32.mrb[0].mxu0
          %v838 = vpop.f32.mrb[0].mxu0
          %v839 = vadd.f32 0.0, %v838
          %v840 = vpop.f32.mrb[0].mxu0
          %841 = vdwg.mxu0
          %842 = vmatprep.subr.bf16.mxu0 %v740
          %843 = vmatpush1.bf16.msra.mxu0 %v739
          %844 = vmatprep.subr.bf16.mxu0 %v744
          %845 = vmatpush1.bf16.msra.mxu0 %v743
          %846 = vmatprep.subr.bf16.mxu0 %v748
          %847 = vmatpush1.bf16.msra.mxu0 %v747
          %848 = vmatprep.subr.bf16.mxu0 %v752
          %849 = vmatpush1.bf16.msra.mxu0 %v751
          %850 = vmatprep.subr.bf16.mxu0 %v756
          %851 = vmatpush1.bf16.msra.mxu0 %v755
          %852 = vmatprep.subr.bf16.mxu0 %v760
          %853 = vmatpush1.bf16.msra.mxu0 %v759
          %854 = vmatprep.subr.bf16.mxu0 %v764
          %855 = vmatpush1.bf16.msra.mxu0 %v763
          %856 = vmatprep.subr.bf16.mxu0 %v768
          %857 = vmatpush1.bf16.msra.mxu0 %v767
          %858 = vmatprep.subr.bf16.mxu0 0
          %859 = vmatpush1.bf16.msra.mxu0 0
          %860 = vmatprep.subr.bf16.mxu0 0
          %861 = vmatpush1.bf16.msra.mxu0 0
          %862 = vmatprep.subr.bf16.mxu0 0
          %863 = vmatpush1.bf16.msra.mxu0 0
          %864 = vmatprep.subr.bf16.mxu0 0
          %865 = vmatpush1.bf16.msra.mxu0 0
          %866 = vmatprep.subr.bf16.mxu0 0
          %867 = vmatpush1.bf16.msra.mxu0 0
          %868 = vmatprep.subr.bf16.mxu0 0
          %869 = vmatpush1.bf16.msra.mxu0 0
          %870 = vmatprep.subr.bf16.mxu0 0
          %871 = vmatpush1.bf16.msra.mxu0 0
          %872 = vmatprep.subr.bf16.mxu0 0
          %873 = vmatpush1.bf16.msra.mxu0 0
          %874 = vmatprep.mubr.bf16.mxu0 0
          %875 = vmatmul.mubr.bf16.gmra.mrb[0].mxu0 %v608
          %v876 = vpop.f32.mrb[0].mxu0
          %v877 = vadd.f32 0.0, %v876
          %v878 = vpop.f32.mrb[0].mxu0
          %v879 = vadd.f32 0.0, %v878
          %v880 = vpop.f32.mrb[0].mxu0
          %v881 = vadd.f32 0.0, %v880
          %v882 = vpop.f32.mrb[0].mxu0
          %v883 = vadd.f32 0.0, %v882
          %884 = vdwg.mxu0
          %v887 = vlaneseq
          %v888 = vshrl.u32 %v887, 7
          %v889 = vsub.s32 0, %v888
          %v890 = vrot.slane %v604, %v889
          %v891 = vlaneseq
          %v892 = vshrl.u32 %v891, 7
          %v893 = vsub.s32 0, %v892
          %v894 = vrot.slane %v605, %v893
          %v895 = vlaneseq
          %v896 = vshrl.u32 %v895, 7
          %v897 = vsub.s32 4, %v896
          %v898 = vrot.slane %v605, %v897
          %v902 = vlaneseq
          %v903 = vshrl.u32 %v902, 7
          %v904 = vsub.s32 0, %v903
          %v905 = vrot.slane %v890, %v904
          %v906 = vlaneseq
          %v907 = vshrl.u32 %v906, 7
          %v908 = vsub.s32 0, %v907
          %v909 = vrot.slane %v894, %v908
          %v910 = vlaneseq
          %v911 = vshrl.u32 %v910, 7
          %v912 = vsub.s32 0, %v911
          %v913 = vrot.slane %v898, %v912
          %v914 = vmul.f32 %v836, %v905
          %v915 = vmul.f32 %v877, %v909
          %v916 = vmul.f32 %v879, %v913
          %v917 = vmul.f32 %v839, %v905
          %v918 = vmul.f32 %v881, %v909
          %v919 = vmul.f32 %v883, %v913
          %v920 = vlaneseq
          %v921 = vshrl.u32 %v920, 7
          %v922 = vsub.s32 2, %v921
          %v923 = vrot.slane %v604, %v922
          %v924 = vlaneseq
          %v925 = vshrl.u32 %v924, 7
          %v926 = vsub.s32 2, %v925
          %v927 = vrot.slane %v605, %v926
          %v928 = vlaneseq
          %v929 = vshrl.u32 %v928, 7
          %v930 = vsub.s32 6, %v929
          %v931 = vrot.slane %v605, %v930
          %v935 = vlaneseq
          %v936 = vshrl.u32 %v935, 7
          %v937 = vsub.s32 2, %v936
          %v938 = vrot.slane %v923, %v937
          %v939 = vlaneseq
          %v940 = vshrl.u32 %v939, 7
          %v941 = vsub.s32 2, %v940
          %v942 = vrot.slane %v927, %v941
          %v943 = vlaneseq
          %v944 = vshrl.u32 %v943, 7
          %v945 = vsub.s32 2, %v944
          %v946 = vrot.slane %v931, %v945
          %v947 = vadd.f32 %v914, %v938
          %v948 = vadd.f32 %v915, %v942
          %v949 = vadd.f32 %v916, %v946
          %v950 = vadd.f32 %v917, %v938
          %v951 = vadd.f32 %v918, %v942
          %v952 = vadd.f32 %v919, %v946
          %v953 = vxor.u32 %v947, 2147483648
          %v954 = vxor.u32 %v950, 2147483648
          %v955 = vmul.f32 %v953, 1.442695
          %v956 = vpow.pop %v955
          %v957 = vmul.f32 %v954, 1.442695
          %v958 = vpow.pop %v957
          %v959 = vadd.f32 %v956, 1.0
          %v960 = vadd.f32 %v958, 1.0
          %v961 = vrcp.pop %v959
          %v962 = vmul.f32 1.0, %v961
          %v963 = vrcp.pop %v960
          %v964 = vmul.f32 1.0, %v963
          %v965 = vtanh.pop %v948
          %v966 = vtanh.pop %v951
          %v967 = vxor.u32 %v949, 2147483648
          %v968 = vxor.u32 %v952, 2147483648
          %v969 = vmul.f32 %v967, 1.442695
          %v970 = vpow.pop %v969
          %v971 = vmul.f32 %v968, 1.442695
          %v972 = vpow.pop %v971
          %v973 = vadd.f32 %v970, 1.0
          %v974 = vadd.f32 %v972, 1.0
          %v975 = vrcp.pop %v973
          %v976 = vmul.f32 1.0, %v975
          %v977 = vrcp.pop %v974
          %v978 = vmul.f32 1.0, %v977
          %v979 = vmul.f32 %v962, %v965
          %v980 = vmul.f32 %v964, %v966
          %981 = vst [vmem:[#allocation3] sm:$0xff] %v979
          %982 = vst [vmem:[#allocation3 + $0x8] sm:$0xff] %v980
          %v983 = vtanh.pop %v979
          %v984 = vtanh.pop %v980
          %v985 = vmul.f32 %v976, %v983
          %v986 = vmul.f32 %v978, %v984
          %987 = vst [vmem:[#allocation2] sm:$0xff] %v985
          %988 = vst [vmem:[#allocation2 + $0x8] sm:$0xff] %v986
        $region68: #{tpu_custom_call.1} parent=47 // pred_fallthru
          _
        %p989 = scmp.ge.s32.totalorder %s33, 1
        %p990 = scmp.lt.s32.totalorder %s33, 4
        %p991 = pnand %p989, %p990
        %p992 = pneg %p991
        // Predicated region
        $region69: #{tpu_custom_call.1} parent=47 // pred_check
          _
        $region70: #{tpu_custom_call.1} parent=47 // pred_check_branch
          %994 = sbr.rel (%p991) target = $region72
        $region71: #{tpu_custom_call.1} parent=47 // pred_region
          %v995 = vld [vmem:[%s570] sm:$0x77]
          %v996 = vld [vmem:[%s570 + $0x8] sm:$0x77]
          %v997 = vld [vmem:[%s555] sm:$0xff]
          %v998 = vld [vmem:[%s555 + $0x8] sm:$0xff]
          %v999 = vpack.c.bf16 %v998, %v997
          %v1000 = vld [vmem:[%s461] sm:$0xff]
          %v1001 = vld [vmem:[%s461 + $0x8] sm:$0xff]
          %v1002 = vld [vmem:[%s461 + $0x10] sm:$0xff]
          %v1003 = vld [vmem:[%s461 + $0x18] sm:$0xff]
          %v1004 = vld [vmem:[%s461 + $0x20] sm:$0xff]
          %v1005 = vld [vmem:[%s461 + $0x28] sm:$0xff]
          %v1006 = vld [vmem:[%s461 + $0x30] sm:$0xff]
          %v1007 = vld [vmem:[%s461 + $0x38] sm:$0xff]
          %v1008 = vld [vmem:[%s461 + $0x40] sm:$0xff]
          %v1009 = vld [vmem:[%s461 + $0x48] sm:$0xff]
          %v1010 = vld [vmem:[%s461 + $0x50] sm:$0xff]
          %v1011 = vld [vmem:[%s461 + $0x58] sm:$0xff]
          %v1012 = vld [vmem:[%s461 + $0x60] sm:$0xff]
          %v1013 = vld [vmem:[%s461 + $0x68] sm:$0xff]
          %v1014 = vld [vmem:[%s461 + $0x70] sm:$0xff]
          %v1015 = vld [vmem:[%s461 + $0x78] sm:$0xff]
          %v1016 = vld [vmem:[%s461 + $0x80] sm:$0xff]
          %v1017 = vld [vmem:[%s461 + $0x88] sm:$0xff]
          %v1018 = vld [vmem:[%s461 + $0x90] sm:$0xff]
          %v1019 = vld [vmem:[%s461 + $0x98] sm:$0xff]
          %v1020 = vld [vmem:[%s461 + $0xa0] sm:$0xff]
          %v1021 = vld [vmem:[%s461 + $0xa8] sm:$0xff]
          %v1022 = vld [vmem:[%s461 + $0xb0] sm:$0xff]
          %v1023 = vld [vmem:[%s461 + $0xb8] sm:$0xff]
          %v1024 = vld [vmem:[%s461 + $0xc0] sm:$0xff]
          %v1025 = vld [vmem:[%s461 + $0xc8] sm:$0xff]
          %v1026 = vld [vmem:[%s461 + $0xd0] sm:$0xff]
          %v1027 = vld [vmem:[%s461 + $0xd8] sm:$0xff]
          %v1028 = vld [vmem:[%s461 + $0xe0] sm:$0xff]
          %v1029 = vld [vmem:[%s461 + $0xe8] sm:$0xff]
          %v1030 = vld [vmem:[%s461 + $0xf0] sm:$0xff]
          %v1031 = vld [vmem:[%s461 + $0xf8] sm:$0xff]
          %v1064 = vunpack.c.l.b16 %v1000
          %v1065 = vunpack.c.h.b16 %v1000
          %v1066 = vunpack.c.l.b16 %v1001
          %v1067 = vunpack.c.h.b16 %v1001
          %v1068 = vunpack.c.l.b16 %v1002
          %v1069 = vunpack.c.h.b16 %v1002
          %v1070 = vunpack.c.l.b16 %v1003
          %v1071 = vunpack.c.h.b16 %v1003
          %v1072 = vunpack.c.l.b16 %v1004
          %v1073 = vunpack.c.h.b16 %v1004
          %v1074 = vunpack.c.l.b16 %v1005
          %v1075 = vunpack.c.h.b16 %v1005
          %v1076 = vunpack.c.l.b16 %v1006
          %v1077 = vunpack.c.h.b16 %v1006
          %v1078 = vunpack.c.l.b16 %v1007
          %v1079 = vunpack.c.h.b16 %v1007
          %v1080 = vunpack.c.l.b16 %v1008
          %v1081 = vunpack.c.h.b16 %v1008
          %v1082 = vunpack.c.l.b16 %v1009
          %v1083 = vunpack.c.h.b16 %v1009
          %v1084 = vunpack.c.l.b16 %v1010
          %v1085 = vunpack.c.h.b16 %v1010
          %v1086 = vunpack.c.l.b16 %v1011
          %v1087 = vunpack.c.h.b16 %v1011
          %v1088 = vunpack.c.l.b16 %v1012
          %v1089 = vunpack.c.h.b16 %v1012
          %v1090 = vunpack.c.l.b16 %v1013
          %v1091 = vunpack.c.h.b16 %v1013
          %v1092 = vunpack.c.l.b16 %v1014
          %v1093 = vunpack.c.h.b16 %v1014
          %v1094 = vunpack.c.l.b16 %v1015
          %v1095 = vunpack.c.h.b16 %v1015
          %v1096 = vunpack.c.l.b16 %v1016
          %v1097 = vunpack.c.h.b16 %v1016
          %v1098 = vunpack.c.l.b16 %v1017
          %v1099 = vunpack.c.h.b16 %v1017
          %v1100 = vunpack.c.l.b16 %v1018
          %v1101 = vunpack.c.h.b16 %v1018
          %v1102 = vunpack.c.l.b16 %v1019
          %v1103 = vunpack.c.h.b16 %v1019
          %v1104 = vunpack.c.l.b16 %v1020
          %v1105 = vunpack.c.h.b16 %v1020
          %v1106 = vunpack.c.l.b16 %v1021
          %v1107 = vunpack.c.h.b16 %v1021
          %v1108 = vunpack.c.l.b16 %v1022
          %v1109 = vunpack.c.h.b16 %v1022
          %v1110 = vunpack.c.l.b16 %v1023
          %v1111 = vunpack.c.h.b16 %v1023
          %v1112 = vunpack.c.l.b16 %v1024
          %v1113 = vunpack.c.h.b16 %v1024
          %v1114 = vunpack.c.l.b16 %v1025
          %v1115 = vunpack.c.h.b16 %v1025
          %v1116 = vunpack.c.l.b16 %v1026
          %v1117 = vunpack.c.h.b16 %v1026
          %v1118 = vunpack.c.l.b16 %v1027
          %v1119 = vunpack.c.h.b16 %v1027
          %v1120 = vunpack.c.l.b16 %v1028
          %v1121 = vunpack.c.h.b16 %v1028
          %v1122 = vunpack.c.l.b16 %v1029
          %v1123 = vunpack.c.h.b16 %v1029
          %v1124 = vunpack.c.l.b16 %v1030
          %v1125 = vunpack.c.h.b16 %v1030
          %v1126 = vunpack.c.l.b16 %v1031
          %v1127 = vunpack.c.h.b16 %v1031
          %v1128 = vpack.c.b16 %v1068, %v1064
          %v1129 = vpack.c.b16 %v1069, %v1065
          %v1130 = vpack.c.b16 %v1070, %v1066
          %v1131 = vpack.c.b16 %v1071, %v1067
          %v1132 = vpack.c.b16 %v1076, %v1072
          %v1133 = vpack.c.b16 %v1077, %v1073
          %v1134 = vpack.c.b16 %v1078, %v1074
          %v1135 = vpack.c.b16 %v1079, %v1075
          %v1136 = vpack.c.b16 %v1084, %v1080
          %v1137 = vpack.c.b16 %v1085, %v1081
          %v1138 = vpack.c.b16 %v1086, %v1082
          %v1139 = vpack.c.b16 %v1087, %v1083
          %v1140 = vpack.c.b16 %v1092, %v1088
          %v1141 = vpack.c.b16 %v1093, %v1089
          %v1142 = vpack.c.b16 %v1094, %v1090
          %v1143 = vpack.c.b16 %v1095, %v1091
          %v1144 = vpack.c.b16 %v1100, %v1096
          %v1145 = vpack.c.b16 %v1101, %v1097
          %v1146 = vpack.c.b16 %v1102, %v1098
          %v1147 = vpack.c.b16 %v1103, %v1099
          %v1148 = vpack.c.b16 %v1108, %v1104
          %v1149 = vpack.c.b16 %v1109, %v1105
          %v1150 = vpack.c.b16 %v1110, %v1106
          %v1151 = vpack.c.b16 %v1111, %v1107
          %v1152 = vpack.c.b16 %v1116, %v1112
          %v1153 = vpack.c.b16 %v1117, %v1113
          %v1154 = vpack.c.b16 %v1118, %v1114
          %v1155 = vpack.c.b16 %v1119, %v1115
          %v1156 = vpack.c.b16 %v1124, %v1120
          %v1157 = vpack.c.b16 %v1125, %v1121
          %v1158 = vpack.c.b16 %v1126, %v1122
          %v1159 = vpack.c.b16 %v1127, %v1123
          %1192 = vmatprep.subr.bf16.mxu0 %v1129
          %1193 = vmatpush1.bf16.msra.mxu0 %v1128
          %1194 = vmatprep.subr.bf16.mxu0 %v1133
          %1195 = vmatpush1.bf16.msra.mxu0 %v1132
          %1196 = vmatprep.subr.bf16.mxu0 %v1137
          %1197 = vmatpush1.bf16.msra.mxu0 %v1136
          %1198 = vmatprep.subr.bf16.mxu0 %v1141
          %1199 = vmatpush1.bf16.msra.mxu0 %v1140
          %1200 = vmatprep.subr.bf16.mxu0 %v1145
          %1201 = vmatpush1.bf16.msra.mxu0 %v1144
          %1202 = vmatprep.subr.bf16.mxu0 %v1149
          %1203 = vmatpush1.bf16.msra.mxu0 %v1148
          %1204 = vmatprep.subr.bf16.mxu0 %v1153
          %1205 = vmatpush1.bf16.msra.mxu0 %v1152
          %1206 = vmatprep.subr.bf16.mxu0 %v1157
          %1207 = vmatpush1.bf16.msra.mxu0 %v1156
          %1208 = vmatprep.subr.bf16.mxu0 0
          %1209 = vmatpush1.bf16.msra.mxu0 0
          %1210 = vmatprep.subr.bf16.mxu0 0
          %1211 = vmatpush1.bf16.msra.mxu0 0
          %1212 = vmatprep.subr.bf16.mxu0 0
          %1213 = vmatpush1.bf16.msra.mxu0 0
          %1214 = vmatprep.subr.bf16.mxu0 0
          %1215 = vmatpush1.bf16.msra.mxu0 0
          %1216 = vmatprep.subr.bf16.mxu0 0
          %1217 = vmatpush1.bf16.msra.mxu0 0
          %1218 = vmatprep.subr.bf16.mxu0 0
          %1219 = vmatpush1.bf16.msra.mxu0 0
          %1220 = vmatprep.subr.bf16.mxu0 0
          %1221 = vmatpush1.bf16.msra.mxu0 0
          %1222 = vmatprep.subr.bf16.mxu0 0
          %1223 = vmatpush1.bf16.msra.mxu0 0
          %1224 = vmatprep.mubr.bf16.mxu0 0
          %1225 = vmatmul.mubr.bf16.gmra.mrb[0].mxu0 %v999
          %v1226 = vpop.f32.mrb[0].mxu0
          %v1227 = vadd.f32 0.0, %v1226
          %v1228 = vpop.f32.mrb[0].mxu0
          %v1229 = vadd.f32 0.0, %v1228
          %v1230 = vpop.f32.mrb[0].mxu0
          %v1231 = vadd.f32 0.0, %v1230
          %v1232 = vpop.f32.mrb[0].mxu0
          %v1233 = vadd.f32 0.0, %v1232
          %1234 = vdwg.mxu0
          %1235 = vmatprep.subr.bf16.mxu0 %v1131
          %1236 = vmatpush1.bf16.msra.mxu0 %v1130
          %1237 = vmatprep.subr.bf16.mxu0 %v1135
          %1238 = vmatpush1.bf16.msra.mxu0 %v1134
          %1239 = vmatprep.subr.bf16.mxu0 %v1139
          %1240 = vmatpush1.bf16.msra.mxu0 %v1138
          %1241 = vmatprep.subr.bf16.mxu0 %v1143
          %1242 = vmatpush1.bf16.msra.mxu0 %v1142
          %1243 = vmatprep.subr.bf16.mxu0 %v1147
          %1244 = vmatpush1.bf16.msra.mxu0 %v1146
          %1245 = vmatprep.subr.bf16.mxu0 %v1151
          %1246 = vmatpush1.bf16.msra.mxu0 %v1150
          %1247 = vmatprep.subr.bf16.mxu0 %v1155
          %1248 = vmatpush1.bf16.msra.mxu0 %v1154
          %1249 = vmatprep.subr.bf16.mxu0 %v1159
          %1250 = vmatpush1.bf16.msra.mxu0 %v1158
          %1251 = vmatprep.subr.bf16.mxu0 0
          %1252 = vmatpush1.bf16.msra.mxu0 0
          %1253 = vmatprep.subr.bf16.mxu0 0
          %1254 = vmatpush1.bf16.msra.mxu0 0
          %1255 = vmatprep.subr.bf16.mxu0 0
          %1256 = vmatpush1.bf16.msra.mxu0 0
          %1257 = vmatprep.subr.bf16.mxu0 0
          %1258 = vmatpush1.bf16.msra.mxu0 0
          %1259 = vmatprep.subr.bf16.mxu0 0
          %1260 = vmatpush1.bf16.msra.mxu0 0
          %1261 = vmatprep.subr.bf16.mxu0 0
          %1262 = vmatpush1.bf16.msra.mxu0 0
          %1263 = vmatprep.subr.bf16.mxu0 0
          %1264 = vmatpush1.bf16.msra.mxu0 0
          %1265 = vmatprep.subr.bf16.mxu0 0
          %1266 = vmatpush1.bf16.msra.mxu0 0
          %1267 = vmatprep.mubr.bf16.mxu0 0
          %1268 = vmatmul.mubr.bf16.gmra.mrb[0].mxu0 %v999
          %v1269 = vpop.f32.mrb[0].mxu0
          %v1270 = vadd.f32 0.0, %v1269
          %v1271 = vpop.f32.mrb[0].mxu0
          %v1272 = vadd.f32 0.0, %v1271
          %v1273 = vpop.f32.mrb[0].mxu0
          %v1274 = vadd.f32 0.0, %v1273
          %v1275 = vpop.f32.mrb[0].mxu0
          %v1276 = vadd.f32 0.0, %v1275
          %1277 = vdwg.mxu0
          %v1280 = vlaneseq
          %v1281 = vshrl.u32 %v1280, 7
          %v1282 = vsub.s32 0, %v1281
          %v1283 = vrot.slane %v995, %v1282
          %v1284 = vlaneseq
          %v1285 = vshrl.u32 %v1284, 7
          %v1286 = vsub.s32 4, %v1285
          %v1287 = vrot.slane %v995, %v1286
          %v1288 = vlaneseq
          %v1289 = vshrl.u32 %v1288, 7
          %v1290 = vsub.s32 0, %v1289
          %v1291 = vrot.slane %v996, %v1290
          %v1292 = vlaneseq
          %v1293 = vshrl.u32 %v1292, 7
          %v1294 = vsub.s32 4, %v1293
          %v1295 = vrot.slane %v996, %v1294
          %v1300 = vlaneseq
          %v1301 = vshrl.u32 %v1300, 7
          %v1302 = vsub.s32 0, %v1301
          %v1303 = vrot.slane %v1283, %v1302
          %v1304 = vlaneseq
          %v1305 = vshrl.u32 %v1304, 7
          %v1306 = vsub.s32 0, %v1305
          %v1307 = vrot.slane %v1287, %v1306
          %v1308 = vlaneseq
          %v1309 = vshrl.u32 %v1308, 7
          %v1310 = vsub.s32 0, %v1309
          %v1311 = vrot.slane %v1291, %v1310
          %v1312 = vlaneseq
          %v1313 = vshrl.u32 %v1312, 7
          %v1314 = vsub.s32 0, %v1313
          %v1315 = vrot.slane %v1295, %v1314
          %v1316 = vmul.f32 %v1227, %v1303
          %v1317 = vmul.f32 %v1229, %v1307
          %v1318 = vmul.f32 %v1270, %v1311
          %v1319 = vmul.f32 %v1272, %v1315
          %v1320 = vmul.f32 %v1231, %v1303
          %v1321 = vmul.f32 %v1233, %v1307
          %v1322 = vmul.f32 %v1274, %v1311
          %v1323 = vmul.f32 %v1276, %v1315
          %v1324 = vlaneseq
          %v1325 = vshrl.u32 %v1324, 7
          %v1326 = vsub.s32 2, %v1325
          %v1327 = vrot.slane %v995, %v1326
          %v1328 = vlaneseq
          %v1329 = vshrl.u32 %v1328, 7
          %v1330 = vsub.s32 6, %v1329
          %v1331 = vrot.slane %v995, %v1330
          %v1332 = vlaneseq
          %v1333 = vshrl.u32 %v1332, 7
          %v1334 = vsub.s32 2, %v1333
          %v1335 = vrot.slane %v996, %v1334
          %v1336 = vlaneseq
          %v1337 = vshrl.u32 %v1336, 7
          %v1338 = vsub.s32 6, %v1337
          %v1339 = vrot.slane %v996, %v1338
          %v1344 = vlaneseq
          %v1345 = vshrl.u32 %v1344, 7
          %v1346 = vsub.s32 2, %v1345
          %v1347 = vrot.slane %v1327, %v1346
          %v1348 = vlaneseq
          %v1349 = vshrl.u32 %v1348, 7
          %v1350 = vsub.s32 2, %v1349
          %v1351 = vrot.slane %v1331, %v1350
          %v1352 = vlaneseq
          %v1353 = vshrl.u32 %v1352, 7
          %v1354 = vsub.s32 2, %v1353
          %v1355 = vrot.slane %v1335, %v1354
          %v1356 = vlaneseq
          %v1357 = vshrl.u32 %v1356, 7
          %v1358 = vsub.s32 2, %v1357
          %v1359 = vrot.slane %v1339, %v1358
          %v1360 = vadd.f32 %v1316, %v1347
          %v1361 = vadd.f32 %v1317, %v1351
          %v1362 = vadd.f32 %v1318, %v1355
          %v1363 = vadd.f32 %v1319, %v1359
          %v1364 = vadd.f32 %v1320, %v1347
          %v1365 = vadd.f32 %v1321, %v1351
          %v1366 = vadd.f32 %v1322, %v1355
          %v1367 = vadd.f32 %v1323, %v1359
          %v1368 = vld [vmem:[#allocation2] sm:$0xff]
          %v1369 = vld [vmem:[#allocation2 + $0x8] sm:$0xff]
          %v1370 = vpack.c.bf16 %v1369, %v1368
          %v1371 = vld [vmem:[%s470] sm:$0xff]
          %v1372 = vld [vmem:[%s470 + $0x8] sm:$0xff]
          %v1373 = vld [vmem:[%s470 + $0x10] sm:$0xff]
          %v1374 = vld [vmem:[%s470 + $0x18] sm:$0xff]
          %v1375 = vld [vmem:[%s470 + $0x20] sm:$0xff]
          %v1376 = vld [vmem:[%s470 + $0x28] sm:$0xff]
          %v1377 = vld [vmem:[%s470 + $0x30] sm:$0xff]
          %v1378 = vld [vmem:[%s470 + $0x38] sm:$0xff]
          %v1379 = vld [vmem:[%s470 + $0x40] sm:$0xff]
          %v1380 = vld [vmem:[%s470 + $0x48] sm:$0xff]
          %v1381 = vld [vmem:[%s470 + $0x50] sm:$0xff]
          %v1382 = vld [vmem:[%s470 + $0x58] sm:$0xff]
          %v1383 = vld [vmem:[%s470 + $0x60] sm:$0xff]
          %v1384 = vld [vmem:[%s470 + $0x68] sm:$0xff]
          %v1385 = vld [vmem:[%s470 + $0x70] sm:$0xff]
          %v1386 = vld [vmem:[%s470 + $0x78] sm:$0xff]
          %v1387 = vld [vmem:[%s470 + $0x80] sm:$0xff]
          %v1388 = vld [vmem:[%s470 + $0x88] sm:$0xff]
          %v1389 = vld [vmem:[%s470 + $0x90] sm:$0xff]
          %v1390 = vld [vmem:[%s470 + $0x98] sm:$0xff]
          %v1391 = vld [vmem:[%s470 + $0xa0] sm:$0xff]
          %v1392 = vld [vmem:[%s470 + $0xa8] sm:$0xff]
          %v1393 = vld [vmem:[%s470 + $0xb0] sm:$0xff]
          %v1394 = vld [vmem:[%s470 + $0xb8] sm:$0xff]
          %v1395 = vld [vmem:[%s470 + $0xc0] sm:$0xff]
          %v1396 = vld [vmem:[%s470 + $0xc8] sm:$0xff]
          %v1397 = vld [vmem:[%s470 + $0xd0] sm:$0xff]
          %v1398 = vld [vmem:[%s470 + $0xd8] sm:$0xff]
          %v1399 = vld [vmem:[%s470 + $0xe0] sm:$0xff]
          %v1400 = vld [vmem:[%s470 + $0xe8] sm:$0xff]
          %v1401 = vld [vmem:[%s470 + $0xf0] sm:$0xff]
          %v1402 = vld [vmem:[%s470 + $0xf8] sm:$0xff]
          %v1435 = vunpack.c.l.b16 %v1371
          %v1436 = vunpack.c.h.b16 %v1371
          %v1437 = vunpack.c.l.b16 %v1372
          %v1438 = vunpack.c.h.b16 %v1372
          %v1439 = vunpack.c.l.b16 %v1373
          %v1440 = vunpack.c.h.b16 %v1373
          %v1441 = vunpack.c.l.b16 %v1374
          %v1442 = vunpack.c.h.b16 %v1374
          %v1443 = vunpack.c.l.b16 %v1375
          %v1444 = vunpack.c.h.b16 %v1375
          %v1445 = vunpack.c.l.b16 %v1376
          %v1446 = vunpack.c.h.b16 %v1376
          %v1447 = vunpack.c.l.b16 %v1377
          %v1448 = vunpack.c.h.b16 %v1377
          %v1449 = vunpack.c.l.b16 %v1378
          %v1450 = vunpack.c.h.b16 %v1378
          %v1451 = vunpack.c.l.b16 %v1379
          %v1452 = vunpack.c.h.b16 %v1379
          %v1453 = vunpack.c.l.b16 %v1380
          %v1454 = vunpack.c.h.b16 %v1380
          %v1455 = vunpack.c.l.b16 %v1381
          %v1456 = vunpack.c.h.b16 %v1381
          %v1457 = vunpack.c.l.b16 %v1382
          %v1458 = vunpack.c.h.b16 %v1382
          %v1459 = vunpack.c.l.b16 %v1383
          %v1460 = vunpack.c.h.b16 %v1383
          %v1461 = vunpack.c.l.b16 %v1384
          %v1462 = vunpack.c.h.b16 %v1384
          %v1463 = vunpack.c.l.b16 %v1385
          %v1464 = vunpack.c.h.b16 %v1385
          %v1465 = vunpack.c.l.b16 %v1386
          %v1466 = vunpack.c.h.b16 %v1386
          %v1467 = vunpack.c.l.b16 %v1387
          %v1468 = vunpack.c.h.b16 %v1387
          %v1469 = vunpack.c.l.b16 %v1388
          %v1470 = vunpack.c.h.b16 %v1388
          %v1471 = vunpack.c.l.b16 %v1389
          %v1472 = vunpack.c.h.b16 %v1389
          %v1473 = vunpack.c.l.b16 %v1390
          %v1474 = vunpack.c.h.b16 %v1390
          %v1475 = vunpack.c.l.b16 %v1391
          %v1476 = vunpack.c.h.b16 %v1391
          %v1477 = vunpack.c.l.b16 %v1392
          %v1478 = vunpack.c.h.b16 %v1392
          %v1479 = vunpack.c.l.b16 %v1393
          %v1480 = vunpack.c.h.b16 %v1393
          %v1481 = vunpack.c.l.b16 %v1394
          %v1482 = vunpack.c.h.b16 %v1394
          %v1483 = vunpack.c.l.b16 %v1395
          %v1484 = vunpack.c.h.b16 %v1395
          %v1485 = vunpack.c.l.b16 %v1396
          %v1486 = vunpack.c.h.b16 %v1396
          %v1487 = vunpack.c.l.b16 %v1397
          %v1488 = vunpack.c.h.b16 %v1397
          %v1489 = vunpack.c.l.b16 %v1398
          %v1490 = vunpack.c.h.b16 %v1398
          %v1491 = vunpack.c.l.b16 %v1399
          %v1492 = vunpack.c.h.b16 %v1399
          %v1493 = vunpack.c.l.b16 %v1400
          %v1494 = vunpack.c.h.b16 %v1400
          %v1495 = vunpack.c.l.b16 %v1401
          %v1496 = vunpack.c.h.b16 %v1401
          %v1497 = vunpack.c.l.b16 %v1402
          %v1498 = vunpack.c.h.b16 %v1402
          %v1499 = vpack.c.b16 %v1439, %v1435
          %v1500 = vpack.c.b16 %v1440, %v1436
          %v1501 = vpack.c.b16 %v1441, %v1437
          %v1502 = vpack.c.b16 %v1442, %v1438
          %v1503 = vpack.c.b16 %v1447, %v1443
          %v1504 = vpack.c.b16 %v1448, %v1444
          %v1505 = vpack.c.b16 %v1449, %v1445
          %v1506 = vpack.c.b16 %v1450, %v1446
          %v1507 = vpack.c.b16 %v1455, %v1451
          %v1508 = vpack.c.b16 %v1456, %v1452
          %v1509 = vpack.c.b16 %v1457, %v1453
          %v1510 = vpack.c.b16 %v1458, %v1454
          %v1511 = vpack.c.b16 %v1463, %v1459
          %v1512 = vpack.c.b16 %v1464, %v1460
          %v1513 = vpack.c.b16 %v1465, %v1461
          %v1514 = vpack.c.b16 %v1466, %v1462
          %v1515 = vpack.c.b16 %v1471, %v1467
          %v1516 = vpack.c.b16 %v1472, %v1468
          %v1517 = vpack.c.b16 %v1473, %v1469
          %v1518 = vpack.c.b16 %v1474, %v1470
          %v1519 = vpack.c.b16 %v1479, %v1475
          %v1520 = vpack.c.b16 %v1480, %v1476
          %v1521 = vpack.c.b16 %v1481, %v1477
          %v1522 = vpack.c.b16 %v1482, %v1478
          %v1523 = vpack.c.b16 %v1487, %v1483
          %v1524 = vpack.c.b16 %v1488, %v1484
          %v1525 = vpack.c.b16 %v1489, %v1485
          %v1526 = vpack.c.b16 %v1490, %v1486
          %v1527 = vpack.c.b16 %v1495, %v1491
          %v1528 = vpack.c.b16 %v1496, %v1492
          %v1529 = vpack.c.b16 %v1497, %v1493
          %v1530 = vpack.c.b16 %v1498, %v1494
          %1563 = vmatprep.subr.bf16.mxu0 %v1500
          %1564 = vmatpush1.bf16.msra.mxu0 %v1499
          %1565 = vmatprep.subr.bf16.mxu0 %v1504
          %1566 = vmatpush1.bf16.msra.mxu0 %v1503
          %1567 = vmatprep.subr.bf16.mxu0 %v1508
          %1568 = vmatpush1.bf16.msra.mxu0 %v1507
          %1569 = vmatprep.subr.bf16.mxu0 %v1512
          %1570 = vmatpush1.bf16.msra.mxu0 %v1511
          %1571 = vmatprep.subr.bf16.mxu0 %v1516
          %1572 = vmatpush1.bf16.msra.mxu0 %v1515
          %1573 = vmatprep.subr.bf16.mxu0 %v1520
          %1574 = vmatpush1.bf16.msra.mxu0 %v1519
          %1575 = vmatprep.subr.bf16.mxu0 %v1524
          %1576 = vmatpush1.bf16.msra.mxu0 %v1523
          %1577 = vmatprep.subr.bf16.mxu0 %v1528
          %1578 = vmatpush1.bf16.msra.mxu0 %v1527
          %1579 = vmatprep.subr.bf16.mxu0 0
          %1580 = vmatpush1.bf16.msra.mxu0 0
          %1581 = vmatprep.subr.bf16.mxu0 0
          %1582 = vmatpush1.bf16.msra.mxu0 0
          %1583 = vmatprep.subr.bf16.mxu0 0
          %1584 = vmatpush1.bf16.msra.mxu0 0
          %1585 = vmatprep.subr.bf16.mxu0 0
          %1586 = vmatpush1.bf16.msra.mxu0 0
          %1587 = vmatprep.subr.bf16.mxu0 0
          %1588 = vmatpush1.bf16.msra.mxu0 0
          %1589 = vmatprep.subr.bf16.mxu0 0
          %1590 = vmatpush1.bf16.msra.mxu0 0
          %1591 = vmatprep.subr.bf16.mxu0 0
          %1592 = vmatpush1.bf16.msra.mxu0 0
          %1593 = vmatprep.subr.bf16.mxu0 0
          %1594 = vmatpush1.bf16.msra.mxu0 0
          %1595 = vmatprep.mubr.bf16.mxu0 0
          %1596 = vmatmul.mubr.bf16.gmra.mrb[0].mxu0 %v1370
          %v1597 = vpop.f32.mrb[0].mxu0
          %v1598 = vadd.f32 0.0, %v1597
          %v1599 = vpop.f32.mrb[0].mxu0
          %v1600 = vadd.f32 0.0, %v1599
          %v1601 = vpop.f32.mrb[0].mxu0
          %v1602 = vadd.f32 0.0, %v1601
          %v1603 = vpop.f32.mrb[0].mxu0
          %v1604 = vadd.f32 0.0, %v1603
          %1605 = vdwg.mxu0
          %1606 = vmatprep.subr.bf16.mxu0 %v1502
          %1607 = vmatpush1.bf16.msra.mxu0 %v1501
          %1608 = vmatprep.subr.bf16.mxu0 %v1506
          %1609 = vmatpush1.bf16.msra.mxu0 %v1505
          %1610 = vmatprep.subr.bf16.mxu0 %v1510
          %1611 = vmatpush1.bf16.msra.mxu0 %v1509
          %1612 = vmatprep.subr.bf16.mxu0 %v1514
          %1613 = vmatpush1.bf16.msra.mxu0 %v1513
          %1614 = vmatprep.subr.bf16.mxu0 %v1518
          %1615 = vmatpush1.bf16.msra.mxu0 %v1517
          %1616 = vmatprep.subr.bf16.mxu0 %v1522
          %1617 = vmatpush1.bf16.msra.mxu0 %v1521
          %1618 = vmatprep.subr.bf16.mxu0 %v1526
          %1619 = vmatpush1.bf16.msra.mxu0 %v1525
          %1620 = vmatprep.subr.bf16.mxu0 %v1530
          %1621 = vmatpush1.bf16.msra.mxu0 %v1529
          %1622 = vmatprep.subr.bf16.mxu0 0
          %1623 = vmatpush1.bf16.msra.mxu0 0
          %1624 = vmatprep.subr.bf16.mxu0 0
          %1625 = vmatpush1.bf16.msra.mxu0 0
          %1626 = vmatprep.subr.bf16.mxu0 0
          %1627 = vmatpush1.bf16.msra.mxu0 0
          %1628 = vmatprep.subr.bf16.mxu0 0
          %1629 = vmatpush1.bf16.msra.mxu0 0
          %1630 = vmatprep.subr.bf16.mxu0 0
          %1631 = vmatpush1.bf16.msra.mxu0 0
          %1632 = vmatprep.subr.bf16.mxu0 0
          %1633 = vmatpush1.bf16.msra.mxu0 0
          %1634 = vmatprep.subr.bf16.mxu0 0
          %1635 = vmatpush1.bf16.msra.mxu0 0
          %1636 = vmatprep.subr.bf16.mxu0 0
          %1637 = vmatpush1.bf16.msra.mxu0 0
          %1638 = vmatprep.mubr.bf16.mxu0 0
          %1639 = vmatmul.mubr.bf16.gmra.mrb[0].mxu0 %v1370
          %v1640 = vpop.f32.mrb[0].mxu0
          %v1641 = vadd.f32 0.0, %v1640
          %v1642 = vpop.f32.mrb[0].mxu0
          %v1643 = vadd.f32 0.0, %v1642
          %v1644 = vpop.f32.mrb[0].mxu0
          %v1645 = vadd.f32 0.0, %v1644
          %v1646 = vpop.f32.mrb[0].mxu0
          %v1647 = vadd.f32 0.0, %v1646
          %1648 = vdwg.mxu0
          %v1649 = vlaneseq
          %v1650 = vshrl.u32 %v1649, 7
          %v1651 = vsub.s32 1, %v1650
          %v1652 = vrot.slane %v995, %v1651
          %v1653 = vlaneseq
          %v1654 = vshrl.u32 %v1653, 7
          %v1655 = vsub.s32 5, %v1654
          %v1656 = vrot.slane %v995, %v1655
          %v1657 = vlaneseq
          %v1658 = vshrl.u32 %v1657, 7
          %v1659 = vsub.s32 1, %v1658
          %v1660 = vrot.slane %v996, %v1659
          %v1661 = vlaneseq
          %v1662 = vshrl.u32 %v1661, 7
          %v1663 = vsub.s32 5, %v1662
          %v1664 = vrot.slane %v996, %v1663
          %v1669 = vlaneseq
          %v1670 = vshrl.u32 %v1669, 7
          %v1671 = vsub.s32 1, %v1670
          %v1672 = vrot.slane %v1652, %v1671
          %v1673 = vlaneseq
          %v1674 = vshrl.u32 %v1673, 7
          %v1675 = vsub.s32 1, %v1674
          %v1676 = vrot.slane %v1656, %v1675
          %v1677 = vlaneseq
          %v1678 = vshrl.u32 %v1677, 7
          %v1679 = vsub.s32 1, %v1678
          %v1680 = vrot.slane %v1660, %v1679
          %v1681 = vlaneseq
          %v1682 = vshrl.u32 %v1681, 7
          %v1683 = vsub.s32 1, %v1682
          %v1684 = vrot.slane %v1664, %v1683
          %v1685 = vmul.f32 %v1598, %v1672
          %v1686 = vmul.f32 %v1600, %v1676
          %v1687 = vmul.f32 %v1641, %v1680
          %v1688 = vmul.f32 %v1643, %v1684
          %v1689 = vmul.f32 %v1602, %v1672
          %v1690 = vmul.f32 %v1604, %v1676
          %v1691 = vmul.f32 %v1645, %v1680
          %v1692 = vmul.f32 %v1647, %v1684
          %v1693 = vadd.f32 %v1360, %v1685
          %v1694 = vadd.f32 %v1361, %v1686
          %v1695 = vadd.f32 %v1362, %v1687
          %v1696 = vadd.f32 %v1363, %v1688
          %v1697 = vadd.f32 %v1364, %v1689
          %v1698 = vadd.f32 %v1365, %v1690
          %v1699 = vadd.f32 %v1366, %v1691
          %v1700 = vadd.f32 %v1367, %v1692
          %v1701 = vxor.u32 %v1693, 2147483648
          %v1702 = vxor.u32 %v1697, 2147483648
          %v1703 = vmul.f32 %v1701, 1.442695
          %v1704 = vpow.pop %v1703
          %v1705 = vmul.f32 %v1702, 1.442695
          %v1706 = vpow.pop %v1705
          %v1707 = vadd.f32 %v1704, 1.0
          %v1708 = vadd.f32 %v1706, 1.0
          %v1709 = vrcp.pop %v1707
          %v1710 = vmul.f32 1.0, %v1709
          %v1711 = vrcp.pop %v1708
          %v1712 = vmul.f32 1.0, %v1711
          %v1713 = vxor.u32 %v1694, 2147483648
          %v1714 = vxor.u32 %v1698, 2147483648
          %v1715 = vmul.f32 %v1713, 1.442695
          %v1716 = vpow.pop %v1715
          %v1717 = vmul.f32 %v1714, 1.442695
          %v1718 = vpow.pop %v1717
          %v1719 = vadd.f32 %v1716, 1.0
          %v1720 = vadd.f32 %v1718, 1.0
          %v1721 = vrcp.pop %v1719
          %v1722 = vmul.f32 1.0, %v1721
          %v1723 = vrcp.pop %v1720
          %v1724 = vmul.f32 1.0, %v1723
          %v1725 = vtanh.pop %v1695
          %v1726 = vtanh.pop %v1699
          %v1727 = vxor.u32 %v1696, 2147483648
          %v1728 = vxor.u32 %v1700, 2147483648
          %v1729 = vmul.f32 %v1727, 1.442695
          %v1730 = vpow.pop %v1729
          %v1731 = vmul.f32 %v1728, 1.442695
          %v1732 = vpow.pop %v1731
          %v1733 = vadd.f32 %v1730, 1.0
          %v1734 = vadd.f32 %v1732, 1.0
          %v1735 = vrcp.pop %v1733
          %v1736 = vmul.f32 1.0, %v1735
          %v1737 = vrcp.pop %v1734
          %v1738 = vmul.f32 1.0, %v1737
          %v1739 = vld [vmem:[#allocation3] sm:$0xff]
          %v1740 = vld [vmem:[#allocation3 + $0x8] sm:$0xff]
          %v1741 = vmul.f32 %v1722, %v1739
          %v1742 = vmul.f32 %v1724, %v1740
          %v1743 = vmul.f32 %v1710, %v1725
          %v1744 = vmul.f32 %v1712, %v1726
          %v1745 = vadd.f32 %v1741, %v1743
          %v1746 = vadd.f32 %v1742, %v1744
          %1747 = vst [vmem:[#allocation3] sm:$0xff] %v1745
          %1748 = vst [vmem:[#allocation3 + $0x8] sm:$0xff] %v1746
          %v1749 = vtanh.pop %v1745
          %v1750 = vtanh.pop %v1746
          %v1751 = vmul.f32 %v1736, %v1749
          %v1752 = vmul.f32 %v1738, %v1750
          %1753 = vst [vmem:[#allocation2] sm:$0xff] %v1751
          %1754 = vst [vmem:[#allocation2 + $0x8] sm:$0xff] %v1752
        $region72: #{tpu_custom_call.1} parent=47 // pred_fallthru
          _
        %p1755 = scmp.eq.s32.totalorder %s33, 4
        // Predicated region
        $region73: #{tpu_custom_call.1} parent=47 // pred_check
          %p1756 = pneg %p1755
        $region74: #{tpu_custom_call.1} parent=47 // pred_check_branch
          %1758 = sbr.rel (%p1756) target = $region76
        $region75: #{tpu_custom_call.1} parent=47 // pred_region
          %v1759 = vld [vmem:[#allocation2] sm:$0xff]
          %v1760 = vld [vmem:[#allocation2 + $0x8] sm:$0xff]
          %v1761 = vmax.f32 %v1759, 0.0
          %v1762 = vmax.f32 %v1760, 0.0
          %1763 = vst [vmem:[#allocation2] sm:$0xff] %v1761
          %1764 = vst [vmem:[#allocation2 + $0x8] sm:$0xff] %v1762
          %v1765 = vld [vmem:[%s592] sm:$0x77]
          %v1766 = vld [vmem:[%s592 + $0x8] sm:$0x77]
          %v1767 = vpack.c.bf16 %v1762, %v1761
          %v1768 = vld [vmem:[%s479] sm:$0xff]
          %v1769 = vld [vmem:[%s479 + $0x8] sm:$0xff]
          %v1770 = vld [vmem:[%s479 + $0x10] sm:$0xff]
          %v1771 = vld [vmem:[%s479 + $0x18] sm:$0xff]
          %v1772 = vld [vmem:[%s479 + $0x20] sm:$0xff]
          %v1773 = vld [vmem:[%s479 + $0x28] sm:$0xff]
          %v1774 = vld [vmem:[%s479 + $0x30] sm:$0xff]
          %v1775 = vld [vmem:[%s479 + $0x38] sm:$0xff]
          %v1776 = vld [vmem:[%s479 + $0x40] sm:$0xff]
          %v1777 = vld [vmem:[%s479 + $0x48] sm:$0xff]
          %v1778 = vld [vmem:[%s479 + $0x50] sm:$0xff]
          %v1779 = vld [vmem:[%s479 + $0x58] sm:$0xff]
          %v1780 = vld [vmem:[%s479 + $0x60] sm:$0xff]
          %v1781 = vld [vmem:[%s479 + $0x68] sm:$0xff]
          %v1782 = vld [vmem:[%s479 + $0x70] sm:$0xff]
          %v1783 = vld [vmem:[%s479 + $0x78] sm:$0xff]
          %v1784 = vld [vmem:[%s479 + $0x80] sm:$0xff]
          %v1785 = vld [vmem:[%s479 + $0x88] sm:$0xff]
          %v1786 = vld [vmem:[%s479 + $0x90] sm:$0xff]
          %v1787 = vld [vmem:[%s479 + $0x98] sm:$0xff]
          %v1788 = vld [vmem:[%s479 + $0xa0] sm:$0xff]
          %v1789 = vld [vmem:[%s479 + $0xa8] sm:$0xff]
          %v1790 = vld [vmem:[%s479 + $0xb0] sm:$0xff]
          %v1791 = vld [vmem:[%s479 + $0xb8] sm:$0xff]
          %v1792 = vld [vmem:[%s479 + $0xc0] sm:$0xff]
          %v1793 = vld [vmem:[%s479 + $0xc8] sm:$0xff]
          %v1794 = vld [vmem:[%s479 + $0xd0] sm:$0xff]
          %v1795 = vld [vmem:[%s479 + $0xd8] sm:$0xff]
          %v1796 = vld [vmem:[%s479 + $0xe0] sm:$0xff]
          %v1797 = vld [vmem:[%s479 + $0xe8] sm:$0xff]
          %v1798 = vld [vmem:[%s479 + $0xf0] sm:$0xff]
          %v1799 = vld [vmem:[%s479 + $0xf8] sm:$0xff]
          %v1832 = vunpack.c.l.b16 %v1768
          %v1833 = vunpack.c.h.b16 %v1768
          %v1834 = vunpack.c.l.b16 %v1769
          %v1835 = vunpack.c.h.b16 %v1769
          %v1836 = vunpack.c.l.b16 %v1770
          %v1837 = vunpack.c.h.b16 %v1770
          %v1838 = vunpack.c.l.b16 %v1771
          %v1839 = vunpack.c.h.b16 %v1771
          %v1840 = vunpack.c.l.b16 %v1772
          %v1841 = vunpack.c.h.b16 %v1772
          %v1842 = vunpack.c.l.b16 %v1773
          %v1843 = vunpack.c.h.b16 %v1773
          %v1844 = vunpack.c.l.b16 %v1774
          %v1845 = vunpack.c.h.b16 %v1774
          %v1846 = vunpack.c.l.b16 %v1775
          %v1847 = vunpack.c.h.b16 %v1775
          %v1848 = vunpack.c.l.b16 %v1776
          %v1849 = vunpack.c.h.b16 %v1776
          %v1850 = vunpack.c.l.b16 %v1777
          %v1851 = vunpack.c.h.b16 %v1777
          %v1852 = vunpack.c.l.b16 %v1778
          %v1853 = vunpack.c.h.b16 %v1778
          %v1854 = vunpack.c.l.b16 %v1779
          %v1855 = vunpack.c.h.b16 %v1779
          %v1856 = vunpack.c.l.b16 %v1780
          %v1857 = vunpack.c.h.b16 %v1780
          %v1858 = vunpack.c.l.b16 %v1781
          %v1859 = vunpack.c.h.b16 %v1781
          %v1860 = vunpack.c.l.b16 %v1782
          %v1861 = vunpack.c.h.b16 %v1782
          %v1862 = vunpack.c.l.b16 %v1783
          %v1863 = vunpack.c.h.b16 %v1783
          %v1864 = vunpack.c.l.b16 %v1784
          %v1865 = vunpack.c.h.b16 %v1784
          %v1866 = vunpack.c.l.b16 %v1785
          %v1867 = vunpack.c.h.b16 %v1785
          %v1868 = vunpack.c.l.b16 %v1786
          %v1869 = vunpack.c.h.b16 %v1786
          %v1870 = vunpack.c.l.b16 %v1787
          %v1871 = vunpack.c.h.b16 %v1787
          %v1872 = vunpack.c.l.b16 %v1788
          %v1873 = vunpack.c.h.b16 %v1788
          %v1874 = vunpack.c.l.b16 %v1789
          %v1875 = vunpack.c.h.b16 %v1789
          %v1876 = vunpack.c.l.b16 %v1790
          %v1877 = vunpack.c.h.b16 %v1790
          %v1878 = vunpack.c.l.b16 %v1791
          %v1879 = vunpack.c.h.b16 %v1791
          %v1880 = vunpack.c.l.b16 %v1792
          %v1881 = vunpack.c.h.b16 %v1792
          %v1882 = vunpack.c.l.b16 %v1793
          %v1883 = vunpack.c.h.b16 %v1793
          %v1884 = vunpack.c.l.b16 %v1794
          %v1885 = vunpack.c.h.b16 %v1794
          %v1886 = vunpack.c.l.b16 %v1795
          %v1887 = vunpack.c.h.b16 %v1795
          %v1888 = vunpack.c.l.b16 %v1796
          %v1889 = vunpack.c.h.b16 %v1796
          %v1890 = vunpack.c.l.b16 %v1797
          %v1891 = vunpack.c.h.b16 %v1797
          %v1892 = vunpack.c.l.b16 %v1798
          %v1893 = vunpack.c.h.b16 %v1798
          %v1894 = vunpack.c.l.b16 %v1799
          %v1895 = vunpack.c.h.b16 %v1799
          %v1896 = vpack.c.b16 %v1836, %v1832
          %v1897 = vpack.c.b16 %v1837, %v1833
          %v1898 = vpack.c.b16 %v1838, %v1834
          %v1899 = vpack.c.b16 %v1839, %v1835
          %v1900 = vpack.c.b16 %v1844, %v1840
          %v1901 = vpack.c.b16 %v1845, %v1841
          %v1902 = vpack.c.b16 %v1846, %v1842
          %v1903 = vpack.c.b16 %v1847, %v1843
          %v1904 = vpack.c.b16 %v1852, %v1848
          %v1905 = vpack.c.b16 %v1853, %v1849
          %v1906 = vpack.c.b16 %v1854, %v1850
          %v1907 = vpack.c.b16 %v1855, %v1851
          %v1908 = vpack.c.b16 %v1860, %v1856
          %v1909 = vpack.c.b16 %v1861, %v1857
          %v1910 = vpack.c.b16 %v1862, %v1858
          %v1911 = vpack.c.b16 %v1863, %v1859
          %v1912 = vpack.c.b16 %v1868, %v1864
          %v1913 = vpack.c.b16 %v1869, %v1865
          %v1914 = vpack.c.b16 %v1870, %v1866
          %v1915 = vpack.c.b16 %v1871, %v1867
          %v1916 = vpack.c.b16 %v1876, %v1872
          %v1917 = vpack.c.b16 %v1877, %v1873
          %v1918 = vpack.c.b16 %v1878, %v1874
          %v1919 = vpack.c.b16 %v1879, %v1875
          %v1920 = vpack.c.b16 %v1884, %v1880
          %v1921 = vpack.c.b16 %v1885, %v1881
          %v1922 = vpack.c.b16 %v1886, %v1882
          %v1923 = vpack.c.b16 %v1887, %v1883
          %v1924 = vpack.c.b16 %v1892, %v1888
          %v1925 = vpack.c.b16 %v1893, %v1889
          %v1926 = vpack.c.b16 %v1894, %v1890
          %v1927 = vpack.c.b16 %v1895, %v1891
          %1960 = vmatprep.subr.bf16.mxu0 %v1897
          %1961 = vmatpush1.bf16.msra.mxu0 %v1896
          %1962 = vmatprep.subr.bf16.mxu0 %v1901
          %1963 = vmatpush1.bf16.msra.mxu0 %v1900
          %1964 = vmatprep.subr.bf16.mxu0 %v1905
          %1965 = vmatpush1.bf16.msra.mxu0 %v1904
          %1966 = vmatprep.subr.bf16.mxu0 %v1909
          %1967 = vmatpush1.bf16.msra.mxu0 %v1908
          %1968 = vmatprep.subr.bf16.mxu0 %v1913
          %1969 = vmatpush1.bf16.msra.mxu0 %v1912
          %1970 = vmatprep.subr.bf16.mxu0 %v1917
          %1971 = vmatpush1.bf16.msra.mxu0 %v1916
          %1972 = vmatprep.subr.bf16.mxu0 %v1921
          %1973 = vmatpush1.bf16.msra.mxu0 %v1920
          %1974 = vmatprep.subr.bf16.mxu0 %v1925
          %1975 = vmatpush1.bf16.msra.mxu0 %v1924
          %1976 = vmatprep.subr.bf16.mxu0 0
          %1977 = vmatpush1.bf16.msra.mxu0 0
          %1978 = vmatprep.subr.bf16.mxu0 0
          %1979 = vmatpush1.bf16.msra.mxu0 0
          %1980 = vmatprep.subr.bf16.mxu0 0
          %1981 = vmatpush1.bf16.msra.mxu0 0
          %1982 = vmatprep.subr.bf16.mxu0 0
          %1983 = vmatpush1.bf16.msra.mxu0 0
          %1984 = vmatprep.subr.bf16.mxu0 0
          %1985 = vmatpush1.bf16.msra.mxu0 0
          %1986 = vmatprep.subr.bf16.mxu0 0
          %1987 = vmatpush1.bf16.msra.mxu0 0
          %1988 = vmatprep.subr.bf16.mxu0 0
          %1989 = vmatpush1.bf16.msra.mxu0 0
          %1990 = vmatprep.subr.bf16.mxu0 0
          %1991 = vmatpush1.bf16.msra.mxu0 0
          %1992 = vmatprep.mubr.bf16.mxu0 0
          %1993 = vmatmul.mubr.bf16.gmra.mrb[0].mxu0 %v1767
          %v1994 = vpop.f32.mrb[0].mxu0
          %v1995 = vadd.f32 0.0, %v1994
          %v1996 = vpop.f32.mrb[0].mxu0
          %v1997 = vpop.f32.mrb[0].mxu0
          %v1998 = vadd.f32 0.0, %v1997
          %v1999 = vpop.f32.mrb[0].mxu0
          %2000 = vdwg.mxu0
          %2001 = vmatprep.subr.bf16.mxu0 %v1899
          %2002 = vmatpush1.bf16.msra.mxu0 %v1898
          %2003 = vmatprep.subr.bf16.mxu0 %v1903
          %2004 = vmatpush1.bf16.msra.mxu0 %v1902
          %2005 = vmatprep.subr.bf16.mxu0 %v1907
          %2006 = vmatpush1.bf16.msra.mxu0 %v1906
          %2007 = vmatprep.subr.bf16.mxu0 %v1911
          %2008 = vmatpush1.bf16.msra.mxu0 %v1910
          %2009 = vmatprep.subr.bf16.mxu0 %v1915
          %2010 = vmatpush1.bf16.msra.mxu0 %v1914
          %2011 = vmatprep.subr.bf16.mxu0 %v1919
          %2012 = vmatpush1.bf16.msra.mxu0 %v1918
          %2013 = vmatprep.subr.bf16.mxu0 %v1923
          %2014 = vmatpush1.bf16.msra.mxu0 %v1922
          %2015 = vmatprep.subr.bf16.mxu0 %v1927
          %2016 = vmatpush1.bf16.msra.mxu0 %v1926
          %2017 = vmatprep.subr.bf16.mxu0 0
          %2018 = vmatpush1.bf16.msra.mxu0 0
          %2019 = vmatprep.subr.bf16.mxu0 0
          %2020 = vmatpush1.bf16.msra.mxu0 0
          %2021 = vmatprep.subr.bf16.mxu0 0
          %2022 = vmatpush1.bf16.msra.mxu0 0
          %2023 = vmatprep.subr.bf16.mxu0 0
          %2024 = vmatpush1.bf16.msra.mxu0 0
          %2025 = vmatprep.subr.bf16.mxu0 0
          %2026 = vmatpush1.bf16.msra.mxu0 0
          %2027 = vmatprep.subr.bf16.mxu0 0
          %2028 = vmatpush1.bf16.msra.mxu0 0
          %2029 = vmatprep.subr.bf16.mxu0 0
          %2030 = vmatpush1.bf16.msra.mxu0 0
          %2031 = vmatprep.subr.bf16.mxu0 0
          %2032 = vmatpush1.bf16.msra.mxu0 0
          %2033 = vmatprep.mubr.bf16.mxu0 0
          %2034 = vmatmul.mubr.bf16.gmra.mrb[0].mxu0 %v1767
          %v2035 = vpop.f32.mrb[0].mxu0
          %v2036 = vadd.f32 0.0, %v2035
          %v2037 = vpop.f32.mrb[0].mxu0
          %v2038 = vadd.f32 0.0, %v2037
          %v2039 = vpop.f32.mrb[0].mxu0
          %v2040 = vadd.f32 0.0, %v2039
          %v2041 = vpop.f32.mrb[0].mxu0
          %v2042 = vadd.f32 0.0, %v2041
          %2043 = vdwg.mxu0
          %v2046 = vlaneseq
          %v2047 = vshrl.u32 %v2046, 7
          %v2048 = vsub.s32 0, %v2047
          %v2049 = vrot.slane %v1765, %v2048
          %v2050 = vlaneseq
          %v2051 = vshrl.u32 %v2050, 7
          %v2052 = vsub.s32 0, %v2051
          %v2053 = vrot.slane %v1766, %v2052
          %v2054 = vlaneseq
          %v2055 = vshrl.u32 %v2054, 7
          %v2056 = vsub.s32 4, %v2055
          %v2057 = vrot.slane %v1766, %v2056
          %v2061 = vlaneseq
          %v2062 = vshrl.u32 %v2061, 7
          %v2063 = vsub.s32 0, %v2062
          %v2064 = vrot.slane %v2049, %v2063
          %v2065 = vlaneseq
          %v2066 = vshrl.u32 %v2065, 7
          %v2067 = vsub.s32 0, %v2066
          %v2068 = vrot.slane %v2053, %v2067
          %v2069 = vlaneseq
          %v2070 = vshrl.u32 %v2069, 7
          %v2071 = vsub.s32 0, %v2070
          %v2072 = vrot.slane %v2057, %v2071
          %v2073 = vmul.f32 %v1995, %v2064
          %v2074 = vmul.f32 %v2036, %v2068
          %v2075 = vmul.f32 %v2038, %v2072
          %v2076 = vmul.f32 %v1998, %v2064
          %v2077 = vmul.f32 %v2040, %v2068
          %v2078 = vmul.f32 %v2042, %v2072
          %v2079 = vlaneseq
          %v2080 = vshrl.u32 %v2079, 7
          %v2081 = vsub.s32 2, %v2080
          %v2082 = vrot.slane %v1765, %v2081
          %v2083 = vlaneseq
          %v2084 = vshrl.u32 %v2083, 7
          %v2085 = vsub.s32 2, %v2084
          %v2086 = vrot.slane %v1766, %v2085
          %v2087 = vlaneseq
          %v2088 = vshrl.u32 %v2087, 7
          %v2089 = vsub.s32 6, %v2088
          %v2090 = vrot.slane %v1766, %v2089
          %v2094 = vlaneseq
          %v2095 = vshrl.u32 %v2094, 7
          %v2096 = vsub.s32 2, %v2095
          %v2097 = vrot.slane %v2082, %v2096
          %v2098 = vlaneseq
          %v2099 = vshrl.u32 %v2098, 7
          %v2100 = vsub.s32 2, %v2099
          %v2101 = vrot.slane %v2086, %v2100
          %v2102 = vlaneseq
          %v2103 = vshrl.u32 %v2102, 7
          %v2104 = vsub.s32 2, %v2103
          %v2105 = vrot.slane %v2090, %v2104
          %v2106 = vadd.f32 %v2073, %v2097
          %v2107 = vadd.f32 %v2074, %v2101
          %v2108 = vadd.f32 %v2075, %v2105
          %v2109 = vadd.f32 %v2076, %v2097
          %v2110 = vadd.f32 %v2077, %v2101
          %v2111 = vadd.f32 %v2078, %v2105
          %v2112 = vxor.u32 %v2106, 2147483648
          %v2113 = vxor.u32 %v2109, 2147483648
          %v2114 = vmul.f32 %v2112, 1.442695
          %v2115 = vpow.pop %v2114
          %v2116 = vmul.f32 %v2113, 1.442695
          %v2117 = vpow.pop %v2116
          %v2118 = vadd.f32 %v2115, 1.0
          %v2119 = vadd.f32 %v2117, 1.0
          %v2120 = vrcp.pop %v2118
          %v2121 = vmul.f32 1.0, %v2120
          %v2122 = vrcp.pop %v2119
          %v2123 = vmul.f32 1.0, %v2122
          %v2124 = vtanh.pop %v2107
          %v2125 = vtanh.pop %v2110
          %v2126 = vxor.u32 %v2108, 2147483648
          %v2127 = vxor.u32 %v2111, 2147483648
          %v2128 = vmul.f32 %v2126, 1.442695
          %v2129 = vpow.pop %v2128
          %v2130 = vmul.f32 %v2127, 1.442695
          %v2131 = vpow.pop %v2130
          %v2132 = vadd.f32 %v2129, 1.0
          %v2133 = vadd.f32 %v2131, 1.0
          %v2134 = vrcp.pop %v2132
          %v2135 = vmul.f32 1.0, %v2134
          %v2136 = vrcp.pop %v2133
          %v2137 = vmul.f32 1.0, %v2136
          %v2138 = vmul.f32 %v2121, %v2124
          %v2139 = vmul.f32 %v2123, %v2125
          %2140 = vst [vmem:[#allocation5] sm:$0xff] %v2138
          %2141 = vst [vmem:[#allocation5 + $0x8] sm:$0xff] %v2139
          %v2142 = vtanh.pop %v2138
          %v2143 = vtanh.pop %v2139
          %v2144 = vmul.f32 %v2135, %v2142
          %v2145 = vmul.f32 %v2137, %v2143
          %2146 = vst [vmem:[#allocation4] sm:$0xff] %v2144
          %2147 = vst [vmem:[#allocation4 + $0x8] sm:$0xff] %v2145
        $region76: #{tpu_custom_call.1} parent=47 // pred_fallthru
          _
        %p2148 = scmp.ge.s32.totalorder %s33, 5
        // Predicated region
        $region77: #{tpu_custom_call.1} parent=47 // pred_check
          %p2149 = pneg %p2148
        $region78: #{tpu_custom_call.1} parent=47 // pred_check_branch
          %2151 = sbr.rel (%p2149) target = $region80
        $region79: #{tpu_custom_call.1} parent=47 // pred_region
          %v2152 = vld [vmem:[%s592] sm:$0x77]
          %v2153 = vld [vmem:[%s592 + $0x8] sm:$0x77]
          %v2154 = vld [vmem:[#allocation2] sm:$0xff]
          %v2155 = vld [vmem:[#allocation2 + $0x8] sm:$0xff]
          %v2156 = vpack.c.bf16 %v2155, %v2154
          %v2157 = vld [vmem:[%s479] sm:$0xff]
          %v2158 = vld [vmem:[%s479 + $0x8] sm:$0xff]
          %v2159 = vld [vmem:[%s479 + $0x10] sm:$0xff]
          %v2160 = vld [vmem:[%s479 + $0x18] sm:$0xff]
          %v2161 = vld [vmem:[%s479 + $0x20] sm:$0xff]
          %v2162 = vld [vmem:[%s479 + $0x28] sm:$0xff]
          %v2163 = vld [vmem:[%s479 + $0x30] sm:$0xff]
          %v2164 = vld [vmem:[%s479 + $0x38] sm:$0xff]
          %v2165 = vld [vmem:[%s479 + $0x40] sm:$0xff]
          %v2166 = vld [vmem:[%s479 + $0x48] sm:$0xff]
          %v2167 = vld [vmem:[%s479 + $0x50] sm:$0xff]
          %v2168 = vld [vmem:[%s479 + $0x58] sm:$0xff]
          %v2169 = vld [vmem:[%s479 + $0x60] sm:$0xff]
          %v2170 = vld [vmem:[%s479 + $0x68] sm:$0xff]
          %v2171 = vld [vmem:[%s479 + $0x70] sm:$0xff]
          %v2172 = vld [vmem:[%s479 + $0x78] sm:$0xff]
          %v2173 = vld [vmem:[%s479 + $0x80] sm:$0xff]
          %v2174 = vld [vmem:[%s479 + $0x88] sm:$0xff]
          %v2175 = vld [vmem:[%s479 + $0x90] sm:$0xff]
          %v2176 = vld [vmem:[%s479 + $0x98] sm:$0xff]
          %v2177 = vld [vmem:[%s479 + $0xa0] sm:$0xff]
          %v2178 = vld [vmem:[%s479 + $0xa8] sm:$0xff]
          %v2179 = vld [vmem:[%s479 + $0xb0] sm:$0xff]
          %v2180 = vld [vmem:[%s479 + $0xb8] sm:$0xff]
          %v2181 = vld [vmem:[%s479 + $0xc0] sm:$0xff]
          %v2182 = vld [vmem:[%s479 + $0xc8] sm:$0xff]
          %v2183 = vld [vmem:[%s479 + $0xd0] sm:$0xff]
          %v2184 = vld [vmem:[%s479 + $0xd8] sm:$0xff]
          %v2185 = vld [vmem:[%s479 + $0xe0] sm:$0xff]
          %v2186 = vld [vmem:[%s479 + $0xe8] sm:$0xff]
          %v2187 = vld [vmem:[%s479 + $0xf0] sm:$0xff]
          %v2188 = vld [vmem:[%s479 + $0xf8] sm:$0xff]
          %v2221 = vunpack.c.l.b16 %v2157
          %v2222 = vunpack.c.h.b16 %v2157
          %v2223 = vunpack.c.l.b16 %v2158
          %v2224 = vunpack.c.h.b16 %v2158
          %v2225 = vunpack.c.l.b16 %v2159
          %v2226 = vunpack.c.h.b16 %v2159
          %v2227 = vunpack.c.l.b16 %v2160
          %v2228 = vunpack.c.h.b16 %v2160
          %v2229 = vunpack.c.l.b16 %v2161
          %v2230 = vunpack.c.h.b16 %v2161
          %v2231 = vunpack.c.l.b16 %v2162
          %v2232 = vunpack.c.h.b16 %v2162
          %v2233 = vunpack.c.l.b16 %v2163
          %v2234 = vunpack.c.h.b16 %v2163
          %v2235 = vunpack.c.l.b16 %v2164
          %v2236 = vunpack.c.h.b16 %v2164
          %v2237 = vunpack.c.l.b16 %v2165
          %v2238 = vunpack.c.h.b16 %v2165
          %v2239 = vunpack.c.l.b16 %v2166
          %v2240 = vunpack.c.h.b16 %v2166
          %v2241 = vunpack.c.l.b16 %v2167
          %v2242 = vunpack.c.h.b16 %v2167
          %v2243 = vunpack.c.l.b16 %v2168
          %v2244 = vunpack.c.h.b16 %v2168
          %v2245 = vunpack.c.l.b16 %v2169
          %v2246 = vunpack.c.h.b16 %v2169
          %v2247 = vunpack.c.l.b16 %v2170
          %v2248 = vunpack.c.h.b16 %v2170
          %v2249 = vunpack.c.l.b16 %v2171
          %v2250 = vunpack.c.h.b16 %v2171
          %v2251 = vunpack.c.l.b16 %v2172
          %v2252 = vunpack.c.h.b16 %v2172
          %v2253 = vunpack.c.l.b16 %v2173
          %v2254 = vunpack.c.h.b16 %v2173
          %v2255 = vunpack.c.l.b16 %v2174
          %v2256 = vunpack.c.h.b16 %v2174
          %v2257 = vunpack.c.l.b16 %v2175
          %v2258 = vunpack.c.h.b16 %v2175
          %v2259 = vunpack.c.l.b16 %v2176
          %v2260 = vunpack.c.h.b16 %v2176
          %v2261 = vunpack.c.l.b16 %v2177
          %v2262 = vunpack.c.h.b16 %v2177
          %v2263 = vunpack.c.l.b16 %v2178
          %v2264 = vunpack.c.h.b16 %v2178
          %v2265 = vunpack.c.l.b16 %v2179
          %v2266 = vunpack.c.h.b16 %v2179
          %v2267 = vunpack.c.l.b16 %v2180
          %v2268 = vunpack.c.h.b16 %v2180
          %v2269 = vunpack.c.l.b16 %v2181
          %v2270 = vunpack.c.h.b16 %v2181
          %v2271 = vunpack.c.l.b16 %v2182
          %v2272 = vunpack.c.h.b16 %v2182
          %v2273 = vunpack.c.l.b16 %v2183
          %v2274 = vunpack.c.h.b16 %v2183
          %v2275 = vunpack.c.l.b16 %v2184
          %v2276 = vunpack.c.h.b16 %v2184
          %v2277 = vunpack.c.l.b16 %v2185
          %v2278 = vunpack.c.h.b16 %v2185
          %v2279 = vunpack.c.l.b16 %v2186
          %v2280 = vunpack.c.h.b16 %v2186
          %v2281 = vunpack.c.l.b16 %v2187
          %v2282 = vunpack.c.h.b16 %v2187
          %v2283 = vunpack.c.l.b16 %v2188
          %v2284 = vunpack.c.h.b16 %v2188
          %v2285 = vpack.c.b16 %v2225, %v2221
          %v2286 = vpack.c.b16 %v2226, %v2222
          %v2287 = vpack.c.b16 %v2227, %v2223
          %v2288 = vpack.c.b16 %v2228, %v2224
          %v2289 = vpack.c.b16 %v2233, %v2229
          %v2290 = vpack.c.b16 %v2234, %v2230
          %v2291 = vpack.c.b16 %v2235, %v2231
          %v2292 = vpack.c.b16 %v2236, %v2232
          %v2293 = vpack.c.b16 %v2241, %v2237
          %v2294 = vpack.c.b16 %v2242, %v2238
          %v2295 = vpack.c.b16 %v2243, %v2239
          %v2296 = vpack.c.b16 %v2244, %v2240
          %v2297 = vpack.c.b16 %v2249, %v2245
          %v2298 = vpack.c.b16 %v2250, %v2246
          %v2299 = vpack.c.b16 %v2251, %v2247
          %v2300 = vpack.c.b16 %v2252, %v2248
          %v2301 = vpack.c.b16 %v2257, %v2253
          %v2302 = vpack.c.b16 %v2258, %v2254
          %v2303 = vpack.c.b16 %v2259, %v2255
          %v2304 = vpack.c.b16 %v2260, %v2256
          %v2305 = vpack.c.b16 %v2265, %v2261
          %v2306 = vpack.c.b16 %v2266, %v2262
          %v2307 = vpack.c.b16 %v2267, %v2263
          %v2308 = vpack.c.b16 %v2268, %v2264
          %v2309 = vpack.c.b16 %v2273, %v2269
          %v2310 = vpack.c.b16 %v2274, %v2270
          %v2311 = vpack.c.b16 %v2275, %v2271
          %v2312 = vpack.c.b16 %v2276, %v2272
          %v2313 = vpack.c.b16 %v2281, %v2277
          %v2314 = vpack.c.b16 %v2282, %v2278
          %v2315 = vpack.c.b16 %v2283, %v2279
          %v2316 = vpack.c.b16 %v2284, %v2280
          %2349 = vmatprep.subr.bf16.mxu0 %v2286
          %2350 = vmatpush1.bf16.msra.mxu0 %v2285
          %2351 = vmatprep.subr.bf16.mxu0 %v2290
          %2352 = vmatpush1.bf16.msra.mxu0 %v2289
          %2353 = vmatprep.subr.bf16.mxu0 %v2294
          %2354 = vmatpush1.bf16.msra.mxu0 %v2293
          %2355 = vmatprep.subr.bf16.mxu0 %v2298
          %2356 = vmatpush1.bf16.msra.mxu0 %v2297
          %2357 = vmatprep.subr.bf16.mxu0 %v2302
          %2358 = vmatpush1.bf16.msra.mxu0 %v2301
          %2359 = vmatprep.subr.bf16.mxu0 %v2306
          %2360 = vmatpush1.bf16.msra.mxu0 %v2305
          %2361 = vmatprep.subr.bf16.mxu0 %v2310
          %2362 = vmatpush1.bf16.msra.mxu0 %v2309
          %2363 = vmatprep.subr.bf16.mxu0 %v2314
          %2364 = vmatpush1.bf16.msra.mxu0 %v2313
          %2365 = vmatprep.subr.bf16.mxu0 0
          %2366 = vmatpush1.bf16.msra.mxu0 0
          %2367 = vmatprep.subr.bf16.mxu0 0
          %2368 = vmatpush1.bf16.msra.mxu0 0
          %2369 = vmatprep.subr.bf16.mxu0 0
          %2370 = vmatpush1.bf16.msra.mxu0 0
          %2371 = vmatprep.subr.bf16.mxu0 0
          %2372 = vmatpush1.bf16.msra.mxu0 0
          %2373 = vmatprep.subr.bf16.mxu0 0
          %2374 = vmatpush1.bf16.msra.mxu0 0
          %2375 = vmatprep.subr.bf16.mxu0 0
          %2376 = vmatpush1.bf16.msra.mxu0 0
          %2377 = vmatprep.subr.bf16.mxu0 0
          %2378 = vmatpush1.bf16.msra.mxu0 0
          %2379 = vmatprep.subr.bf16.mxu0 0
          %2380 = vmatpush1.bf16.msra.mxu0 0
          %2381 = vmatprep.mubr.bf16.mxu0 0
          %2382 = vmatmul.mubr.bf16.gmra.mrb[0].mxu0 %v2156
          %v2383 = vpop.f32.mrb[0].mxu0
          %v2384 = vadd.f32 0.0, %v2383
          %v2385 = vpop.f32.mrb[0].mxu0
          %v2386 = vadd.f32 0.0, %v2385
          %v2387 = vpop.f32.mrb[0].mxu0
          %v2388 = vadd.f32 0.0, %v2387
          %v2389 = vpop.f32.mrb[0].mxu0
          %v2390 = vadd.f32 0.0, %v2389
          %2391 = vdwg.mxu0
          %2392 = vmatprep.subr.bf16.mxu0 %v2288
          %2393 = vmatpush1.bf16.msra.mxu0 %v2287
          %2394 = vmatprep.subr.bf16.mxu0 %v2292
          %2395 = vmatpush1.bf16.msra.mxu0 %v2291
          %2396 = vmatprep.subr.bf16.mxu0 %v2296
          %2397 = vmatpush1.bf16.msra.mxu0 %v2295
          %2398 = vmatprep.subr.bf16.mxu0 %v2300
          %2399 = vmatpush1.bf16.msra.mxu0 %v2299
          %2400 = vmatprep.subr.bf16.mxu0 %v2304
          %2401 = vmatpush1.bf16.msra.mxu0 %v2303
          %2402 = vmatprep.subr.bf16.mxu0 %v2308
          %2403 = vmatpush1.bf16.msra.mxu0 %v2307
          %2404 = vmatprep.subr.bf16.mxu0 %v2312
          %2405 = vmatpush1.bf16.msra.mxu0 %v2311
          %2406 = vmatprep.subr.bf16.mxu0 %v2316
          %2407 = vmatpush1.bf16.msra.mxu0 %v2315
          %2408 = vmatprep.subr.bf16.mxu0 0
          %2409 = vmatpush1.bf16.msra.mxu0 0
          %2410 = vmatprep.subr.bf16.mxu0 0
          %2411 = vmatpush1.bf16.msra.mxu0 0
          %2412 = vmatprep.subr.bf16.mxu0 0
          %2413 = vmatpush1.bf16.msra.mxu0 0
          %2414 = vmatprep.subr.bf16.mxu0 0
          %2415 = vmatpush1.bf16.msra.mxu0 0
          %2416 = vmatprep.subr.bf16.mxu0 0
          %2417 = vmatpush1.bf16.msra.mxu0 0
          %2418 = vmatprep.subr.bf16.mxu0 0
          %2419 = vmatpush1.bf16.msra.mxu0 0
          %2420 = vmatprep.subr.bf16.mxu0 0
          %2421 = vmatpush1.bf16.msra.mxu0 0
          %2422 = vmatprep.subr.bf16.mxu0 0
          %2423 = vmatpush1.bf16.msra.mxu0 0
          %2424 = vmatprep.mubr.bf16.mxu0 0
          %2425 = vmatmul.mubr.bf16.gmra.mrb[0].mxu0 %v2156
          %v2426 = vpop.f32.mrb[0].mxu0
          %v2427 = vadd.f32 0.0, %v2426
          %v2428 = vpop.f32.mrb[0].mxu0
          %v2429 = vadd.f32 0.0, %v2428
          %v2430 = vpop.f32.mrb[0].mxu0
          %v2431 = vadd.f32 0.0, %v2430
          %v2432 = vpop.f32.mrb[0].mxu0
          %v2433 = vadd.f32 0.0, %v2432
          %2434 = vdwg.mxu0
          %v2437 = vlaneseq
          %v2438 = vshrl.u32 %v2437, 7
          %v2439 = vsub.s32 0, %v2438
          %v2440 = vrot.slane %v2152, %v2439
          %v2441 = vlaneseq
          %v2442 = vshrl.u32 %v2441, 7
          %v2443 = vsub.s32 4, %v2442
          %v2444 = vrot.slane %v2152, %v2443
          %v2445 = vlaneseq
          %v2446 = vshrl.u32 %v2445, 7
          %v2447 = vsub.s32 0, %v2446
          %v2448 = vrot.slane %v2153, %v2447
          %v2449 = vlaneseq
          %v2450 = vshrl.u32 %v2449, 7
          %v2451 = vsub.s32 4, %v2450
          %v2452 = vrot.slane %v2153, %v2451
          %v2457 = vlaneseq
          %v2458 = vshrl.u32 %v2457, 7
          %v2459 = vsub.s32 0, %v2458
          %v2460 = vrot.slane %v2440, %v2459
          %v2461 = vlaneseq
          %v2462 = vshrl.u32 %v2461, 7
          %v2463 = vsub.s32 0, %v2462
          %v2464 = vrot.slane %v2444, %v2463
          %v2465 = vlaneseq
          %v2466 = vshrl.u32 %v2465, 7
          %v2467 = vsub.s32 0, %v2466
          %v2468 = vrot.slane %v2448, %v2467
          %v2469 = vlaneseq
          %v2470 = vshrl.u32 %v2469, 7
          %v2471 = vsub.s32 0, %v2470
          %v2472 = vrot.slane %v2452, %v2471
          %v2473 = vmul.f32 %v2384, %v2460
          %v2474 = vmul.f32 %v2386, %v2464
          %v2475 = vmul.f32 %v2427, %v2468
          %v2476 = vmul.f32 %v2429, %v2472
          %v2477 = vmul.f32 %v2388, %v2460
          %v2478 = vmul.f32 %v2390, %v2464
          %v2479 = vmul.f32 %v2431, %v2468
          %v2480 = vmul.f32 %v2433, %v2472
          %v2481 = vlaneseq
          %v2482 = vshrl.u32 %v2481, 7
          %v2483 = vsub.s32 2, %v2482
          %v2484 = vrot.slane %v2152, %v2483
          %v2485 = vlaneseq
          %v2486 = vshrl.u32 %v2485, 7
          %v2487 = vsub.s32 6, %v2486
          %v2488 = vrot.slane %v2152, %v2487
          %v2489 = vlaneseq
          %v2490 = vshrl.u32 %v2489, 7
          %v2491 = vsub.s32 2, %v2490
          %v2492 = vrot.slane %v2153, %v2491
          %v2493 = vlaneseq
          %v2494 = vshrl.u32 %v2493, 7
          %v2495 = vsub.s32 6, %v2494
          %v2496 = vrot.slane %v2153, %v2495
          %v2501 = vlaneseq
          %v2502 = vshrl.u32 %v2501, 7
          %v2503 = vsub.s32 2, %v2502
          %v2504 = vrot.slane %v2484, %v2503
          %v2505 = vlaneseq
          %v2506 = vshrl.u32 %v2505, 7
          %v2507 = vsub.s32 2, %v2506
          %v2508 = vrot.slane %v2488, %v2507
          %v2509 = vlaneseq
          %v2510 = vshrl.u32 %v2509, 7
          %v2511 = vsub.s32 2, %v2510
          %v2512 = vrot.slane %v2492, %v2511
          %v2513 = vlaneseq
          %v2514 = vshrl.u32 %v2513, 7
          %v2515 = vsub.s32 2, %v2514
          %v2516 = vrot.slane %v2496, %v2515
          %v2517 = vadd.f32 %v2473, %v2504
          %v2518 = vadd.f32 %v2474, %v2508
          %v2519 = vadd.f32 %v2475, %v2512
          %v2520 = vadd.f32 %v2476, %v2516
          %v2521 = vadd.f32 %v2477, %v2504
          %v2522 = vadd.f32 %v2478, %v2508
          %v2523 = vadd.f32 %v2479, %v2512
          %v2524 = vadd.f32 %v2480, %v2516
          %v2525 = vld [vmem:[#allocation4] sm:$0xff]
          %v2526 = vld [vmem:[#allocation4 + $0x8] sm:$0xff]
          %v2527 = vpack.c.bf16 %v2526, %v2525
          %v2528 = vld [vmem:[%s488] sm:$0xff]
          %v2529 = vld [vmem:[%s488 + $0x8] sm:$0xff]
          %v2530 = vld [vmem:[%s488 + $0x10] sm:$0xff]
          %v2531 = vld [vmem:[%s488 + $0x18] sm:$0xff]
          %v2532 = vld [vmem:[%s488 + $0x20] sm:$0xff]
          %v2533 = vld [vmem:[%s488 + $0x28] sm:$0xff]
          %v2534 = vld [vmem:[%s488 + $0x30] sm:$0xff]
          %v2535 = vld [vmem:[%s488 + $0x38] sm:$0xff]
          %v2536 = vld [vmem:[%s488 + $0x40] sm:$0xff]
          %v2537 = vld [vmem:[%s488 + $0x48] sm:$0xff]
          %v2538 = vld [vmem:[%s488 + $0x50] sm:$0xff]
          %v2539 = vld [vmem:[%s488 + $0x58] sm:$0xff]
          %v2540 = vld [vmem:[%s488 + $0x60] sm:$0xff]
          %v2541 = vld [vmem:[%s488 + $0x68] sm:$0xff]
          %v2542 = vld [vmem:[%s488 + $0x70] sm:$0xff]
          %v2543 = vld [vmem:[%s488 + $0x78] sm:$0xff]
          %v2544 = vld [vmem:[%s488 + $0x80] sm:$0xff]
          %v2545 = vld [vmem:[%s488 + $0x88] sm:$0xff]
          %v2546 = vld [vmem:[%s488 + $0x90] sm:$0xff]
          %v2547 = vld [vmem:[%s488 + $0x98] sm:$0xff]
          %v2548 = vld [vmem:[%s488 + $0xa0] sm:$0xff]
          %v2549 = vld [vmem:[%s488 + $0xa8] sm:$0xff]
          %v2550 = vld [vmem:[%s488 + $0xb0] sm:$0xff]
          %v2551 = vld [vmem:[%s488 + $0xb8] sm:$0xff]
          %v2552 = vld [vmem:[%s488 + $0xc0] sm:$0xff]
          %v2553 = vld [vmem:[%s488 + $0xc8] sm:$0xff]
          %v2554 = vld [vmem:[%s488 + $0xd0] sm:$0xff]
          %v2555 = vld [vmem:[%s488 + $0xd8] sm:$0xff]
          %v2556 = vld [vmem:[%s488 + $0xe0] sm:$0xff]
          %v2557 = vld [vmem:[%s488 + $0xe8] sm:$0xff]
          %v2558 = vld [vmem:[%s488 + $0xf0] sm:$0xff]
          %v2559 = vld [vmem:[%s488 + $0xf8] sm:$0xff]
          %v2592 = vunpack.c.l.b16 %v2528
          %v2593 = vunpack.c.h.b16 %v2528
          %v2594 = vunpack.c.l.b16 %v2529
          %v2595 = vunpack.c.h.b16 %v2529
          %v2596 = vunpack.c.l.b16 %v2530
          %v2597 = vunpack.c.h.b16 %v2530
          %v2598 = vunpack.c.l.b16 %v2531
          %v2599 = vunpack.c.h.b16 %v2531
          %v2600 = vunpack.c.l.b16 %v2532
          %v2601 = vunpack.c.h.b16 %v2532
          %v2602 = vunpack.c.l.b16 %v2533
          %v2603 = vunpack.c.h.b16 %v2533
          %v2604 = vunpack.c.l.b16 %v2534
          %v2605 = vunpack.c.h.b16 %v2534
          %v2606 = vunpack.c.l.b16 %v2535
          %v2607 = vunpack.c.h.b16 %v2535
          %v2608 = vunpack.c.l.b16 %v2536
          %v2609 = vunpack.c.h.b16 %v2536
          %v2610 = vunpack.c.l.b16 %v2537
          %v2611 = vunpack.c.h.b16 %v2537
          %v2612 = vunpack.c.l.b16 %v2538
          %v2613 = vunpack.c.h.b16 %v2538
          %v2614 = vunpack.c.l.b16 %v2539
          %v2615 = vunpack.c.h.b16 %v2539
          %v2616 = vunpack.c.l.b16 %v2540
          %v2617 = vunpack.c.h.b16 %v2540
          %v2618 = vunpack.c.l.b16 %v2541
          %v2619 = vunpack.c.h.b16 %v2541
          %v2620 = vunpack.c.l.b16 %v2542
          %v2621 = vunpack.c.h.b16 %v2542
          %v2622 = vunpack.c.l.b16 %v2543
          %v2623 = vunpack.c.h.b16 %v2543
          %v2624 = vunpack.c.l.b16 %v2544
          %v2625 = vunpack.c.h.b16 %v2544
          %v2626 = vunpack.c.l.b16 %v2545
          %v2627 = vunpack.c.h.b16 %v2545
          %v2628 = vunpack.c.l.b16 %v2546
          %v2629 = vunpack.c.h.b16 %v2546
          %v2630 = vunpack.c.l.b16 %v2547
          %v2631 = vunpack.c.h.b16 %v2547
          %v2632 = vunpack.c.l.b16 %v2548
          %v2633 = vunpack.c.h.b16 %v2548
          %v2634 = vunpack.c.l.b16 %v2549
          %v2635 = vunpack.c.h.b16 %v2549
          %v2636 = vunpack.c.l.b16 %v2550
          %v2637 = vunpack.c.h.b16 %v2550
          %v2638 = vunpack.c.l.b16 %v2551
          %v2639 = vunpack.c.h.b16 %v2551
          %v2640 = vunpack.c.l.b16 %v2552
          %v2641 = vunpack.c.h.b16 %v2552
          %v2642 = vunpack.c.l.b16 %v2553
          %v2643 = vunpack.c.h.b16 %v2553
          %v2644 = vunpack.c.l.b16 %v2554
          %v2645 = vunpack.c.h.b16 %v2554
          %v2646 = vunpack.c.l.b16 %v2555
          %v2647 = vunpack.c.h.b16 %v2555
          %v2648 = vunpack.c.l.b16 %v2556
          %v2649 = vunpack.c.h.b16 %v2556
          %v2650 = vunpack.c.l.b16 %v2557
          %v2651 = vunpack.c.h.b16 %v2557
          %v2652 = vunpack.c.l.b16 %v2558
          %v2653 = vunpack.c.h.b16 %v2558
          %v2654 = vunpack.c.l.b16 %v2559
          %v2655 = vunpack.c.h.b16 %v2559
          %v2656 = vpack.c.b16 %v2596, %v2592
          %v2657 = vpack.c.b16 %v2597, %v2593
          %v2658 = vpack.c.b16 %v2598, %v2594
          %v2659 = vpack.c.b16 %v2599, %v2595
          %v2660 = vpack.c.b16 %v2604, %v2600
          %v2661 = vpack.c.b16 %v2605, %v2601
          %v2662 = vpack.c.b16 %v2606, %v2602
          %v2663 = vpack.c.b16 %v2607, %v2603
          %v2664 = vpack.c.b16 %v2612, %v2608
          %v2665 = vpack.c.b16 %v2613, %v2609
          %v2666 = vpack.c.b16 %v2614, %v2610
          %v2667 = vpack.c.b16 %v2615, %v2611
          %v2668 = vpack.c.b16 %v2620, %v2616
          %v2669 = vpack.c.b16 %v2621, %v2617
          %v2670 = vpack.c.b16 %v2622, %v2618
          %v2671 = vpack.c.b16 %v2623, %v2619
          %v2672 = vpack.c.b16 %v2628, %v2624
          %v2673 = vpack.c.b16 %v2629, %v2625
          %v2674 = vpack.c.b16 %v2630, %v2626
          %v2675 = vpack.c.b16 %v2631, %v2627
          %v2676 = vpack.c.b16 %v2636, %v2632
          %v2677 = vpack.c.b16 %v2637, %v2633
          %v2678 = vpack.c.b16 %v2638, %v2634
          %v2679 = vpack.c.b16 %v2639, %v2635
          %v2680 = vpack.c.b16 %v2644, %v2640
          %v2681 = vpack.c.b16 %v2645, %v2641
          %v2682 = vpack.c.b16 %v2646, %v2642
          %v2683 = vpack.c.b16 %v2647, %v2643
          %v2684 = vpack.c.b16 %v2652, %v2648
          %v2685 = vpack.c.b16 %v2653, %v2649
          %v2686 = vpack.c.b16 %v2654, %v2650
          %v2687 = vpack.c.b16 %v2655, %v2651
          %2720 = vmatprep.subr.bf16.mxu0 %v2657
          %2721 = vmatpush1.bf16.msra.mxu0 %v2656
          %2722 = vmatprep.subr.bf16.mxu0 %v2661
          %2723 = vmatpush1.bf16.msra.mxu0 %v2660
          %2724 = vmatprep.subr.bf16.mxu0 %v2665
          %2725 = vmatpush1.bf16.msra.mxu0 %v2664
          %2726 = vmatprep.subr.bf16.mxu0 %v2669
          %2727 = vmatpush1.bf16.msra.mxu0 %v2668
          %2728 = vmatprep.subr.bf16.mxu0 %v2673
          %2729 = vmatpush1.bf16.msra.mxu0 %v2672
          %2730 = vmatprep.subr.bf16.mxu0 %v2677
          %2731 = vmatpush1.bf16.msra.mxu0 %v2676
          %2732 = vmatprep.subr.bf16.mxu0 %v2681
          %2733 = vmatpush1.bf16.msra.mxu0 %v2680
          %2734 = vmatprep.subr.bf16.mxu0 %v2685
          %2735 = vmatpush1.bf16.msra.mxu0 %v2684
          %2736 = vmatprep.subr.bf16.mxu0 0
          %2737 = vmatpush1.bf16.msra.mxu0 0
          %2738 = vmatprep.subr.bf16.mxu0 0
          %2739 = vmatpush1.bf16.msra.mxu0 0
          %2740 = vmatprep.subr.bf16.mxu0 0
          %2741 = vmatpush1.bf16.msra.mxu0 0
          %2742 = vmatprep.subr.bf16.mxu0 0
          %2743 = vmatpush1.bf16.msra.mxu0 0
          %2744 = vmatprep.subr.bf16.mxu0 0
          %2745 = vmatpush1.bf16.msra.mxu0 0
          %2746 = vmatprep.subr.bf16.mxu0 0
          %2747 = vmatpush1.bf16.msra.mxu0 0
          %2748 = vmatprep.subr.bf16.mxu0 0
          %2749 = vmatpush1.bf16.msra.mxu0 0
          %2750 = vmatprep.subr.bf16.mxu0 0
          %2751 = vmatpush1.bf16.msra.mxu0 0
          %2752 = vmatprep.mubr.bf16.mxu0 0
          %2753 = vmatmul.mubr.bf16.gmra.mrb[0].mxu0 %v2527
          %v2754 = vpop.f32.mrb[0].mxu0
          %v2755 = vadd.f32 0.0, %v2754
          %v2756 = vpop.f32.mrb[0].mxu0
          %v2757 = vadd.f32 0.0, %v2756
          %v2758 = vpop.f32.mrb[0].mxu0
          %v2759 = vadd.f32 0.0, %v2758
          %v2760 = vpop.f32.mrb[0].mxu0
          %v2761 = vadd.f32 0.0, %v2760
          %2762 = vdwg.mxu0
          %2763 = vmatprep.subr.bf16.mxu0 %v2659
          %2764 = vmatpush1.bf16.msra.mxu0 %v2658
          %2765 = vmatprep.subr.bf16.mxu0 %v2663
          %2766 = vmatpush1.bf16.msra.mxu0 %v2662
          %2767 = vmatprep.subr.bf16.mxu0 %v2667
          %2768 = vmatpush1.bf16.msra.mxu0 %v2666
          %2769 = vmatprep.subr.bf16.mxu0 %v2671
          %2770 = vmatpush1.bf16.msra.mxu0 %v2670
          %2771 = vmatprep.subr.bf16.mxu0 %v2675
          %2772 = vmatpush1.bf16.msra.mxu0 %v2674
          %2773 = vmatprep.subr.bf16.mxu0 %v2679
          %2774 = vmatpush1.bf16.msra.mxu0 %v2678
          %2775 = vmatprep.subr.bf16.mxu0 %v2683
          %2776 = vmatpush1.bf16.msra.mxu0 %v2682
          %2777 = vmatprep.subr.bf16.mxu0 %v2687
          %2778 = vmatpush1.bf16.msra.mxu0 %v2686
          %2779 = vmatprep.subr.bf16.mxu0 0
          %2780 = vmatpush1.bf16.msra.mxu0 0
          %2781 = vmatprep.subr.bf16.mxu0 0
          %2782 = vmatpush1.bf16.msra.mxu0 0
          %2783 = vmatprep.subr.bf16.mxu0 0
          %2784 = vmatpush1.bf16.msra.mxu0 0
          %2785 = vmatprep.subr.bf16.mxu0 0
          %2786 = vmatpush1.bf16.msra.mxu0 0
          %2787 = vmatprep.subr.bf16.mxu0 0
          %2788 = vmatpush1.bf16.msra.mxu0 0
          %2789 = vmatprep.subr.bf16.mxu0 0
          %2790 = vmatpush1.bf16.msra.mxu0 0
          %2791 = vmatprep.subr.bf16.mxu0 0
          %2792 = vmatpush1.bf16.msra.mxu0 0
          %2793 = vmatprep.subr.bf16.mxu0 0
          %2794 = vmatpush1.bf16.msra.mxu0 0
          %2795 = vmatprep.mubr.bf16.mxu0 0
          %2796 = vmatmul.mubr.bf16.gmra.mrb[0].mxu0 %v2527
          %v2797 = vpop.f32.mrb[0].mxu0
          %v2798 = vadd.f32 0.0, %v2797
          %v2799 = vpop.f32.mrb[0].mxu0
          %v2800 = vadd.f32 0.0, %v2799
          %v2801 = vpop.f32.mrb[0].mxu0
          %v2802 = vadd.f32 0.0, %v2801
          %v2803 = vpop.f32.mrb[0].mxu0
          %v2804 = vadd.f32 0.0, %v2803
          %2805 = vdwg.mxu0
          %v2806 = vlaneseq
          %v2807 = vshrl.u32 %v2806, 7
          %v2808 = vsub.s32 1, %v2807
          %v2809 = vrot.slane %v2152, %v2808
          %v2810 = vlaneseq
          %v2811 = vshrl.u32 %v2810, 7
          %v2812 = vsub.s32 5, %v2811
          %v2813 = vrot.slane %v2152, %v2812
          %v2814 = vlaneseq
          %v2815 = vshrl.u32 %v2814, 7
          %v2816 = vsub.s32 1, %v2815
          %v2817 = vrot.slane %v2153, %v2816
          %v2818 = vlaneseq
          %v2819 = vshrl.u32 %v2818, 7
          %v2820 = vsub.s32 5, %v2819
          %v2821 = vrot.slane %v2153, %v2820
          %v2826 = vlaneseq
          %v2827 = vshrl.u32 %v2826, 7
          %v2828 = vsub.s32 1, %v2827
          %v2829 = vrot.slane %v2809, %v2828
          %v2830 = vlaneseq
          %v2831 = vshrl.u32 %v2830, 7
          %v2832 = vsub.s32 1, %v2831
          %v2833 = vrot.slane %v2813, %v2832
          %v2834 = vlaneseq
          %v2835 = vshrl.u32 %v2834, 7
          %v2836 = vsub.s32 1, %v2835
          %v2837 = vrot.slane %v2817, %v2836
          %v2838 = vlaneseq
          %v2839 = vshrl.u32 %v2838, 7
          %v2840 = vsub.s32 1, %v2839
          %v2841 = vrot.slane %v2821, %v2840
          %v2842 = vmul.f32 %v2755, %v2829
          %v2843 = vmul.f32 %v2757, %v2833
          %v2844 = vmul.f32 %v2798, %v2837
          %v2845 = vmul.f32 %v2800, %v2841
          %v2846 = vmul.f32 %v2759, %v2829
          %v2847 = vmul.f32 %v2761, %v2833
          %v2848 = vmul.f32 %v2802, %v2837
          %v2849 = vmul.f32 %v2804, %v2841
          %v2850 = vadd.f32 %v2517, %v2842
          %v2851 = vadd.f32 %v2518, %v2843
          %v2852 = vadd.f32 %v2519, %v2844
          %v2853 = vadd.f32 %v2520, %v2845
          %v2854 = vadd.f32 %v2521, %v2846
          %v2855 = vadd.f32 %v2522, %v2847
          %v2856 = vadd.f32 %v2523, %v2848
          %v2857 = vadd.f32 %v2524, %v2849
          %v2858 = vxor.u32 %v2850, 2147483648
          %v2859 = vxor.u32 %v2854, 2147483648
          %v2860 = vmul.f32 %v2858, 1.442695
          %v2861 = vpow.pop %v2860
          %v2862 = vmul.f32 %v2859, 1.442695
          %v2863 = vpow.pop %v2862
          %v2864 = vadd.f32 %v2861, 1.0
          %v2865 = vadd.f32 %v2863, 1.0
          %v2866 = vrcp.pop %v2864
          %v2867 = vmul.f32 1.0, %v2866
          %v2868 = vrcp.pop %v2865
          %v2869 = vmul.f32 1.0, %v2868
          %v2870 = vxor.u32 %v2851, 2147483648
          %v2871 = vxor.u32 %v2855, 2147483648
          %v2872 = vmul.f32 %v2870, 1.442695
          %v2873 = vpow.pop %v2872
          %v2874 = vmul.f32 %v2871, 1.442695
          %v2875 = vpow.pop %v2874
          %v2876 = vadd.f32 %v2873, 1.0
          %v2877 = vadd.f32 %v2875, 1.0
          %v2878 = vrcp.pop %v2876
          %v2879 = vmul.f32 1.0, %v2878
          %v2880 = vrcp.pop %v2877
          %v2881 = vmul.f32 1.0, %v2880
          %v2882 = vtanh.pop %v2852
          %v2883 = vtanh.pop %v2856
          %v2884 = vxor.u32 %v2853, 2147483648
          %v2885 = vxor.u32 %v2857, 2147483648
          %v2886 = vmul.f32 %v2884, 1.442695
          %v2887 = vpow.pop %v2886
          %v2888 = vmul.f32 %v2885, 1.442695
          %v2889 = vpow.pop %v2888
          %v2890 = vadd.f32 %v2887, 1.0
          %v2891 = vadd.f32 %v2889, 1.0
          %v2892 = vrcp.pop %v2890
          %v2893 = vmul.f32 1.0, %v2892
          %v2894 = vrcp.pop %v2891
          %v2895 = vmul.f32 1.0, %v2894
          %v2896 = vld [vmem:[#allocation5] sm:$0xff]
          %v2897 = vld [vmem:[#allocation5 + $0x8] sm:$0xff]
          %v2898 = vmul.f32 %v2879, %v2896
          %v2899 = vmul.f32 %v2881, %v2897
          %v2900 = vmul.f32 %v2867, %v2882
          %v2901 = vmul.f32 %v2869, %v2883
          %v2902 = vadd.f32 %v2898, %v2900
          %v2903 = vadd.f32 %v2899, %v2901
          %2904 = vst [vmem:[#allocation5] sm:$0xff] %v2902
          %2905 = vst [vmem:[#allocation5 + $0x8] sm:$0xff] %v2903
          %v2906 = vtanh.pop %v2902
          %v2907 = vtanh.pop %v2903
          %v2908 = vmul.f32 %v2893, %v2906
          %v2909 = vmul.f32 %v2895, %v2907
          %2910 = vst [vmem:[#allocation4] sm:$0xff] %v2908
          %2911 = vst [vmem:[#allocation4 + $0x8] sm:$0xff] %v2909
        $region80: #{tpu_custom_call.1} parent=47 // pred_fallthru
          _
        %p2912 = scmp.eq.s32.totalorder %s33, 7
        // Predicated region
        $region81: #{tpu_custom_call.1} parent=47 // pred_check
          %p2913 = pneg %p2912
        $region82: #{tpu_custom_call.1} parent=47 // pred_check_branch
          %2915 = sbr.rel (%p2913) target = $region84
        $region83: #{tpu_custom_call.1} parent=47 // pred_region
          %v2916 = vld [vmem:[#allocation4] sm:$0xff]
          %v2917 = vld [vmem:[#allocation4 + $0x8] sm:$0xff]
          %v2918 = vlaneseq
          %v2919 = vand.u32 %v2918, 127
          %vm2920 = vcmp.lt.s32.totalorder %v2919, 32
          %v2921 = vsel %vm2920, %v2916, -1e+30
          %v2922 = vsel %vm2920, %v2917, -1e+30
          %2923 = vmax.xlane.f32.xlu0 %v2921
          %v2924 = vpop.xlane.xlu0 %2923
          %2925 = vmax.xlane.f32.xlu0 %v2922
          %v2926 = vpop.xlane.xlu0 %2925
          %v2927 = vsub.f32 %v2921, %v2924
          %v2928 = vsub.f32 %v2922, %v2926
          %v2929 = vmul.f32 %v2927, 1.442695
          %v2930 = vpow.pop %v2929
          %v2931 = vmul.f32 %v2928, 1.442695
          %v2932 = vpow.pop %v2931
          %v2933 = vsel %vm2920, %v2930, 0.0
          %v2934 = vsel %vm2920, %v2932, 0.0
          %2935 = vadd.xlane.f32.xlu0 %v2933
          %v2936 = vpop.xlane.xlu0 %2935
          %2937 = vadd.xlane.f32.xlu0 %v2934
          %v2938 = vpop.xlane.xlu0 %2937
          %v2939 = vlog2.pop %v2936
          %v2940 = vmul.f32 %v2939, 0.6931472
          %v2941 = vlog2.pop %v2938
          %v2942 = vmul.f32 %v2941, 0.6931472
          %v2943 = vsub.f32 %v2927, %v2940
          %v2944 = vsub.f32 %v2928, %v2942
          %2945 = vst [vmem:[#allocation14] sm:$0xff] %v2943
          %2946 = vst [vmem:[#allocation14 + $0x8] sm:$0xff] %v2944
        $region84: #{tpu_custom_call.1} parent=47 // pred_fallthru
          _
        // Predicated region
        $region85: #{tpu_custom_call.1} parent=47 // pred_check
          %p2947 = pneg %p288
        $region86: #{tpu_custom_call.1} parent=47 // pred_check_branch
          %2949 = sbr.rel (%p2947) target = $region88
        $region87: #{tpu_custom_call.1} parent=47 // pred_region
          %s2950 = smul.u32 2, %s32
          %s2952 = ssub.s32 256, 256
          %2953 = vsyncadd [#allocation8], %s2952
          %s2954 = smul.addr %s2950, 128
          %s2955 = scalar_lea.hbm %s7, %s2954
          %s2956 = sshll.u32 [#allocation14], 4
          %s2957 = int_to_ptr.vmem [resolvable:$true] %s2956
          %2962 = dma.vmem_to_hbm [thread:$0]  %s2957, 256, %s2955, [#allocation8], 128, 128, 8
        $region88: #{tpu_custom_call.1} parent=47 // pred_fallthru
          _
        // Predicated region
        $region89: #{tpu_custom_call.1} parent=47 // pred_check
          %p2963 = pneg %p288
        $region90: #{tpu_custom_call.1} parent=47 // pred_check_branch
          %2965 = sbr.rel (%p2963) target = $region92
        $region91: #{tpu_custom_call.1} parent=47 // pred_region
          %2966 = dma.done [#allocation8], 256
        $region92: #{tpu_custom_call.1} parent=47 // pred_fallthru
          _
      $region48: #{tpu_custom_call.1} parent=5 // pred_fallthru
        _
      %p2967 = scmp.le.s32.totalorder 2, %s23
      // Predicated region
      $region93: #{tpu_custom_call.1} parent=5 // pred_check
        %p2968 = pneg %p2967
      $region94: #{tpu_custom_call.1} parent=5 // pred_check_branch
        %2970 = sbr.rel (%p2968) target = $region96
      $region95: #{tpu_custom_call.1} parent=5 // pred_region
        %s2971 = ssub.s32 %s23, 2
      $region96: #{tpu_custom_call.1} parent=5 // pred_fallthru
        _
    $region6: #{tpu_custom_call.1} parent=1 // loop_footer
      %s27 = sadd.s32 1, %s23
    $region7: #{tpu_custom_call.1} parent=1 // loop_footer_branch
      %22 = sbr.rel target = $region3
    $region8: #{tpu_custom_call.1} parent=1 // loop_exit
      _
    %2972 = vsyncpa [#allocation7], 1
    %s2973 = scalar_lea.sflag [#allocation7], 1
    %2974 = vsyncpa %s2973, 1
    %2975 = vsyncpa [#allocation10], 1
    %s2976 = scalar_lea.sflag [#allocation10], 1
    %2977 = vsyncpa %s2976, 1
    %2978 = vsyncpa [#allocation13], 1
    %s2979 = scalar_lea.sflag [#allocation13], 1
    %2980 = vsyncpa %s2979, 1
    %2981 = vsyncpa [#allocation8], 1
    %s2982 = scalar_lea.sflag [#allocation8], 1
    %2983 = vsyncpa %s2982, 1

</llo_original>
